<compile_context>
chip_gen: v6e
topology: v6e:2x2x1
jax: 0.10.0
libtpu: 0.0.40
codegen_flags: <defaults>
</compile_context>

<pallas_src>
import jax
import jax.numpy as jnp
from jax import lax
from jax.experimental import pallas as pl
from jax.experimental.pallas import tpu as pltpu

# ---- model hyper-parameters (small synthetic stand-in for DeBERTa-base) ----
B = 2               # batch
S = 8               # sequence length
H = 128             # hidden size (lane-dense)
NUM_HEADS = 2
HEAD_DIM = H // NUM_HEADS
INTER = 256         # FFN intermediate size (lane-dense)
VOCAB = 64
NUM_LAYERS = 2
NUM_CLASSES = 2
LN_EPS = 1e-5
BS = B * S

# packed-slab row offsets
EMB_ROWS = VOCAB + S + 8          # token table | pos emb | emb LN g,b | pad
R_EMB_G = VOCAB + S
R_EMB_B = VOCAB + S + 1
VECS_ROWS = 16                    # bo, ln1g, ln1b, b1, b2, ln2g, ln2b, bq*, bk*, bv*
R_BQ = 7
R_BK = 7 + NUM_HEADS
R_BV = 7 + 2 * NUM_HEADS
HEAD_ROWS = H + 8                 # Wh | Wf | cls bias | class weights | pad
OUT_ROWS, OUT_LANES = 8, 128      # packed output slab


# --------------------------- fused Pallas kernel ----------------------------
def fragment_kernel(ids_ref, amask_ref, emb_ref, wqkv_ref, wo_ref,
                    w1_ref, w2_ref, vecs_ref, head_ref, aux_ref, out_ref):
    """Embeddings + 2 encoder layers + classifier head + weighted CE loss."""
    f32, bf16 = jnp.float32, jnp.bfloat16

    def layer_norm(z, g, b):
        mu = jnp.mean(z, axis=-1, keepdims=True)
        var = jnp.mean((z - mu) ** 2, axis=-1, keepdims=True)
        return (z - mu) * lax.rsqrt(var + LN_EPS) * g + b

    # ---- embeddings: one-hot gather on the MXU + positions + embedding LN ----
    ids = ids_ref[...]                                          # (BS, 1) int32
    vocab_iota = lax.broadcasted_iota(jnp.int32, (BS, VOCAB), 1)
    onehot = (vocab_iota == ids).astype(bf16)                   # (BS, VOCAB)
    emb = emb_ref[...]                                          # (EMB_ROWS, H)
    x = jnp.dot(onehot, emb[0:VOCAB, :].astype(bf16),
                preferred_element_type=f32)                     # (BS, H)
    pos = emb[VOCAB:VOCAB + S, :]                               # (S, H)
    x = x + jnp.concatenate([pos] * B, axis=0)
    x = layer_norm(x, emb[R_EMB_G:R_EMB_G + 1, :], emb[R_EMB_B:R_EMB_B + 1, :])

    # key-padding bias built in-kernel from the (B, S) int mask
    am = amask_ref[...].astype(f32)                             # (B, S)

    scale = 1.0 / (HEAD_DIM ** 0.5)
    # NOTE: static unroll is fine at NUM_LAYERS=2; switch to lax.fori_loop with
    # dynamic ref indexing if layer count / hidden size grows (vreg pressure).
    for l in range(NUM_LAYERS):
        vecs = vecs_ref[l]                                      # (16, INTER)
        bo, ln1_g, ln1_b = vecs[0:1, 0:H], vecs[1:2, 0:H], vecs[2:3, 0:H]
        b1 = vecs[3:4, 0:INTER]
        b2, ln2_g, ln2_b = vecs[4:5, 0:H], vecs[5:6, 0:H], vecs[6:7, 0:H]

        # head-major projections over the whole (B*S, H) slab (bf16 MXU, f32 acc)
        xb = x.astype(bf16)
        q, k, v = [], [], []
        for h in range(NUM_HEADS):
            q.append(jnp.dot(xb, wqkv_ref[(l * 3 + 0) * NUM_HEADS + h],
                             preferred_element_type=f32)
                     + vecs[R_BQ + h:R_BQ + h + 1, 0:HEAD_DIM])
            k.append(jnp.dot(xb, wqkv_ref[(l * 3 + 1) * NUM_HEADS + h],
                             preferred_element_type=f32)
                     + vecs[R_BK + h:R_BK + h + 1, 0:HEAD_DIM])
            v.append(jnp.dot(xb, wqkv_ref[(l * 3 + 2) * NUM_HEADS + h],
                             preferred_element_type=f32)
                     + vecs[R_BV + h:R_BV + h + 1, 0:HEAD_DIM])

        # per-sequence attention (no cross-batch score matrix)
        blocks = []
        for b in range(B):
            lo = b * S
            bias = (am[b:b + 1, :] - 1.0) * 1e9                 # (1, S)
            acc = jnp.zeros((S, H), f32)
            for h in range(NUM_HEADS):
                qb = q[h][lo:lo + S, :].astype(bf16)
                kb = k[h][lo:lo + S, :].astype(bf16)
                vb = v[h][lo:lo + S, :].astype(bf16)
                s = lax.dot_general(qb, kb, (((1,), (1,)), ((), ())),
                                    preferred_element_type=f32) * scale + bias
                m = jnp.max(s, axis=-1, keepdims=True)
                p = jnp.exp(s - m)
                p = p * pl.reciprocal(jnp.sum(p, axis=-1, keepdims=True),
                                      approx=True)
                ctx = jnp.dot(p.astype(bf16), vb, preferred_element_type=f32)
                acc = acc + jnp.dot(ctx.astype(bf16),
                                    wo_ref[l * NUM_HEADS + h],
                                    preferred_element_type=f32)
            blocks.append(acc)
        attn_out = jnp.concatenate(blocks, axis=0) + bo          # (BS, H)

        h1 = layer_norm(x + attn_out, ln1_g, ln1_b)
        ff = jnp.dot(h1.astype(bf16), w1_ref[l],
                     preferred_element_type=f32) + b1
        # TODO(synk): torch nn.GELU defaults to exact erf; tanh approx used here.
        ff = jax.nn.gelu(ff, approximate=True)
        ff = jnp.dot(ff.astype(bf16), w2_ref[l],
                     preferred_element_type=f32) + b2
        x = layer_norm(h1 + ff, ln2_g, ln2_b)

    # ---- CLS pooling (rows b*S) via one-hot selection matmul ----
    sel_col = lax.broadcasted_iota(jnp.int32, (B, BS), 1)
    sel_row = lax.broadcasted_iota(jnp.int32, (B, BS), 0)
    sel = (sel_col == sel_row * S).astype(f32)                   # (B, BS)
    pooled = jnp.dot(sel, x, preferred_element_type=f32)         # (B, H)

    # ---- classifier head on [pooled, flags] (packed weight slab) ----
    head = head_ref[...]                                         # (H+8, C)
    wh, wf = head[0:H, :], head[H:H + 2, :]
    cls_b, cw = head[H + 2:H + 3, :], head[H + 3:H + 4, :]

    brow = lax.broadcasted_iota(jnp.int32, (B, NUM_CLASSES), 0)
    bcol = lax.broadcasted_iota(jnp.int32, (B, NUM_CLASSES), 1)
    flags = jnp.zeros((B, NUM_CLASSES), f32)
    lab = jnp.zeros((B, NUM_CLASSES), jnp.int32)
    for b in range(B):                                           # SMEM scalars
        lab = jnp.where(brow == b, aux_ref[b, 0], lab)
        for j in range(2):
            flags = jnp.where((brow == b) & (bcol == j),
                              aux_ref[b, 1 + j].astype(f32), flags)

    logits = (jnp.dot(pooled, wh, preferred_element_type=f32)
              + jnp.dot(flags, wf, preferred_element_type=f32)
              + cls_b)                                           # (B, C)

    # ---- class-weighted cross-entropy (torch CE 'mean' with weights) ----
    onehot_l = (bcol == lab).astype(f32)                         # (B, C)
    m = jnp.max(logits, axis=-1, keepdims=True)
    lse = m + jnp.log(jnp.sum(jnp.exp(logits - m), axis=-1, keepdims=True))
    nll = lse - jnp.sum(onehot_l * logits, axis=-1, keepdims=True)   # (B, 1)
    w = jnp.sum(onehot_l * cw, axis=-1, keepdims=True)               # (B, 1)
    loss = (jnp.sum(w * nll, axis=0, keepdims=True)
            / jnp.sum(w, axis=0, keepdims=True))                     # (1, 1)

    # ---- single lane-dense (8,128) output slab: logits rows 0..B-1, loss row B
    out_ref[...] = jnp.zeros((OUT_ROWS, OUT_LANES), f32)
    out_ref[0:B, 0:NUM_CLASSES] = logits
    out_ref[B:B + 1, 0:1] = loss


# ------------------------- parameter init / packing --------------------------
def init_params(key):
    keys = jax.random.split(key, 10)
    ki = iter(keys)

    def nrm(shape, scale=0.02):
        return scale * jax.random.normal(next(ki), shape, jnp.float32)

    params = {
        "token_emb": nrm((VOCAB, H)),
        "pos_emb": nrm((S, H)),
        "emb_ln_g": jnp.ones((H,), jnp.float32),
        "emb_ln_b": jnp.zeros((H,), jnp.float32),
        "wq": nrm((NUM_LAYERS, NUM_HEADS, H, HEAD_DIM)),
        "wk": nrm((NUM_LAYERS, NUM_HEADS, H, HEAD_DIM)),
        "wv": nrm((NUM_LAYERS, NUM_HEADS, H, HEAD_DIM)),
        "bq": jnp.zeros((NUM_LAYERS, NUM_HEADS, HEAD_DIM), jnp.float32),
        "bk": jnp.zeros((NUM_LAYERS, NUM_HEADS, HEAD_DIM), jnp.float32),
        "bv": jnp.zeros((NUM_LAYERS, NUM_HEADS, HEAD_DIM), jnp.float32),
        "wo": nrm((NUM_LAYERS, NUM_HEADS, HEAD_DIM, H)),
        "bo": jnp.zeros((NUM_LAYERS, H), jnp.float32),
        "ln1_g": jnp.ones((NUM_LAYERS, H), jnp.float32),
        "ln1_b": jnp.zeros((NUM_LAYERS, H), jnp.float32),
        "w1": nrm((NUM_LAYERS, H, INTER)),
        "b1": jnp.zeros((NUM_LAYERS, INTER), jnp.float32),
        "w2": nrm((NUM_LAYERS, INTER, H)),
        "b2": jnp.zeros((NUM_LAYERS, H), jnp.float32),
        "ln2_g": jnp.ones((NUM_LAYERS, H), jnp.float32),
        "ln2_b": jnp.zeros((NUM_LAYERS, H), jnp.float32),
    }
    # torch.nn.Linear(hidden_size + 2, 2) style init
    kk = 1.0 / ((H + 2) ** 0.5)
    params["cls_w"] = jax.random.uniform(next(ki), (NUM_CLASSES, H + 2),
                                         jnp.float32, -kk, kk)
    params["cls_b"] = jax.random.uniform(next(ki), (NUM_CLASSES,),
                                         jnp.float32, -kk, kk)
    return params


def pack_params(params, class_weights):
    """One-time packing of parameters into kernel-ready slabs."""
    f32, bf16 = jnp.float32, jnp.bfloat16

    emb = jnp.zeros((EMB_ROWS, H), f32)
    emb = emb.at[0:VOCAB, :].set(params["token_emb"])
    emb = emb.at[VOCAB:VOCAB + S, :].set(params["pos_emb"])
    emb = emb.at[R_EMB_G, :].set(params["emb_ln_g"])
    emb = emb.at[R_EMB_B, :].set(params["emb_ln_b"])

    # head-major fused QKV: (L*3*NH, H, HEAD_DIM) in bf16
    wqkv = jnp.stack([params["wq"], params["wk"], params["wv"]], axis=1)
    wqkv = wqkv.reshape(NUM_LAYERS * 3 * NUM_HEADS, H, HEAD_DIM).astype(bf16)
    wo = params["wo"].reshape(NUM_LAYERS * NUM_HEADS, HEAD_DIM, H).astype(bf16)

    vecs = jnp.zeros((NUM_LAYERS, VECS_ROWS, INTER), f32)
    vecs = vecs.at[:, 0, 0:H].set(params["bo"])
    vecs = vecs.at[:, 1, 0:H].set(params["ln1_g"])
    vecs = vecs.at[:, 2, 0:H].set(params["ln1_b"])
    vecs = vecs.at[:, 3, 0:INTER].set(params["b1"])
    vecs = vecs.at[:, 4, 0:H].set(params["b2"])
    vecs = vecs.at[:, 5, 0:H].set(params["ln2_g"])
    vecs = vecs.at[:, 6, 0:H].set(params["ln2_b"])
    for h in range(NUM_HEADS):
        vecs = vecs.at[:, R_BQ + h, 0:HEAD_DIM].set(params["bq"][:, h, :])
        vecs = vecs.at[:, R_BK + h, 0:HEAD_DIM].set(params["bk"][:, h, :])
        vecs = vecs.at[:, R_BV + h, 0:HEAD_DIM].set(params["bv"][:, h, :])

    head = jnp.zeros((HEAD_ROWS, NUM_CLASSES), f32)
    head = head.at[0:H, :].set(params["cls_w"][:, :H].T)
    head = head.at[H:H + 2, :].set(params["cls_w"][:, H:].T)
    head = head.at[H + 2, :].set(params["cls_b"])
    head = head.at[H + 3, :].set(class_weights.astype(f32))

    return {"emb": emb, "wqkv": wqkv, "wo": wo,
            "w1": params["w1"].astype(bf16), "w2": params["w2"].astype(bf16),
            "vecs": vecs, "head": head}


# ------------------------------- wrapper -------------------------------------
@jax.jit
def _forward_jit(packed, input_ids, attention_mask, missing_verb_flag,
                 dem_pron_flag, labels):
    ids2d = input_ids.reshape(BS, 1).astype(jnp.int32)
    amask = attention_mask.astype(jnp.int32)
    aux = jnp.stack([labels.astype(jnp.int32),
                     missing_verb_flag.astype(jnp.int32),
                     dem_pron_flag.astype(jnp.int32)], axis=1)   # (B, 3) SMEM

    vmem = pl.BlockSpec(memory_space=pltpu.MemorySpace.VMEM)
    smem = pl.BlockSpec(memory_space=pltpu.MemorySpace.SMEM)
    out = pl.pallas_call(
        fragment_kernel,
        in_specs=[vmem] * 9 + [smem],
        out_specs=vmem,
        out_shape=jax.ShapeDtypeStruct((OUT_ROWS, OUT_LANES), jnp.float32),
    )(ids2d, amask, packed["emb"], packed["wqkv"], packed["wo"],
      packed["w1"], packed["w2"], packed["vecs"], packed["head"], aux)

    logits = out[0:B, 0:NUM_CLASSES]
    loss = out[B, 0]
    return loss, logits


def fragment_classifier_forward(packed, input_ids, attention_mask,
                                missing_verb_flag, dem_pron_flag, labels=None):
    lab = labels if labels is not None else jnp.zeros((B,), jnp.int32)
    loss, logits = _forward_jit(packed, input_ids, attention_mask,
                                missing_verb_flag, dem_pron_flag, lab)
    if labels is None:
        return logits
    return loss, logits


# --------------------------------- main ---------------------------------------
if __name__ == "__main__":
    key = jax.random.PRNGKey(0)
    pkey, dkey = jax.random.split(key)
    params = init_params(pkey)

    # class weights computed the same way as the script (synthetic counts)
    neg, pos = 3.0, 1.0
    total = neg + pos
    class_weights = jnp.array([total / (2 * neg), total / (2 * pos)],
                              jnp.float32)
    packed = pack_params(params, class_weights)

    input_ids = jax.random.randint(dkey, (B, S), 0, VOCAB, jnp.int32)
    attention_mask = jnp.array([[1] * S, [1] * 6 + [0] * 2], jnp.int32)
    missing_verb_flag = jnp.array([1, 0], jnp.int32)
    dem_pron_flag = jnp.array([0, 1], jnp.int32)
    labels = jnp.array([1, 0], jnp.int32)

    loss, logits = fragment_classifier_forward(
        packed, input_ids, attention_mask, missing_verb_flag, dem_pron_flag,
        labels)
    jax.block_until_ready((loss, logits))
    print("KERNEL_OK")
</pallas_src>

<mosaic_0001>
module attributes {stable_mosaic.version = 11 : i64} {
  func.func @fragment_kernel(%arg0: memref<16x1xi32, #tpu.memory_space<vmem>>, %arg1: memref<2x8xi32, #tpu.memory_space<vmem>>, %arg2: memref<80x128xf32, #tpu.memory_space<vmem>>, %arg3: memref<12x128x64xbf16, #tpu.memory_space<vmem>>, %arg4: memref<4x64x128xbf16, #tpu.memory_space<vmem>>, %arg5: memref<2x128x256xbf16, #tpu.memory_space<vmem>>, %arg6: memref<2x256x128xbf16, #tpu.memory_space<vmem>>, %arg7: memref<2x16x256xf32, #tpu.memory_space<vmem>>, %arg8: memref<136x2xf32, #tpu.memory_space<vmem>>, %arg9: memref<2x3xi32, #tpu.memory_space<smem>>, %arg10: memref<8x128xf32, #tpu.memory_space<vmem>>) attributes {dimension_semantics = [], scalar_prefetch = 0 : i64, scratch_operands = 0 : i64, tpu.core_type = #tpu.core_type<tc>} {
    %c0 = arith.constant 0 : index
    %c0_0 = arith.constant 0 : index
    %0 = vector.load %arg0[%c0, %c0_0] : memref<16x1xi32, #tpu.memory_space<vmem>>, vector<16x1xi32>
    %1 = tpu.iota {dimensions = array<i32: 1>} : vector<16x64xi32>
    %2 = vector.broadcast %0 : vector<16x1xi32> to vector<16x64xi32>
    %3 = arith.cmpi eq, %1, %2 : vector<16x64xi32>
    %4 = arith.extui %3 : vector<16x64xi1> to vector<16x64xi32>
    %5 = arith.sitofp %4 : vector<16x64xi32> to vector<16x64xf32>
    %6 = arith.truncf %5 : vector<16x64xf32> to vector<16x64xbf16>
    %c0_1 = arith.constant 0 : index
    %c0_2 = arith.constant 0 : index
    %7 = vector.load %arg2[%c0_1, %c0_2] : memref<80x128xf32, #tpu.memory_space<vmem>>, vector<80x128xf32>
    %8 = vector.extract_strided_slice %7 {offsets = [0, 0], sizes = [64, 128], strides = [1, 1]} : vector<80x128xf32> to vector<64x128xf32>
    %9 = arith.truncf %8 : vector<64x128xf32> to vector<64x128xbf16>
    %cst = arith.constant dense<0.000000e+00> : vector<16x128xf32>
    %10 = tpu.matmul %6, %9, %cst {dimension_numbers = #tpu.dot_dimension_numbers<[1], [0], [0], [1], [0, 0, 1, 1], [], []>} : vector<16x64xbf16>, vector<64x128xbf16>, vector<16x128xf32> -> vector<16x128xf32>
    %11 = vector.extract_strided_slice %7 {offsets = [64, 0], sizes = [8, 128], strides = [1, 1]} : vector<80x128xf32> to vector<8x128xf32>
    %12 = tpu.concatenate %11, %11 in 0 : vector<8x128xf32>, vector<8x128xf32> -> vector<16x128xf32>
    %13 = arith.addf %10, %12 : vector<16x128xf32>
    %14 = vector.extract_strided_slice %7 {offsets = [72, 0], sizes = [1, 128], strides = [1, 1]} : vector<80x128xf32> to vector<1x128xf32>
    %15 = vector.extract_strided_slice %7 {offsets = [73, 0], sizes = [1, 128], strides = [1, 1]} : vector<80x128xf32> to vector<1x128xf32>
    %cst_3 = arith.constant dense<0.000000e+00> : vector<16xf32>
    %16 = vector.multi_reduction <add>, %13, %cst_3 [1] : vector<16x128xf32> to vector<16xf32>
    %17 = vector.shape_cast %16 : vector<16xf32> to vector<16x1xf32>
    %cst_4 = arith.constant 1.280000e+02 : f32
    %18 = vector.broadcast %cst_4 : f32 to vector<16x1xf32>
    %19 = arith.divf %17, %18 : vector<16x1xf32>
    %20 = vector.broadcast %19 : vector<16x1xf32> to vector<16x128xf32>
    %21 = arith.subf %13, %20 : vector<16x128xf32>
    %22 = arith.mulf %21, %21 : vector<16x128xf32>
    %cst_5 = arith.constant dense<0.000000e+00> : vector<16xf32>
    %23 = vector.multi_reduction <add>, %22, %cst_5 [1] : vector<16x128xf32> to vector<16xf32>
    %24 = vector.shape_cast %23 : vector<16xf32> to vector<16x1xf32>
    %cst_6 = arith.constant 1.280000e+02 : f32
    %25 = vector.broadcast %cst_6 : f32 to vector<16x1xf32>
    %26 = arith.divf %24, %25 : vector<16x1xf32>
    %27 = vector.broadcast %19 : vector<16x1xf32> to vector<16x128xf32>
    %28 = arith.subf %13, %27 : vector<16x128xf32>
    %cst_7 = arith.constant 9.99999974E-6 : f32
    %29 = vector.broadcast %cst_7 : f32 to vector<16x1xf32>
    %30 = arith.addf %26, %29 : vector<16x1xf32>
    %31 = math.rsqrt %30 : vector<16x1xf32>
    %32 = vector.broadcast %31 : vector<16x1xf32> to vector<16x128xf32>
    %33 = arith.mulf %28, %32 : vector<16x128xf32>
    %34 = vector.broadcast %14 : vector<1x128xf32> to vector<16x128xf32>
    %35 = arith.mulf %33, %34 : vector<16x128xf32>
    %36 = vector.broadcast %15 : vector<1x128xf32> to vector<16x128xf32>
    %37 = arith.addf %35, %36 : vector<16x128xf32>
    %c0_8 = arith.constant 0 : index
    %c0_9 = arith.constant 0 : index
    %38 = vector.load %arg1[%c0_8, %c0_9] : memref<2x8xi32, #tpu.memory_space<vmem>>, vector<2x8xi32>
    %39 = arith.sitofp %38 : vector<2x8xi32> to vector<2x8xf32>
    %c0_10 = arith.constant 0 : index
    %c0_11 = arith.constant 0 : index
    %c0_12 = arith.constant 0 : index
    %40 = vector.load %arg7[%c0_10, %c0_11, %c0_12] : memref<2x16x256xf32, #tpu.memory_space<vmem>>, vector<1x16x256xf32>
    %41 = vector.shape_cast %40 : vector<1x16x256xf32> to vector<16x256xf32>
    %42 = vector.extract_strided_slice %41 {offsets = [0, 0], sizes = [1, 128], strides = [1, 1]} : vector<16x256xf32> to vector<1x128xf32>
    %43 = vector.extract_strided_slice %41 {offsets = [1, 0], sizes = [1, 128], strides = [1, 1]} : vector<16x256xf32> to vector<1x128xf32>
    %44 = vector.extract_strided_slice %41 {offsets = [2, 0], sizes = [1, 128], strides = [1, 1]} : vector<16x256xf32> to vector<1x128xf32>
    %45 = vector.extract_strided_slice %41 {offsets = [3, 0], sizes = [1, 256], strides = [1, 1]} : vector<16x256xf32> to vector<1x256xf32>
    %46 = vector.extract_strided_slice %41 {offsets = [4, 0], sizes = [1, 128], strides = [1, 1]} : vector<16x256xf32> to vector<1x128xf32>
    %47 = vector.extract_strided_slice %41 {offsets = [5, 0], sizes = [1, 128], strides = [1, 1]} : vector<16x256xf32> to vector<1x128xf32>
    %48 = vector.extract_strided_slice %41 {offsets = [6, 0], sizes = [1, 128], strides = [1, 1]} : vector<16x256xf32> to vector<1x128xf32>
    %49 = arith.truncf %37 : vector<16x128xf32> to vector<16x128xbf16>
    %c0_13 = arith.constant 0 : index
    %c0_14 = arith.constant 0 : index
    %c0_15 = arith.constant 0 : index
    %50 = vector.load %arg3[%c0_13, %c0_14, %c0_15] : memref<12x128x64xbf16, #tpu.memory_space<vmem>>, vector<1x128x64xbf16>
    %51 = vector.shape_cast %50 : vector<1x128x64xbf16> to vector<128x64xbf16>
    %cst_16 = arith.constant dense<0.000000e+00> : vector<16x64xf32>
    %52 = tpu.matmul %49, %51, %cst_16 {dimension_numbers = #tpu.dot_dimension_numbers<[1], [0], [0], [1], [0, 0, 1, 1], [], []>} : vector<16x128xbf16>, vector<128x64xbf16>, vector<16x64xf32> -> vector<16x64xf32>
    %53 = vector.extract_strided_slice %41 {offsets = [7, 0], sizes = [1, 64], strides = [1, 1]} : vector<16x256xf32> to vector<1x64xf32>
    %54 = vector.broadcast %53 : vector<1x64xf32> to vector<16x64xf32>
    %55 = arith.addf %52, %54 : vector<16x64xf32>
    %c2 = arith.constant 2 : index
    %c0_17 = arith.constant 0 : index
    %c0_18 = arith.constant 0 : index
    %56 = vector.load %arg3[%c2, %c0_17, %c0_18] : memref<12x128x64xbf16, #tpu.memory_space<vmem>>, vector<1x128x64xbf16>
    %57 = vector.shape_cast %56 : vector<1x128x64xbf16> to vector<128x64xbf16>
    %cst_19 = arith.constant dense<0.000000e+00> : vector<16x64xf32>
    %58 = tpu.matmul %49, %57, %cst_19 {dimension_numbers = #tpu.dot_dimension_numbers<[1], [0], [0], [1], [0, 0, 1, 1], [], []>} : vector<16x128xbf16>, vector<128x64xbf16>, vector<16x64xf32> -> vector<16x64xf32>
    %59 = vector.extract_strided_slice %41 {offsets = [9, 0], sizes = [1, 64], strides = [1, 1]} : vector<16x256xf32> to vector<1x64xf32>
    %60 = vector.broadcast %59 : vector<1x64xf32> to vector<16x64xf32>
    %61 = arith.addf %58, %60 : vector<16x64xf32>
    %c4 = arith.constant 4 : index
    %c0_20 = arith.constant 0 : index
    %c0_21 = arith.constant 0 : index
    %62 = vector.load %arg3[%c4, %c0_20, %c0_21] : memref<12x128x64xbf16, #tpu.memory_space<vmem>>, vector<1x128x64xbf16>
    %63 = vector.shape_cast %62 : vector<1x128x64xbf16> to vector<128x64xbf16>
    %cst_22 = arith.constant dense<0.000000e+00> : vector<16x64xf32>
    %64 = tpu.matmul %49, %63, %cst_22 {dimension_numbers = #tpu.dot_dimension_numbers<[1], [0], [0], [1], [0, 0, 1, 1], [], []>} : vector<16x128xbf16>, vector<128x64xbf16>, vector<16x64xf32> -> vector<16x64xf32>
    %65 = vector.extract_strided_slice %41 {offsets = [11, 0], sizes = [1, 64], strides = [1, 1]} : vector<16x256xf32> to vector<1x64xf32>
    %66 = vector.broadcast %65 : vector<1x64xf32> to vector<16x64xf32>
    %67 = arith.addf %64, %66 : vector<16x64xf32>
    %c1 = arith.constant 1 : index
    %c0_23 = arith.constant 0 : index
    %c0_24 = arith.constant 0 : index
    %68 = vector.load %arg3[%c1, %c0_23, %c0_24] : memref<12x128x64xbf16, #tpu.memory_space<vmem>>, vector<1x128x64xbf16>
    %69 = vector.shape_cast %68 : vector<1x128x64xbf16> to vector<128x64xbf16>
    %cst_25 = arith.constant dense<0.000000e+00> : vector<16x64xf32>
    %70 = tpu.matmul %49, %69, %cst_25 {dimension_numbers = #tpu.dot_dimension_numbers<[1], [0], [0], [1], [0, 0, 1, 1], [], []>} : vector<16x128xbf16>, vector<128x64xbf16>, vector<16x64xf32> -> vector<16x64xf32>
    %71 = vector.extract_strided_slice %41 {offsets = [8, 0], sizes = [1, 64], strides = [1, 1]} : vector<16x256xf32> to vector<1x64xf32>
    %72 = vector.broadcast %71 : vector<1x64xf32> to vector<16x64xf32>
    %73 = arith.addf %70, %72 : vector<16x64xf32>
    %c3 = arith.constant 3 : index
    %c0_26 = arith.constant 0 : index
    %c0_27 = arith.constant 0 : index
    %74 = vector.load %arg3[%c3, %c0_26, %c0_27] : memref<12x128x64xbf16, #tpu.memory_space<vmem>>, vector<1x128x64xbf16>
    %75 = vector.shape_cast %74 : vector<1x128x64xbf16> to vector<128x64xbf16>
    %cst_28 = arith.constant dense<0.000000e+00> : vector<16x64xf32>
    %76 = tpu.matmul %49, %75, %cst_28 {dimension_numbers = #tpu.dot_dimension_numbers<[1], [0], [0], [1], [0, 0, 1, 1], [], []>} : vector<16x128xbf16>, vector<128x64xbf16>, vector<16x64xf32> -> vector<16x64xf32>
    %77 = vector.extract_strided_slice %41 {offsets = [10, 0], sizes = [1, 64], strides = [1, 1]} : vector<16x256xf32> to vector<1x64xf32>
    %78 = vector.broadcast %77 : vector<1x64xf32> to vector<16x64xf32>
    %79 = arith.addf %76, %78 : vector<16x64xf32>
    %c5 = arith.constant 5 : index
    %c0_29 = arith.constant 0 : index
    %c0_30 = arith.constant 0 : index
    %80 = vector.load %arg3[%c5, %c0_29, %c0_30] : memref<12x128x64xbf16, #tpu.memory_space<vmem>>, vector<1x128x64xbf16>
    %81 = vector.shape_cast %80 : vector<1x128x64xbf16> to vector<128x64xbf16>
    %cst_31 = arith.constant dense<0.000000e+00> : vector<16x64xf32>
    %82 = tpu.matmul %49, %81, %cst_31 {dimension_numbers = #tpu.dot_dimension_numbers<[1], [0], [0], [1], [0, 0, 1, 1], [], []>} : vector<16x128xbf16>, vector<128x64xbf16>, vector<16x64xf32> -> vector<16x64xf32>
    %83 = vector.extract_strided_slice %41 {offsets = [12, 0], sizes = [1, 64], strides = [1, 1]} : vector<16x256xf32> to vector<1x64xf32>
    %84 = vector.broadcast %83 : vector<1x64xf32> to vector<16x64xf32>
    %85 = arith.addf %82, %84 : vector<16x64xf32>
    %86 = vector.extract_strided_slice %39 {offsets = [0, 0], sizes = [1, 8], strides = [1, 1]} : vector<2x8xf32> to vector<1x8xf32>
    %cst_32 = arith.constant 1.000000e+00 : f32
    %87 = vector.broadcast %cst_32 : f32 to vector<1x8xf32>
    %88 = arith.subf %86, %87 : vector<1x8xf32>
    %cst_33 = arith.constant 1.000000e+09 : f32
    %89 = vector.broadcast %cst_33 : f32 to vector<1x8xf32>
    %90 = arith.mulf %88, %89 : vector<1x8xf32>
    %cst_34 = arith.constant 0.000000e+00 : f32
    %91 = vector.broadcast %cst_34 : f32 to vector<8x128xf32>
    %92 = vector.extract_strided_slice %55 {offsets = [0, 0], sizes = [8, 64], strides = [1, 1]} : vector<16x64xf32> to vector<8x64xf32>
    %93 = arith.truncf %92 : vector<8x64xf32> to vector<8x64xbf16>
    %94 = vector.extract_strided_slice %61 {offsets = [0, 0], sizes = [8, 64], strides = [1, 1]} : vector<16x64xf32> to vector<8x64xf32>
    %95 = arith.truncf %94 : vector<8x64xf32> to vector<8x64xbf16>
    %96 = vector.extract_strided_slice %67 {offsets = [0, 0], sizes = [8, 64], strides = [1, 1]} : vector<16x64xf32> to vector<8x64xf32>
    %97 = arith.truncf %96 : vector<8x64xf32> to vector<8x64xbf16>
    %cst_35 = arith.constant dense<0.000000e+00> : vector<8x8xf32>
    %98 = tpu.matmul %93, %95, %cst_35 {dimension_numbers = #tpu.dot_dimension_numbers<[1], [1], [0], [0], [0, 0, 1, 0], [], []>} : vector<8x64xbf16>, vector<8x64xbf16>, vector<8x8xf32> -> vector<8x8xf32>
    %cst_36 = arith.constant 1.250000e-01 : f32
    %99 = vector.broadcast %cst_36 : f32 to vector<8x8xf32>
    %100 = arith.mulf %98, %99 : vector<8x8xf32>
    %101 = vector.broadcast %90 : vector<1x8xf32> to vector<8x8xf32>
    %102 = arith.addf %100, %101 : vector<8x8xf32>
    %cst_37 = arith.constant dense<0xFF800000> : vector<8xf32>
    %103 = vector.multi_reduction <maximumf>, %102, %cst_37 [1] : vector<8x8xf32> to vector<8xf32>
    %104 = vector.shape_cast %103 : vector<8xf32> to vector<8x1xf32>
    %105 = vector.broadcast %104 : vector<8x1xf32> to vector<8x8xf32>
    %106 = arith.subf %102, %105 : vector<8x8xf32>
    %107 = math.exp %106 : vector<8x8xf32>
    %cst_38 = arith.constant dense<0.000000e+00> : vector<8xf32>
    %108 = vector.multi_reduction <add>, %107, %cst_38 [1] : vector<8x8xf32> to vector<8xf32>
    %109 = vector.shape_cast %108 : vector<8xf32> to vector<8x1xf32>
    %110 = tpu.reciprocal %109 {approx = true} : vector<8x1xf32> -> vector<8x1xf32>
    %111 = vector.broadcast %110 : vector<8x1xf32> to vector<8x8xf32>
    %112 = arith.mulf %107, %111 : vector<8x8xf32>
    %113 = arith.truncf %112 : vector<8x8xf32> to vector<8x8xbf16>
    %cst_39 = arith.constant dense<0.000000e+00> : vector<8x64xf32>
    %114 = tpu.matmul %113, %97, %cst_39 {dimension_numbers = #tpu.dot_dimension_numbers<[1], [0], [0], [1], [0, 0, 1, 1], [], []>} : vector<8x8xbf16>, vector<8x64xbf16>, vector<8x64xf32> -> vector<8x64xf32>
    %115 = arith.truncf %114 : vector<8x64xf32> to vector<8x64xbf16>
    %c0_40 = arith.constant 0 : index
    %c0_41 = arith.constant 0 : index
    %c0_42 = arith.constant 0 : index
    %116 = vector.load %arg4[%c0_40, %c0_41, %c0_42] : memref<4x64x128xbf16, #tpu.memory_space<vmem>>, vector<1x64x128xbf16>
    %117 = vector.shape_cast %116 : vector<1x64x128xbf16> to vector<64x128xbf16>
    %cst_43 = arith.constant dense<0.000000e+00> : vector<8x128xf32>
    %118 = tpu.matmul %115, %117, %cst_43 {dimension_numbers = #tpu.dot_dimension_numbers<[1], [0], [0], [1], [0, 0, 1, 1], [], []>} : vector<8x64xbf16>, vector<64x128xbf16>, vector<8x128xf32> -> vector<8x128xf32>
    %119 = arith.addf %91, %118 : vector<8x128xf32>
    %120 = vector.extract_strided_slice %73 {offsets = [0, 0], sizes = [8, 64], strides = [1, 1]} : vector<16x64xf32> to vector<8x64xf32>
    %121 = arith.truncf %120 : vector<8x64xf32> to vector<8x64xbf16>
    %122 = vector.extract_strided_slice %79 {offsets = [0, 0], sizes = [8, 64], strides = [1, 1]} : vector<16x64xf32> to vector<8x64xf32>
    %123 = arith.truncf %122 : vector<8x64xf32> to vector<8x64xbf16>
    %124 = vector.extract_strided_slice %85 {offsets = [0, 0], sizes = [8, 64], strides = [1, 1]} : vector<16x64xf32> to vector<8x64xf32>
    %125 = arith.truncf %124 : vector<8x64xf32> to vector<8x64xbf16>
    %cst_44 = arith.constant dense<0.000000e+00> : vector<8x8xf32>
    %126 = tpu.matmul %121, %123, %cst_44 {dimension_numbers = #tpu.dot_dimension_numbers<[1], [1], [0], [0], [0, 0, 1, 0], [], []>} : vector<8x64xbf16>, vector<8x64xbf16>, vector<8x8xf32> -> vector<8x8xf32>
    %cst_45 = arith.constant 1.250000e-01 : f32
    %127 = vector.broadcast %cst_45 : f32 to vector<8x8xf32>
    %128 = arith.mulf %126, %127 : vector<8x8xf32>
    %129 = vector.broadcast %90 : vector<1x8xf32> to vector<8x8xf32>
    %130 = arith.addf %128, %129 : vector<8x8xf32>
    %cst_46 = arith.constant dense<0xFF800000> : vector<8xf32>
    %131 = vector.multi_reduction <maximumf>, %130, %cst_46 [1] : vector<8x8xf32> to vector<8xf32>
    %132 = vector.shape_cast %131 : vector<8xf32> to vector<8x1xf32>
    %133 = vector.broadcast %132 : vector<8x1xf32> to vector<8x8xf32>
    %134 = arith.subf %130, %133 : vector<8x8xf32>
    %135 = math.exp %134 : vector<8x8xf32>
    %cst_47 = arith.constant dense<0.000000e+00> : vector<8xf32>
    %136 = vector.multi_reduction <add>, %135, %cst_47 [1] : vector<8x8xf32> to vector<8xf32>
    %137 = vector.shape_cast %136 : vector<8xf32> to vector<8x1xf32>
    %138 = tpu.reciprocal %137 {approx = true} : vector<8x1xf32> -> vector<8x1xf32>
    %139 = vector.broadcast %138 : vector<8x1xf32> to vector<8x8xf32>
    %140 = arith.mulf %135, %139 : vector<8x8xf32>
    %141 = arith.truncf %140 : vector<8x8xf32> to vector<8x8xbf16>
    %cst_48 = arith.constant dense<0.000000e+00> : vector<8x64xf32>
    %142 = tpu.matmul %141, %125, %cst_48 {dimension_numbers = #tpu.dot_dimension_numbers<[1], [0], [0], [1], [0, 0, 1, 1], [], []>} : vector<8x8xbf16>, vector<8x64xbf16>, vector<8x64xf32> -> vector<8x64xf32>
    %143 = arith.truncf %142 : vector<8x64xf32> to vector<8x64xbf16>
    %c1_49 = arith.constant 1 : index
    %c0_50 = arith.constant 0 : index
    %c0_51 = arith.constant 0 : index
    %144 = vector.load %arg4[%c1_49, %c0_50, %c0_51] : memref<4x64x128xbf16, #tpu.memory_space<vmem>>, vector<1x64x128xbf16>
    %145 = vector.shape_cast %144 : vector<1x64x128xbf16> to vector<64x128xbf16>
    %cst_52 = arith.constant dense<0.000000e+00> : vector<8x128xf32>
    %146 = tpu.matmul %143, %145, %cst_52 {dimension_numbers = #tpu.dot_dimension_numbers<[1], [0], [0], [1], [0, 0, 1, 1], [], []>} : vector<8x64xbf16>, vector<64x128xbf16>, vector<8x128xf32> -> vector<8x128xf32>
    %147 = arith.addf %119, %146 : vector<8x128xf32>
    %148 = vector.extract_strided_slice %39 {offsets = [1, 0], sizes = [1, 8], strides = [1, 1]} : vector<2x8xf32> to vector<1x8xf32>
    %cst_53 = arith.constant 1.000000e+00 : f32
    %149 = vector.broadcast %cst_53 : f32 to vector<1x8xf32>
    %150 = arith.subf %148, %149 : vector<1x8xf32>
    %cst_54 = arith.constant 1.000000e+09 : f32
    %151 = vector.broadcast %cst_54 : f32 to vector<1x8xf32>
    %152 = arith.mulf %150, %151 : vector<1x8xf32>
    %cst_55 = arith.constant 0.000000e+00 : f32
    %153 = vector.broadcast %cst_55 : f32 to vector<8x128xf32>
    %154 = vector.extract_strided_slice %55 {offsets = [8, 0], sizes = [8, 64], strides = [1, 1]} : vector<16x64xf32> to vector<8x64xf32>
    %155 = arith.truncf %154 : vector<8x64xf32> to vector<8x64xbf16>
    %156 = vector.extract_strided_slice %61 {offsets = [8, 0], sizes = [8, 64], strides = [1, 1]} : vector<16x64xf32> to vector<8x64xf32>
    %157 = arith.truncf %156 : vector<8x64xf32> to vector<8x64xbf16>
    %158 = vector.extract_strided_slice %67 {offsets = [8, 0], sizes = [8, 64], strides = [1, 1]} : vector<16x64xf32> to vector<8x64xf32>
    %159 = arith.truncf %158 : vector<8x64xf32> to vector<8x64xbf16>
    %cst_56 = arith.constant dense<0.000000e+00> : vector<8x8xf32>
    %160 = tpu.matmul %155, %157, %cst_56 {dimension_numbers = #tpu.dot_dimension_numbers<[1], [1], [0], [0], [0, 0, 1, 0], [], []>} : vector<8x64xbf16>, vector<8x64xbf16>, vector<8x8xf32> -> vector<8x8xf32>
    %cst_57 = arith.constant 1.250000e-01 : f32
    %161 = vector.broadcast %cst_57 : f32 to vector<8x8xf32>
    %162 = arith.mulf %160, %161 : vector<8x8xf32>
    %163 = vector.broadcast %152 : vector<1x8xf32> to vector<8x8xf32>
    %164 = arith.addf %162, %163 : vector<8x8xf32>
    %cst_58 = arith.constant dense<0xFF800000> : vector<8xf32>
    %165 = vector.multi_reduction <maximumf>, %164, %cst_58 [1] : vector<8x8xf32> to vector<8xf32>
    %166 = vector.shape_cast %165 : vector<8xf32> to vector<8x1xf32>
    %167 = vector.broadcast %166 : vector<8x1xf32> to vector<8x8xf32>
    %168 = arith.subf %164, %167 : vector<8x8xf32>
    %169 = math.exp %168 : vector<8x8xf32>
    %cst_59 = arith.constant dense<0.000000e+00> : vector<8xf32>
    %170 = vector.multi_reduction <add>, %169, %cst_59 [1] : vector<8x8xf32> to vector<8xf32>
    %171 = vector.shape_cast %170 : vector<8xf32> to vector<8x1xf32>
    %172 = tpu.reciprocal %171 {approx = true} : vector<8x1xf32> -> vector<8x1xf32>
    %173 = vector.broadcast %172 : vector<8x1xf32> to vector<8x8xf32>
    %174 = arith.mulf %169, %173 : vector<8x8xf32>
    %175 = arith.truncf %174 : vector<8x8xf32> to vector<8x8xbf16>
    %cst_60 = arith.constant dense<0.000000e+00> : vector<8x64xf32>
    %176 = tpu.matmul %175, %159, %cst_60 {dimension_numbers = #tpu.dot_dimension_numbers<[1], [0], [0], [1], [0, 0, 1, 1], [], []>} : vector<8x8xbf16>, vector<8x64xbf16>, vector<8x64xf32> -> vector<8x64xf32>
    %177 = arith.truncf %176 : vector<8x64xf32> to vector<8x64xbf16>
    %c0_61 = arith.constant 0 : index
    %c0_62 = arith.constant 0 : index
    %c0_63 = arith.constant 0 : index
    %178 = vector.load %arg4[%c0_61, %c0_62, %c0_63] : memref<4x64x128xbf16, #tpu.memory_space<vmem>>, vector<1x64x128xbf16>
    %179 = vector.shape_cast %178 : vector<1x64x128xbf16> to vector<64x128xbf16>
    %cst_64 = arith.constant dense<0.000000e+00> : vector<8x128xf32>
    %180 = tpu.matmul %177, %179, %cst_64 {dimension_numbers = #tpu.dot_dimension_numbers<[1], [0], [0], [1], [0, 0, 1, 1], [], []>} : vector<8x64xbf16>, vector<64x128xbf16>, vector<8x128xf32> -> vector<8x128xf32>
    %181 = arith.addf %153, %180 : vector<8x128xf32>
    %182 = vector.extract_strided_slice %73 {offsets = [8, 0], sizes = [8, 64], strides = [1, 1]} : vector<16x64xf32> to vector<8x64xf32>
    %183 = arith.truncf %182 : vector<8x64xf32> to vector<8x64xbf16>
    %184 = vector.extract_strided_slice %79 {offsets = [8, 0], sizes = [8, 64], strides = [1, 1]} : vector<16x64xf32> to vector<8x64xf32>
    %185 = arith.truncf %184 : vector<8x64xf32> to vector<8x64xbf16>
    %186 = vector.extract_strided_slice %85 {offsets = [8, 0], sizes = [8, 64], strides = [1, 1]} : vector<16x64xf32> to vector<8x64xf32>
    %187 = arith.truncf %186 : vector<8x64xf32> to vector<8x64xbf16>
    %cst_65 = arith.constant dense<0.000000e+00> : vector<8x8xf32>
    %188 = tpu.matmul %183, %185, %cst_65 {dimension_numbers = #tpu.dot_dimension_numbers<[1], [1], [0], [0], [0, 0, 1, 0], [], []>} : vector<8x64xbf16>, vector<8x64xbf16>, vector<8x8xf32> -> vector<8x8xf32>
    %cst_66 = arith.constant 1.250000e-01 : f32
    %189 = vector.broadcast %cst_66 : f32 to vector<8x8xf32>
    %190 = arith.mulf %188, %189 : vector<8x8xf32>
    %191 = vector.broadcast %152 : vector<1x8xf32> to vector<8x8xf32>
    %192 = arith.addf %190, %191 : vector<8x8xf32>
    %cst_67 = arith.constant dense<0xFF800000> : vector<8xf32>
    %193 = vector.multi_reduction <maximumf>, %192, %cst_67 [1] : vector<8x8xf32> to vector<8xf32>
    %194 = vector.shape_cast %193 : vector<8xf32> to vector<8x1xf32>
    %195 = vector.broadcast %194 : vector<8x1xf32> to vector<8x8xf32>
    %196 = arith.subf %192, %195 : vector<8x8xf32>
    %197 = math.exp %196 : vector<8x8xf32>
    %cst_68 = arith.constant dense<0.000000e+00> : vector<8xf32>
    %198 = vector.multi_reduction <add>, %197, %cst_68 [1] : vector<8x8xf32> to vector<8xf32>
    %199 = vector.shape_cast %198 : vector<8xf32> to vector<8x1xf32>
    %200 = tpu.reciprocal %199 {approx = true} : vector<8x1xf32> -> vector<8x1xf32>
    %201 = vector.broadcast %200 : vector<8x1xf32> to vector<8x8xf32>
    %202 = arith.mulf %197, %201 : vector<8x8xf32>
    %203 = arith.truncf %202 : vector<8x8xf32> to vector<8x8xbf16>
    %cst_69 = arith.constant dense<0.000000e+00> : vector<8x64xf32>
    %204 = tpu.matmul %203, %187, %cst_69 {dimension_numbers = #tpu.dot_dimension_numbers<[1], [0], [0], [1], [0, 0, 1, 1], [], []>} : vector<8x8xbf16>, vector<8x64xbf16>, vector<8x64xf32> -> vector<8x64xf32>
    %205 = arith.truncf %204 : vector<8x64xf32> to vector<8x64xbf16>
    %c1_70 = arith.constant 1 : index
    %c0_71 = arith.constant 0 : index
    %c0_72 = arith.constant 0 : index
    %206 = vector.load %arg4[%c1_70, %c0_71, %c0_72] : memref<4x64x128xbf16, #tpu.memory_space<vmem>>, vector<1x64x128xbf16>
    %207 = vector.shape_cast %206 : vector<1x64x128xbf16> to vector<64x128xbf16>
    %cst_73 = arith.constant dense<0.000000e+00> : vector<8x128xf32>
    %208 = tpu.matmul %205, %207, %cst_73 {dimension_numbers = #tpu.dot_dimension_numbers<[1], [0], [0], [1], [0, 0, 1, 1], [], []>} : vector<8x64xbf16>, vector<64x128xbf16>, vector<8x128xf32> -> vector<8x128xf32>
    %209 = arith.addf %181, %208 : vector<8x128xf32>
    %210 = tpu.concatenate %147, %209 in 0 : vector<8x128xf32>, vector<8x128xf32> -> vector<16x128xf32>
    %211 = vector.broadcast %42 : vector<1x128xf32> to vector<16x128xf32>
    %212 = arith.addf %210, %211 : vector<16x128xf32>
    %213 = arith.addf %37, %212 : vector<16x128xf32>
    %cst_74 = arith.constant dense<0.000000e+00> : vector<16xf32>
    %214 = vector.multi_reduction <add>, %213, %cst_74 [1] : vector<16x128xf32> to vector<16xf32>
    %215 = vector.shape_cast %214 : vector<16xf32> to vector<16x1xf32>
    %cst_75 = arith.constant 1.280000e+02 : f32
    %216 = vector.broadcast %cst_75 : f32 to vector<16x1xf32>
    %217 = arith.divf %215, %216 : vector<16x1xf32>
    %218 = vector.broadcast %217 : vector<16x1xf32> to vector<16x128xf32>
    %219 = arith.subf %213, %218 : vector<16x128xf32>
    %220 = arith.mulf %219, %219 : vector<16x128xf32>
    %cst_76 = arith.constant dense<0.000000e+00> : vector<16xf32>
    %221 = vector.multi_reduction <add>, %220, %cst_76 [1] : vector<16x128xf32> to vector<16xf32>
    %222 = vector.shape_cast %221 : vector<16xf32> to vector<16x1xf32>
    %cst_77 = arith.constant 1.280000e+02 : f32
    %223 = vector.broadcast %cst_77 : f32 to vector<16x1xf32>
    %224 = arith.divf %222, %223 : vector<16x1xf32>
    %225 = vector.broadcast %217 : vector<16x1xf32> to vector<16x128xf32>
    %226 = arith.subf %213, %225 : vector<16x128xf32>
    %cst_78 = arith.constant 9.99999974E-6 : f32
    %227 = vector.broadcast %cst_78 : f32 to vector<16x1xf32>
    %228 = arith.addf %224, %227 : vector<16x1xf32>
    %229 = math.rsqrt %228 : vector<16x1xf32>
    %230 = vector.broadcast %229 : vector<16x1xf32> to vector<16x128xf32>
    %231 = arith.mulf %226, %230 : vector<16x128xf32>
    %232 = vector.broadcast %43 : vector<1x128xf32> to vector<16x128xf32>
    %233 = arith.mulf %231, %232 : vector<16x128xf32>
    %234 = vector.broadcast %44 : vector<1x128xf32> to vector<16x128xf32>
    %235 = arith.addf %233, %234 : vector<16x128xf32>
    %236 = arith.truncf %235 : vector<16x128xf32> to vector<16x128xbf16>
    %c0_79 = arith.constant 0 : index
    %c0_80 = arith.constant 0 : index
    %c0_81 = arith.constant 0 : index
    %237 = vector.load %arg5[%c0_79, %c0_80, %c0_81] : memref<2x128x256xbf16, #tpu.memory_space<vmem>>, vector<1x128x256xbf16>
    %238 = vector.shape_cast %237 : vector<1x128x256xbf16> to vector<128x256xbf16>
    %cst_82 = arith.constant dense<0.000000e+00> : vector<16x256xf32>
    %239 = tpu.matmul %236, %238, %cst_82 {dimension_numbers = #tpu.dot_dimension_numbers<[1], [0], [0], [1], [0, 0, 1, 1], [], []>} : vector<16x128xbf16>, vector<128x256xbf16>, vector<16x256xf32> -> vector<16x256xf32>
    %240 = vector.broadcast %45 : vector<1x256xf32> to vector<16x256xf32>
    %241 = arith.addf %239, %240 : vector<16x256xf32>
    %242 = arith.mulf %241, %241 : vector<16x256xf32>
    %243 = arith.mulf %241, %242 : vector<16x256xf32>
    %cst_83 = arith.constant 4.471500e-02 : f32
    %244 = vector.broadcast %cst_83 : f32 to vector<16x256xf32>
    %245 = arith.mulf %244, %243 : vector<16x256xf32>
    %246 = arith.addf %241, %245 : vector<16x256xf32>
    %cst_84 = arith.constant 0.797884583 : f32
    %247 = vector.broadcast %cst_84 : f32 to vector<16x256xf32>
    %248 = arith.mulf %247, %246 : vector<16x256xf32>
    %249 = math.tanh %248 : vector<16x256xf32>
    %cst_85 = arith.constant 1.000000e+00 : f32
    %250 = vector.broadcast %cst_85 : f32 to vector<16x256xf32>
    %251 = arith.addf %250, %249 : vector<16x256xf32>
    %cst_86 = arith.constant 5.000000e-01 : f32
    %252 = vector.broadcast %cst_86 : f32 to vector<16x256xf32>
    %253 = arith.mulf %252, %251 : vector<16x256xf32>
    %254 = arith.mulf %241, %253 : vector<16x256xf32>
    %255 = arith.truncf %254 : vector<16x256xf32> to vector<16x256xbf16>
    %c0_87 = arith.constant 0 : index
    %c0_88 = arith.constant 0 : index
    %c0_89 = arith.constant 0 : index
    %256 = vector.load %arg6[%c0_87, %c0_88, %c0_89] : memref<2x256x128xbf16, #tpu.memory_space<vmem>>, vector<1x256x128xbf16>
    %257 = vector.shape_cast %256 : vector<1x256x128xbf16> to vector<256x128xbf16>
    %cst_90 = arith.constant dense<0.000000e+00> : vector<16x128xf32>
    %258 = tpu.matmul %255, %257, %cst_90 {dimension_numbers = #tpu.dot_dimension_numbers<[1], [0], [0], [1], [0, 0, 1, 1], [], []>} : vector<16x256xbf16>, vector<256x128xbf16>, vector<16x128xf32> -> vector<16x128xf32>
    %259 = vector.broadcast %46 : vector<1x128xf32> to vector<16x128xf32>
    %260 = arith.addf %258, %259 : vector<16x128xf32>
    %261 = arith.addf %235, %260 : vector<16x128xf32>
    %cst_91 = arith.constant dense<0.000000e+00> : vector<16xf32>
    %262 = vector.multi_reduction <add>, %261, %cst_91 [1] : vector<16x128xf32> to vector<16xf32>
    %263 = vector.shape_cast %262 : vector<16xf32> to vector<16x1xf32>
    %cst_92 = arith.constant 1.280000e+02 : f32
    %264 = vector.broadcast %cst_92 : f32 to vector<16x1xf32>
    %265 = arith.divf %263, %264 : vector<16x1xf32>
    %266 = vector.broadcast %265 : vector<16x1xf32> to vector<16x128xf32>
    %267 = arith.subf %261, %266 : vector<16x128xf32>
    %268 = arith.mulf %267, %267 : vector<16x128xf32>
    %cst_93 = arith.constant dense<0.000000e+00> : vector<16xf32>
    %269 = vector.multi_reduction <add>, %268, %cst_93 [1] : vector<16x128xf32> to vector<16xf32>
    %270 = vector.shape_cast %269 : vector<16xf32> to vector<16x1xf32>
    %cst_94 = arith.constant 1.280000e+02 : f32
    %271 = vector.broadcast %cst_94 : f32 to vector<16x1xf32>
    %272 = arith.divf %270, %271 : vector<16x1xf32>
    %273 = vector.broadcast %265 : vector<16x1xf32> to vector<16x128xf32>
    %274 = arith.subf %261, %273 : vector<16x128xf32>
    %cst_95 = arith.constant 9.99999974E-6 : f32
    %275 = vector.broadcast %cst_95 : f32 to vector<16x1xf32>
    %276 = arith.addf %272, %275 : vector<16x1xf32>
    %277 = math.rsqrt %276 : vector<16x1xf32>
    %278 = vector.broadcast %277 : vector<16x1xf32> to vector<16x128xf32>
    %279 = arith.mulf %274, %278 : vector<16x128xf32>
    %280 = vector.broadcast %47 : vector<1x128xf32> to vector<16x128xf32>
    %281 = arith.mulf %279, %280 : vector<16x128xf32>
    %282 = vector.broadcast %48 : vector<1x128xf32> to vector<16x128xf32>
    %283 = arith.addf %281, %282 : vector<16x128xf32>
    %c1_96 = arith.constant 1 : index
    %c0_97 = arith.constant 0 : index
    %c0_98 = arith.constant 0 : index
    %284 = vector.load %arg7[%c1_96, %c0_97, %c0_98] : memref<2x16x256xf32, #tpu.memory_space<vmem>>, vector<1x16x256xf32>
    %285 = vector.shape_cast %284 : vector<1x16x256xf32> to vector<16x256xf32>
    %286 = vector.extract_strided_slice %285 {offsets = [0, 0], sizes = [1, 128], strides = [1, 1]} : vector<16x256xf32> to vector<1x128xf32>
    %287 = vector.extract_strided_slice %285 {offsets = [1, 0], sizes = [1, 128], strides = [1, 1]} : vector<16x256xf32> to vector<1x128xf32>
    %288 = vector.extract_strided_slice %285 {offsets = [2, 0], sizes = [1, 128], strides = [1, 1]} : vector<16x256xf32> to vector<1x128xf32>
    %289 = vector.extract_strided_slice %285 {offsets = [3, 0], sizes = [1, 256], strides = [1, 1]} : vector<16x256xf32> to vector<1x256xf32>
    %290 = vector.extract_strided_slice %285 {offsets = [4, 0], sizes = [1, 128], strides = [1, 1]} : vector<16x256xf32> to vector<1x128xf32>
    %291 = vector.extract_strided_slice %285 {offsets = [5, 0], sizes = [1, 128], strides = [1, 1]} : vector<16x256xf32> to vector<1x128xf32>
    %292 = vector.extract_strided_slice %285 {offsets = [6, 0], sizes = [1, 128], strides = [1, 1]} : vector<16x256xf32> to vector<1x128xf32>
    %293 = arith.truncf %283 : vector<16x128xf32> to vector<16x128xbf16>
    %c6 = arith.constant 6 : index
    %c0_99 = arith.constant 0 : index
    %c0_100 = arith.constant 0 : index
    %294 = vector.load %arg3[%c6, %c0_99, %c0_100] : memref<12x128x64xbf16, #tpu.memory_space<vmem>>, vector<1x128x64xbf16>
    %295 = vector.shape_cast %294 : vector<1x128x64xbf16> to vector<128x64xbf16>
    %cst_101 = arith.constant dense<0.000000e+00> : vector<16x64xf32>
    %296 = tpu.matmul %293, %295, %cst_101 {dimension_numbers = #tpu.dot_dimension_numbers<[1], [0], [0], [1], [0, 0, 1, 1], [], []>} : vector<16x128xbf16>, vector<128x64xbf16>, vector<16x64xf32> -> vector<16x64xf32>
    %297 = vector.extract_strided_slice %285 {offsets = [7, 0], sizes = [1, 64], strides = [1, 1]} : vector<16x256xf32> to vector<1x64xf32>
    %298 = vector.broadcast %297 : vector<1x64xf32> to vector<16x64xf32>
    %299 = arith.addf %296, %298 : vector<16x64xf32>
    %c8 = arith.constant 8 : index
    %c0_102 = arith.constant 0 : index
    %c0_103 = arith.constant 0 : index
    %300 = vector.load %arg3[%c8, %c0_102, %c0_103] : memref<12x128x64xbf16, #tpu.memory_space<vmem>>, vector<1x128x64xbf16>
    %301 = vector.shape_cast %300 : vector<1x128x64xbf16> to vector<128x64xbf16>
    %cst_104 = arith.constant dense<0.000000e+00> : vector<16x64xf32>
    %302 = tpu.matmul %293, %301, %cst_104 {dimension_numbers = #tpu.dot_dimension_numbers<[1], [0], [0], [1], [0, 0, 1, 1], [], []>} : vector<16x128xbf16>, vector<128x64xbf16>, vector<16x64xf32> -> vector<16x64xf32>
    %303 = vector.extract_strided_slice %285 {offsets = [9, 0], sizes = [1, 64], strides = [1, 1]} : vector<16x256xf32> to vector<1x64xf32>
    %304 = vector.broadcast %303 : vector<1x64xf32> to vector<16x64xf32>
    %305 = arith.addf %302, %304 : vector<16x64xf32>
    %c10 = arith.constant 10 : index
    %c0_105 = arith.constant 0 : index
    %c0_106 = arith.constant 0 : index
    %306 = vector.load %arg3[%c10, %c0_105, %c0_106] : memref<12x128x64xbf16, #tpu.memory_space<vmem>>, vector<1x128x64xbf16>
    %307 = vector.shape_cast %306 : vector<1x128x64xbf16> to vector<128x64xbf16>
    %cst_107 = arith.constant dense<0.000000e+00> : vector<16x64xf32>
    %308 = tpu.matmul %293, %307, %cst_107 {dimension_numbers = #tpu.dot_dimension_numbers<[1], [0], [0], [1], [0, 0, 1, 1], [], []>} : vector<16x128xbf16>, vector<128x64xbf16>, vector<16x64xf32> -> vector<16x64xf32>
    %309 = vector.extract_strided_slice %285 {offsets = [11, 0], sizes = [1, 64], strides = [1, 1]} : vector<16x256xf32> to vector<1x64xf32>
    %310 = vector.broadcast %309 : vector<1x64xf32> to vector<16x64xf32>
    %311 = arith.addf %308, %310 : vector<16x64xf32>
    %c7 = arith.constant 7 : index
    %c0_108 = arith.constant 0 : index
    %c0_109 = arith.constant 0 : index
    %312 = vector.load %arg3[%c7, %c0_108, %c0_109] : memref<12x128x64xbf16, #tpu.memory_space<vmem>>, vector<1x128x64xbf16>
    %313 = vector.shape_cast %312 : vector<1x128x64xbf16> to vector<128x64xbf16>
    %cst_110 = arith.constant dense<0.000000e+00> : vector<16x64xf32>
    %314 = tpu.matmul %293, %313, %cst_110 {dimension_numbers = #tpu.dot_dimension_numbers<[1], [0], [0], [1], [0, 0, 1, 1], [], []>} : vector<16x128xbf16>, vector<128x64xbf16>, vector<16x64xf32> -> vector<16x64xf32>
    %315 = vector.extract_strided_slice %285 {offsets = [8, 0], sizes = [1, 64], strides = [1, 1]} : vector<16x256xf32> to vector<1x64xf32>
    %316 = vector.broadcast %315 : vector<1x64xf32> to vector<16x64xf32>
    %317 = arith.addf %314, %316 : vector<16x64xf32>
    %c9 = arith.constant 9 : index
    %c0_111 = arith.constant 0 : index
    %c0_112 = arith.constant 0 : index
    %318 = vector.load %arg3[%c9, %c0_111, %c0_112] : memref<12x128x64xbf16, #tpu.memory_space<vmem>>, vector<1x128x64xbf16>
    %319 = vector.shape_cast %318 : vector<1x128x64xbf16> to vector<128x64xbf16>
    %cst_113 = arith.constant dense<0.000000e+00> : vector<16x64xf32>
    %320 = tpu.matmul %293, %319, %cst_113 {dimension_numbers = #tpu.dot_dimension_numbers<[1], [0], [0], [1], [0, 0, 1, 1], [], []>} : vector<16x128xbf16>, vector<128x64xbf16>, vector<16x64xf32> -> vector<16x64xf32>
    %321 = vector.extract_strided_slice %285 {offsets = [10, 0], sizes = [1, 64], strides = [1, 1]} : vector<16x256xf32> to vector<1x64xf32>
    %322 = vector.broadcast %321 : vector<1x64xf32> to vector<16x64xf32>
    %323 = arith.addf %320, %322 : vector<16x64xf32>
    %c11 = arith.constant 11 : index
    %c0_114 = arith.constant 0 : index
    %c0_115 = arith.constant 0 : index
    %324 = vector.load %arg3[%c11, %c0_114, %c0_115] : memref<12x128x64xbf16, #tpu.memory_space<vmem>>, vector<1x128x64xbf16>
    %325 = vector.shape_cast %324 : vector<1x128x64xbf16> to vector<128x64xbf16>
    %cst_116 = arith.constant dense<0.000000e+00> : vector<16x64xf32>
    %326 = tpu.matmul %293, %325, %cst_116 {dimension_numbers = #tpu.dot_dimension_numbers<[1], [0], [0], [1], [0, 0, 1, 1], [], []>} : vector<16x128xbf16>, vector<128x64xbf16>, vector<16x64xf32> -> vector<16x64xf32>
    %327 = vector.extract_strided_slice %285 {offsets = [12, 0], sizes = [1, 64], strides = [1, 1]} : vector<16x256xf32> to vector<1x64xf32>
    %328 = vector.broadcast %327 : vector<1x64xf32> to vector<16x64xf32>
    %329 = arith.addf %326, %328 : vector<16x64xf32>
    %330 = vector.extract_strided_slice %39 {offsets = [0, 0], sizes = [1, 8], strides = [1, 1]} : vector<2x8xf32> to vector<1x8xf32>
    %cst_117 = arith.constant 1.000000e+00 : f32
    %331 = vector.broadcast %cst_117 : f32 to vector<1x8xf32>
    %332 = arith.subf %330, %331 : vector<1x8xf32>
    %cst_118 = arith.constant 1.000000e+09 : f32
    %333 = vector.broadcast %cst_118 : f32 to vector<1x8xf32>
    %334 = arith.mulf %332, %333 : vector<1x8xf32>
    %cst_119 = arith.constant 0.000000e+00 : f32
    %335 = vector.broadcast %cst_119 : f32 to vector<8x128xf32>
    %336 = vector.extract_strided_slice %299 {offsets = [0, 0], sizes = [8, 64], strides = [1, 1]} : vector<16x64xf32> to vector<8x64xf32>
    %337 = arith.truncf %336 : vector<8x64xf32> to vector<8x64xbf16>
    %338 = vector.extract_strided_slice %305 {offsets = [0, 0], sizes = [8, 64], strides = [1, 1]} : vector<16x64xf32> to vector<8x64xf32>
    %339 = arith.truncf %338 : vector<8x64xf32> to vector<8x64xbf16>
    %340 = vector.extract_strided_slice %311 {offsets = [0, 0], sizes = [8, 64], strides = [1, 1]} : vector<16x64xf32> to vector<8x64xf32>
    %341 = arith.truncf %340 : vector<8x64xf32> to vector<8x64xbf16>
    %cst_120 = arith.constant dense<0.000000e+00> : vector<8x8xf32>
    %342 = tpu.matmul %337, %339, %cst_120 {dimension_numbers = #tpu.dot_dimension_numbers<[1], [1], [0], [0], [0, 0, 1, 0], [], []>} : vector<8x64xbf16>, vector<8x64xbf16>, vector<8x8xf32> -> vector<8x8xf32>
    %cst_121 = arith.constant 1.250000e-01 : f32
    %343 = vector.broadcast %cst_121 : f32 to vector<8x8xf32>
    %344 = arith.mulf %342, %343 : vector<8x8xf32>
    %345 = vector.broadcast %334 : vector<1x8xf32> to vector<8x8xf32>
    %346 = arith.addf %344, %345 : vector<8x8xf32>
    %cst_122 = arith.constant dense<0xFF800000> : vector<8xf32>
    %347 = vector.multi_reduction <maximumf>, %346, %cst_122 [1] : vector<8x8xf32> to vector<8xf32>
    %348 = vector.shape_cast %347 : vector<8xf32> to vector<8x1xf32>
    %349 = vector.broadcast %348 : vector<8x1xf32> to vector<8x8xf32>
    %350 = arith.subf %346, %349 : vector<8x8xf32>
    %351 = math.exp %350 : vector<8x8xf32>
    %cst_123 = arith.constant dense<0.000000e+00> : vector<8xf32>
    %352 = vector.multi_reduction <add>, %351, %cst_123 [1] : vector<8x8xf32> to vector<8xf32>
    %353 = vector.shape_cast %352 : vector<8xf32> to vector<8x1xf32>
    %354 = tpu.reciprocal %353 {approx = true} : vector<8x1xf32> -> vector<8x1xf32>
    %355 = vector.broadcast %354 : vector<8x1xf32> to vector<8x8xf32>
    %356 = arith.mulf %351, %355 : vector<8x8xf32>
    %357 = arith.truncf %356 : vector<8x8xf32> to vector<8x8xbf16>
    %cst_124 = arith.constant dense<0.000000e+00> : vector<8x64xf32>
    %358 = tpu.matmul %357, %341, %cst_124 {dimension_numbers = #tpu.dot_dimension_numbers<[1], [0], [0], [1], [0, 0, 1, 1], [], []>} : vector<8x8xbf16>, vector<8x64xbf16>, vector<8x64xf32> -> vector<8x64xf32>
    %359 = arith.truncf %358 : vector<8x64xf32> to vector<8x64xbf16>
    %c2_125 = arith.constant 2 : index
    %c0_126 = arith.constant 0 : index
    %c0_127 = arith.constant 0 : index
    %360 = vector.load %arg4[%c2_125, %c0_126, %c0_127] : memref<4x64x128xbf16, #tpu.memory_space<vmem>>, vector<1x64x128xbf16>
    %361 = vector.shape_cast %360 : vector<1x64x128xbf16> to vector<64x128xbf16>
    %cst_128 = arith.constant dense<0.000000e+00> : vector<8x128xf32>
    %362 = tpu.matmul %359, %361, %cst_128 {dimension_numbers = #tpu.dot_dimension_numbers<[1], [0], [0], [1], [0, 0, 1, 1], [], []>} : vector<8x64xbf16>, vector<64x128xbf16>, vector<8x128xf32> -> vector<8x128xf32>
    %363 = arith.addf %335, %362 : vector<8x128xf32>
    %364 = vector.extract_strided_slice %317 {offsets = [0, 0], sizes = [8, 64], strides = [1, 1]} : vector<16x64xf32> to vector<8x64xf32>
    %365 = arith.truncf %364 : vector<8x64xf32> to vector<8x64xbf16>
    %366 = vector.extract_strided_slice %323 {offsets = [0, 0], sizes = [8, 64], strides = [1, 1]} : vector<16x64xf32> to vector<8x64xf32>
    %367 = arith.truncf %366 : vector<8x64xf32> to vector<8x64xbf16>
    %368 = vector.extract_strided_slice %329 {offsets = [0, 0], sizes = [8, 64], strides = [1, 1]} : vector<16x64xf32> to vector<8x64xf32>
    %369 = arith.truncf %368 : vector<8x64xf32> to vector<8x64xbf16>
    %cst_129 = arith.constant dense<0.000000e+00> : vector<8x8xf32>
    %370 = tpu.matmul %365, %367, %cst_129 {dimension_numbers = #tpu.dot_dimension_numbers<[1], [1], [0], [0], [0, 0, 1, 0], [], []>} : vector<8x64xbf16>, vector<8x64xbf16>, vector<8x8xf32> -> vector<8x8xf32>
    %cst_130 = arith.constant 1.250000e-01 : f32
    %371 = vector.broadcast %cst_130 : f32 to vector<8x8xf32>
    %372 = arith.mulf %370, %371 : vector<8x8xf32>
    %373 = vector.broadcast %334 : vector<1x8xf32> to vector<8x8xf32>
    %374 = arith.addf %372, %373 : vector<8x8xf32>
    %cst_131 = arith.constant dense<0xFF800000> : vector<8xf32>
    %375 = vector.multi_reduction <maximumf>, %374, %cst_131 [1] : vector<8x8xf32> to vector<8xf32>
    %376 = vector.shape_cast %375 : vector<8xf32> to vector<8x1xf32>
    %377 = vector.broadcast %376 : vector<8x1xf32> to vector<8x8xf32>
    %378 = arith.subf %374, %377 : vector<8x8xf32>
    %379 = math.exp %378 : vector<8x8xf32>
    %cst_132 = arith.constant dense<0.000000e+00> : vector<8xf32>
    %380 = vector.multi_reduction <add>, %379, %cst_132 [1] : vector<8x8xf32> to vector<8xf32>
    %381 = vector.shape_cast %380 : vector<8xf32> to vector<8x1xf32>
    %382 = tpu.reciprocal %381 {approx = true} : vector<8x1xf32> -> vector<8x1xf32>
    %383 = vector.broadcast %382 : vector<8x1xf32> to vector<8x8xf32>
    %384 = arith.mulf %379, %383 : vector<8x8xf32>
    %385 = arith.truncf %384 : vector<8x8xf32> to vector<8x8xbf16>
    %cst_133 = arith.constant dense<0.000000e+00> : vector<8x64xf32>
    %386 = tpu.matmul %385, %369, %cst_133 {dimension_numbers = #tpu.dot_dimension_numbers<[1], [0], [0], [1], [0, 0, 1, 1], [], []>} : vector<8x8xbf16>, vector<8x64xbf16>, vector<8x64xf32> -> vector<8x64xf32>
    %387 = arith.truncf %386 : vector<8x64xf32> to vector<8x64xbf16>
    %c3_134 = arith.constant 3 : index
    %c0_135 = arith.constant 0 : index
    %c0_136 = arith.constant 0 : index
    %388 = vector.load %arg4[%c3_134, %c0_135, %c0_136] : memref<4x64x128xbf16, #tpu.memory_space<vmem>>, vector<1x64x128xbf16>
    %389 = vector.shape_cast %388 : vector<1x64x128xbf16> to vector<64x128xbf16>
    %cst_137 = arith.constant dense<0.000000e+00> : vector<8x128xf32>
    %390 = tpu.matmul %387, %389, %cst_137 {dimension_numbers = #tpu.dot_dimension_numbers<[1], [0], [0], [1], [0, 0, 1, 1], [], []>} : vector<8x64xbf16>, vector<64x128xbf16>, vector<8x128xf32> -> vector<8x128xf32>
    %391 = arith.addf %363, %390 : vector<8x128xf32>
    %392 = vector.extract_strided_slice %39 {offsets = [1, 0], sizes = [1, 8], strides = [1, 1]} : vector<2x8xf32> to vector<1x8xf32>
    %cst_138 = arith.constant 1.000000e+00 : f32
    %393 = vector.broadcast %cst_138 : f32 to vector<1x8xf32>
    %394 = arith.subf %392, %393 : vector<1x8xf32>
    %cst_139 = arith.constant 1.000000e+09 : f32
    %395 = vector.broadcast %cst_139 : f32 to vector<1x8xf32>
    %396 = arith.mulf %394, %395 : vector<1x8xf32>
    %cst_140 = arith.constant 0.000000e+00 : f32
    %397 = vector.broadcast %cst_140 : f32 to vector<8x128xf32>
    %398 = vector.extract_strided_slice %299 {offsets = [8, 0], sizes = [8, 64], strides = [1, 1]} : vector<16x64xf32> to vector<8x64xf32>
    %399 = arith.truncf %398 : vector<8x64xf32> to vector<8x64xbf16>
    %400 = vector.extract_strided_slice %305 {offsets = [8, 0], sizes = [8, 64], strides = [1, 1]} : vector<16x64xf32> to vector<8x64xf32>
    %401 = arith.truncf %400 : vector<8x64xf32> to vector<8x64xbf16>
    %402 = vector.extract_strided_slice %311 {offsets = [8, 0], sizes = [8, 64], strides = [1, 1]} : vector<16x64xf32> to vector<8x64xf32>
    %403 = arith.truncf %402 : vector<8x64xf32> to vector<8x64xbf16>
    %cst_141 = arith.constant dense<0.000000e+00> : vector<8x8xf32>
    %404 = tpu.matmul %399, %401, %cst_141 {dimension_numbers = #tpu.dot_dimension_numbers<[1], [1], [0], [0], [0, 0, 1, 0], [], []>} : vector<8x64xbf16>, vector<8x64xbf16>, vector<8x8xf32> -> vector<8x8xf32>
    %cst_142 = arith.constant 1.250000e-01 : f32
    %405 = vector.broadcast %cst_142 : f32 to vector<8x8xf32>
    %406 = arith.mulf %404, %405 : vector<8x8xf32>
    %407 = vector.broadcast %396 : vector<1x8xf32> to vector<8x8xf32>
    %408 = arith.addf %406, %407 : vector<8x8xf32>
    %cst_143 = arith.constant dense<0xFF800000> : vector<8xf32>
    %409 = vector.multi_reduction <maximumf>, %408, %cst_143 [1] : vector<8x8xf32> to vector<8xf32>
    %410 = vector.shape_cast %409 : vector<8xf32> to vector<8x1xf32>
    %411 = vector.broadcast %410 : vector<8x1xf32> to vector<8x8xf32>
    %412 = arith.subf %408, %411 : vector<8x8xf32>
    %413 = math.exp %412 : vector<8x8xf32>
    %cst_144 = arith.constant dense<0.000000e+00> : vector<8xf32>
    %414 = vector.multi_reduction <add>, %413, %cst_144 [1] : vector<8x8xf32> to vector<8xf32>
    %415 = vector.shape_cast %414 : vector<8xf32> to vector<8x1xf32>
    %416 = tpu.reciprocal %415 {approx = true} : vector<8x1xf32> -> vector<8x1xf32>
    %417 = vector.broadcast %416 : vector<8x1xf32> to vector<8x8xf32>
    %418 = arith.mulf %413, %417 : vector<8x8xf32>
    %419 = arith.truncf %418 : vector<8x8xf32> to vector<8x8xbf16>
    %cst_145 = arith.constant dense<0.000000e+00> : vector<8x64xf32>
    %420 = tpu.matmul %419, %403, %cst_145 {dimension_numbers = #tpu.dot_dimension_numbers<[1], [0], [0], [1], [0, 0, 1, 1], [], []>} : vector<8x8xbf16>, vector<8x64xbf16>, vector<8x64xf32> -> vector<8x64xf32>
    %421 = arith.truncf %420 : vector<8x64xf32> to vector<8x64xbf16>
    %c2_146 = arith.constant 2 : index
    %c0_147 = arith.constant 0 : index
    %c0_148 = arith.constant 0 : index
    %422 = vector.load %arg4[%c2_146, %c0_147, %c0_148] : memref<4x64x128xbf16, #tpu.memory_space<vmem>>, vector<1x64x128xbf16>
    %423 = vector.shape_cast %422 : vector<1x64x128xbf16> to vector<64x128xbf16>
    %cst_149 = arith.constant dense<0.000000e+00> : vector<8x128xf32>
    %424 = tpu.matmul %421, %423, %cst_149 {dimension_numbers = #tpu.dot_dimension_numbers<[1], [0], [0], [1], [0, 0, 1, 1], [], []>} : vector<8x64xbf16>, vector<64x128xbf16>, vector<8x128xf32> -> vector<8x128xf32>
    %425 = arith.addf %397, %424 : vector<8x128xf32>
    %426 = vector.extract_strided_slice %317 {offsets = [8, 0], sizes = [8, 64], strides = [1, 1]} : vector<16x64xf32> to vector<8x64xf32>
    %427 = arith.truncf %426 : vector<8x64xf32> to vector<8x64xbf16>
    %428 = vector.extract_strided_slice %323 {offsets = [8, 0], sizes = [8, 64], strides = [1, 1]} : vector<16x64xf32> to vector<8x64xf32>
    %429 = arith.truncf %428 : vector<8x64xf32> to vector<8x64xbf16>
    %430 = vector.extract_strided_slice %329 {offsets = [8, 0], sizes = [8, 64], strides = [1, 1]} : vector<16x64xf32> to vector<8x64xf32>
    %431 = arith.truncf %430 : vector<8x64xf32> to vector<8x64xbf16>
    %cst_150 = arith.constant dense<0.000000e+00> : vector<8x8xf32>
    %432 = tpu.matmul %427, %429, %cst_150 {dimension_numbers = #tpu.dot_dimension_numbers<[1], [1], [0], [0], [0, 0, 1, 0], [], []>} : vector<8x64xbf16>, vector<8x64xbf16>, vector<8x8xf32> -> vector<8x8xf32>
    %cst_151 = arith.constant 1.250000e-01 : f32
    %433 = vector.broadcast %cst_151 : f32 to vector<8x8xf32>
    %434 = arith.mulf %432, %433 : vector<8x8xf32>
    %435 = vector.broadcast %396 : vector<1x8xf32> to vector<8x8xf32>
    %436 = arith.addf %434, %435 : vector<8x8xf32>
    %cst_152 = arith.constant dense<0xFF800000> : vector<8xf32>
    %437 = vector.multi_reduction <maximumf>, %436, %cst_152 [1] : vector<8x8xf32> to vector<8xf32>
    %438 = vector.shape_cast %437 : vector<8xf32> to vector<8x1xf32>
    %439 = vector.broadcast %438 : vector<8x1xf32> to vector<8x8xf32>
    %440 = arith.subf %436, %439 : vector<8x8xf32>
    %441 = math.exp %440 : vector<8x8xf32>
    %cst_153 = arith.constant dense<0.000000e+00> : vector<8xf32>
    %442 = vector.multi_reduction <add>, %441, %cst_153 [1] : vector<8x8xf32> to vector<8xf32>
    %443 = vector.shape_cast %442 : vector<8xf32> to vector<8x1xf32>
    %444 = tpu.reciprocal %443 {approx = true} : vector<8x1xf32> -> vector<8x1xf32>
    %445 = vector.broadcast %444 : vector<8x1xf32> to vector<8x8xf32>
    %446 = arith.mulf %441, %445 : vector<8x8xf32>
    %447 = arith.truncf %446 : vector<8x8xf32> to vector<8x8xbf16>
    %cst_154 = arith.constant dense<0.000000e+00> : vector<8x64xf32>
    %448 = tpu.matmul %447, %431, %cst_154 {dimension_numbers = #tpu.dot_dimension_numbers<[1], [0], [0], [1], [0, 0, 1, 1], [], []>} : vector<8x8xbf16>, vector<8x64xbf16>, vector<8x64xf32> -> vector<8x64xf32>
    %449 = arith.truncf %448 : vector<8x64xf32> to vector<8x64xbf16>
    %c3_155 = arith.constant 3 : index
    %c0_156 = arith.constant 0 : index
    %c0_157 = arith.constant 0 : index
    %450 = vector.load %arg4[%c3_155, %c0_156, %c0_157] : memref<4x64x128xbf16, #tpu.memory_space<vmem>>, vector<1x64x128xbf16>
    %451 = vector.shape_cast %450 : vector<1x64x128xbf16> to vector<64x128xbf16>
    %cst_158 = arith.constant dense<0.000000e+00> : vector<8x128xf32>
    %452 = tpu.matmul %449, %451, %cst_158 {dimension_numbers = #tpu.dot_dimension_numbers<[1], [0], [0], [1], [0, 0, 1, 1], [], []>} : vector<8x64xbf16>, vector<64x128xbf16>, vector<8x128xf32> -> vector<8x128xf32>
    %453 = arith.addf %425, %452 : vector<8x128xf32>
    %454 = tpu.concatenate %391, %453 in 0 : vector<8x128xf32>, vector<8x128xf32> -> vector<16x128xf32>
    %455 = vector.broadcast %286 : vector<1x128xf32> to vector<16x128xf32>
    %456 = arith.addf %454, %455 : vector<16x128xf32>
    %457 = arith.addf %283, %456 : vector<16x128xf32>
    %cst_159 = arith.constant dense<0.000000e+00> : vector<16xf32>
    %458 = vector.multi_reduction <add>, %457, %cst_159 [1] : vector<16x128xf32> to vector<16xf32>
    %459 = vector.shape_cast %458 : vector<16xf32> to vector<16x1xf32>
    %cst_160 = arith.constant 1.280000e+02 : f32
    %460 = vector.broadcast %cst_160 : f32 to vector<16x1xf32>
    %461 = arith.divf %459, %460 : vector<16x1xf32>
    %462 = vector.broadcast %461 : vector<16x1xf32> to vector<16x128xf32>
    %463 = arith.subf %457, %462 : vector<16x128xf32>
    %464 = arith.mulf %463, %463 : vector<16x128xf32>
    %cst_161 = arith.constant dense<0.000000e+00> : vector<16xf32>
    %465 = vector.multi_reduction <add>, %464, %cst_161 [1] : vector<16x128xf32> to vector<16xf32>
    %466 = vector.shape_cast %465 : vector<16xf32> to vector<16x1xf32>
    %cst_162 = arith.constant 1.280000e+02 : f32
    %467 = vector.broadcast %cst_162 : f32 to vector<16x1xf32>
    %468 = arith.divf %466, %467 : vector<16x1xf32>
    %469 = vector.broadcast %461 : vector<16x1xf32> to vector<16x128xf32>
    %470 = arith.subf %457, %469 : vector<16x128xf32>
    %cst_163 = arith.constant 9.99999974E-6 : f32
    %471 = vector.broadcast %cst_163 : f32 to vector<16x1xf32>
    %472 = arith.addf %468, %471 : vector<16x1xf32>
    %473 = math.rsqrt %472 : vector<16x1xf32>
    %474 = vector.broadcast %473 : vector<16x1xf32> to vector<16x128xf32>
    %475 = arith.mulf %470, %474 : vector<16x128xf32>
    %476 = vector.broadcast %287 : vector<1x128xf32> to vector<16x128xf32>
    %477 = arith.mulf %475, %476 : vector<16x128xf32>
    %478 = vector.broadcast %288 : vector<1x128xf32> to vector<16x128xf32>
    %479 = arith.addf %477, %478 : vector<16x128xf32>
    %480 = arith.truncf %479 : vector<16x128xf32> to vector<16x128xbf16>
    %c1_164 = arith.constant 1 : index
    %c0_165 = arith.constant 0 : index
    %c0_166 = arith.constant 0 : index
    %481 = vector.load %arg5[%c1_164, %c0_165, %c0_166] : memref<2x128x256xbf16, #tpu.memory_space<vmem>>, vector<1x128x256xbf16>
    %482 = vector.shape_cast %481 : vector<1x128x256xbf16> to vector<128x256xbf16>
    %cst_167 = arith.constant dense<0.000000e+00> : vector<16x256xf32>
    %483 = tpu.matmul %480, %482, %cst_167 {dimension_numbers = #tpu.dot_dimension_numbers<[1], [0], [0], [1], [0, 0, 1, 1], [], []>} : vector<16x128xbf16>, vector<128x256xbf16>, vector<16x256xf32> -> vector<16x256xf32>
    %484 = vector.broadcast %289 : vector<1x256xf32> to vector<16x256xf32>
    %485 = arith.addf %483, %484 : vector<16x256xf32>
    %486 = arith.mulf %485, %485 : vector<16x256xf32>
    %487 = arith.mulf %485, %486 : vector<16x256xf32>
    %cst_168 = arith.constant 4.471500e-02 : f32
    %488 = vector.broadcast %cst_168 : f32 to vector<16x256xf32>
    %489 = arith.mulf %488, %487 : vector<16x256xf32>
    %490 = arith.addf %485, %489 : vector<16x256xf32>
    %cst_169 = arith.constant 0.797884583 : f32
    %491 = vector.broadcast %cst_169 : f32 to vector<16x256xf32>
    %492 = arith.mulf %491, %490 : vector<16x256xf32>
    %493 = math.tanh %492 : vector<16x256xf32>
    %cst_170 = arith.constant 1.000000e+00 : f32
    %494 = vector.broadcast %cst_170 : f32 to vector<16x256xf32>
    %495 = arith.addf %494, %493 : vector<16x256xf32>
    %cst_171 = arith.constant 5.000000e-01 : f32
    %496 = vector.broadcast %cst_171 : f32 to vector<16x256xf32>
    %497 = arith.mulf %496, %495 : vector<16x256xf32>
    %498 = arith.mulf %485, %497 : vector<16x256xf32>
    %499 = arith.truncf %498 : vector<16x256xf32> to vector<16x256xbf16>
    %c1_172 = arith.constant 1 : index
    %c0_173 = arith.constant 0 : index
    %c0_174 = arith.constant 0 : index
    %500 = vector.load %arg6[%c1_172, %c0_173, %c0_174] : memref<2x256x128xbf16, #tpu.memory_space<vmem>>, vector<1x256x128xbf16>
    %501 = vector.shape_cast %500 : vector<1x256x128xbf16> to vector<256x128xbf16>
    %cst_175 = arith.constant dense<0.000000e+00> : vector<16x128xf32>
    %502 = tpu.matmul %499, %501, %cst_175 {dimension_numbers = #tpu.dot_dimension_numbers<[1], [0], [0], [1], [0, 0, 1, 1], [], []>} : vector<16x256xbf16>, vector<256x128xbf16>, vector<16x128xf32> -> vector<16x128xf32>
    %503 = vector.broadcast %290 : vector<1x128xf32> to vector<16x128xf32>
    %504 = arith.addf %502, %503 : vector<16x128xf32>
    %505 = arith.addf %479, %504 : vector<16x128xf32>
    %cst_176 = arith.constant dense<0.000000e+00> : vector<16xf32>
    %506 = vector.multi_reduction <add>, %505, %cst_176 [1] : vector<16x128xf32> to vector<16xf32>
    %507 = vector.shape_cast %506 : vector<16xf32> to vector<16x1xf32>
    %cst_177 = arith.constant 1.280000e+02 : f32
    %508 = vector.broadcast %cst_177 : f32 to vector<16x1xf32>
    %509 = arith.divf %507, %508 : vector<16x1xf32>
    %510 = vector.broadcast %509 : vector<16x1xf32> to vector<16x128xf32>
    %511 = arith.subf %505, %510 : vector<16x128xf32>
    %512 = arith.mulf %511, %511 : vector<16x128xf32>
    %cst_178 = arith.constant dense<0.000000e+00> : vector<16xf32>
    %513 = vector.multi_reduction <add>, %512, %cst_178 [1] : vector<16x128xf32> to vector<16xf32>
    %514 = vector.shape_cast %513 : vector<16xf32> to vector<16x1xf32>
    %cst_179 = arith.constant 1.280000e+02 : f32
    %515 = vector.broadcast %cst_179 : f32 to vector<16x1xf32>
    %516 = arith.divf %514, %515 : vector<16x1xf32>
    %517 = vector.broadcast %509 : vector<16x1xf32> to vector<16x128xf32>
    %518 = arith.subf %505, %517 : vector<16x128xf32>
    %cst_180 = arith.constant 9.99999974E-6 : f32
    %519 = vector.broadcast %cst_180 : f32 to vector<16x1xf32>
    %520 = arith.addf %516, %519 : vector<16x1xf32>
    %521 = math.rsqrt %520 : vector<16x1xf32>
    %522 = vector.broadcast %521 : vector<16x1xf32> to vector<16x128xf32>
    %523 = arith.mulf %518, %522 : vector<16x128xf32>
    %524 = vector.broadcast %291 : vector<1x128xf32> to vector<16x128xf32>
    %525 = arith.mulf %523, %524 : vector<16x128xf32>
    %526 = vector.broadcast %292 : vector<1x128xf32> to vector<16x128xf32>
    %527 = arith.addf %525, %526 : vector<16x128xf32>
    %528 = tpu.iota {dimensions = array<i32: 1>} : vector<2x16xi32>
    %529 = tpu.iota {dimensions = array<i32: 0>} : vector<2x16xi32>
    %c8_i32 = arith.constant 8 : i32
    %530 = vector.broadcast %c8_i32 : i32 to vector<2x16xi32>
    %531 = arith.muli %529, %530 : vector<2x16xi32>
    %532 = arith.cmpi eq, %528, %531 : vector<2x16xi32>
    %533 = arith.extui %532 : vector<2x16xi1> to vector<2x16xi32>
    %534 = arith.sitofp %533 : vector<2x16xi32> to vector<2x16xf32>
    %cst_181 = arith.constant dense<0.000000e+00> : vector<2x128xf32>
    %535 = tpu.matmul %534, %527, %cst_181 {dimension_numbers = #tpu.dot_dimension_numbers<[1], [0], [0], [1], [0, 0, 1, 1], [], []>} : vector<2x16xf32>, vector<16x128xf32>, vector<2x128xf32> -> vector<2x128xf32>
    %c0_182 = arith.constant 0 : index
    %c0_183 = arith.constant 0 : index
    %536 = vector.load %arg8[%c0_182, %c0_183] : memref<136x2xf32, #tpu.memory_space<vmem>>, vector<136x2xf32>
    %537 = vector.extract_strided_slice %536 {offsets = [0, 0], sizes = [128, 2], strides = [1, 1]} : vector<136x2xf32> to vector<128x2xf32>
    %538 = vector.extract_strided_slice %536 {offsets = [128, 0], sizes = [2, 2], strides = [1, 1]} : vector<136x2xf32> to vector<2x2xf32>
    %539 = vector.extract_strided_slice %536 {offsets = [130, 0], sizes = [1, 2], strides = [1, 1]} : vector<136x2xf32> to vector<1x2xf32>
    %540 = vector.extract_strided_slice %536 {offsets = [131, 0], sizes = [1, 2], strides = [1, 1]} : vector<136x2xf32> to vector<1x2xf32>
    %541 = tpu.iota {dimensions = array<i32: 0>} : vector<2x2xi32>
    %542 = tpu.iota {dimensions = array<i32: 1>} : vector<2x2xi32>
    %cst_184 = arith.constant 0.000000e+00 : f32
    %543 = vector.broadcast %cst_184 : f32 to vector<2x2xf32>
    %c0_i32 = arith.constant 0 : i32
    %544 = vector.broadcast %c0_i32 : i32 to vector<2x2xi32>
    %c0_i32_185 = arith.constant 0 : i32
    %545 = vector.broadcast %c0_i32_185 : i32 to vector<2x2xi32>
    %546 = arith.cmpi eq, %541, %545 : vector<2x2xi32>
    %c0_186 = arith.constant 0 : index
    %c0_187 = arith.constant 0 : index
    %547 = memref.load %arg9[%c0_186, %c0_187] : memref<2x3xi32, #tpu.memory_space<smem>>
    %548 = vector.broadcast %547 : i32 to vector<2x2xi32>
    %549 = arith.select %546, %548, %544 : vector<2x2xi1>, vector<2x2xi32>
    %c0_i32_188 = arith.constant 0 : i32
    %550 = vector.broadcast %c0_i32_188 : i32 to vector<2x2xi32>
    %551 = arith.cmpi eq, %541, %550 : vector<2x2xi32>
    %c0_i32_189 = arith.constant 0 : i32
    %552 = vector.broadcast %c0_i32_189 : i32 to vector<2x2xi32>
    %553 = arith.cmpi eq, %542, %552 : vector<2x2xi32>
    %554 = arith.andi %551, %553 : vector<2x2xi1>
    %c0_190 = arith.constant 0 : index
    %c1_191 = arith.constant 1 : index
    %555 = memref.load %arg9[%c0_190, %c1_191] : memref<2x3xi32, #tpu.memory_space<smem>>
    %556 = arith.sitofp %555 : i32 to f32
    %557 = vector.broadcast %556 : f32 to vector<2x2xf32>
    %558 = arith.select %554, %557, %543 : vector<2x2xi1>, vector<2x2xf32>
    %c0_i32_192 = arith.constant 0 : i32
    %559 = vector.broadcast %c0_i32_192 : i32 to vector<2x2xi32>
    %560 = arith.cmpi eq, %541, %559 : vector<2x2xi32>
    %c1_i32 = arith.constant 1 : i32
    %561 = vector.broadcast %c1_i32 : i32 to vector<2x2xi32>
    %562 = arith.cmpi eq, %542, %561 : vector<2x2xi32>
    %563 = arith.andi %560, %562 : vector<2x2xi1>
    %c0_193 = arith.constant 0 : index
    %c2_194 = arith.constant 2 : index
    %564 = memref.load %arg9[%c0_193, %c2_194] : memref<2x3xi32, #tpu.memory_space<smem>>
    %565 = arith.sitofp %564 : i32 to f32
    %566 = vector.broadcast %565 : f32 to vector<2x2xf32>
    %567 = arith.select %563, %566, %558 : vector<2x2xi1>, vector<2x2xf32>
    %c1_i32_195 = arith.constant 1 : i32
    %568 = vector.broadcast %c1_i32_195 : i32 to vector<2x2xi32>
    %569 = arith.cmpi eq, %541, %568 : vector<2x2xi32>
    %c1_196 = arith.constant 1 : index
    %c0_197 = arith.constant 0 : index
    %570 = memref.load %arg9[%c1_196, %c0_197] : memref<2x3xi32, #tpu.memory_space<smem>>
    %571 = vector.broadcast %570 : i32 to vector<2x2xi32>
    %572 = arith.select %569, %571, %549 : vector<2x2xi1>, vector<2x2xi32>
    %c1_i32_198 = arith.constant 1 : i32
    %573 = vector.broadcast %c1_i32_198 : i32 to vector<2x2xi32>
    %574 = arith.cmpi eq, %541, %573 : vector<2x2xi32>
    %c0_i32_199 = arith.constant 0 : i32
    %575 = vector.broadcast %c0_i32_199 : i32 to vector<2x2xi32>
    %576 = arith.cmpi eq, %542, %575 : vector<2x2xi32>
    %577 = arith.andi %574, %576 : vector<2x2xi1>
    %c1_200 = arith.constant 1 : index
    %c1_201 = arith.constant 1 : index
    %578 = memref.load %arg9[%c1_200, %c1_201] : memref<2x3xi32, #tpu.memory_space<smem>>
    %579 = arith.sitofp %578 : i32 to f32
    %580 = vector.broadcast %579 : f32 to vector<2x2xf32>
    %581 = arith.select %577, %580, %567 : vector<2x2xi1>, vector<2x2xf32>
    %c1_i32_202 = arith.constant 1 : i32
    %582 = vector.broadcast %c1_i32_202 : i32 to vector<2x2xi32>
    %583 = arith.cmpi eq, %541, %582 : vector<2x2xi32>
    %c1_i32_203 = arith.constant 1 : i32
    %584 = vector.broadcast %c1_i32_203 : i32 to vector<2x2xi32>
    %585 = arith.cmpi eq, %542, %584 : vector<2x2xi32>
    %586 = arith.andi %583, %585 : vector<2x2xi1>
    %c1_204 = arith.constant 1 : index
    %c2_205 = arith.constant 2 : index
    %587 = memref.load %arg9[%c1_204, %c2_205] : memref<2x3xi32, #tpu.memory_space<smem>>
    %588 = arith.sitofp %587 : i32 to f32
    %589 = vector.broadcast %588 : f32 to vector<2x2xf32>
    %590 = arith.select %586, %589, %581 : vector<2x2xi1>, vector<2x2xf32>
    %cst_206 = arith.constant dense<0.000000e+00> : vector<2x2xf32>
    %591 = tpu.matmul %535, %537, %cst_206 {dimension_numbers = #tpu.dot_dimension_numbers<[1], [0], [0], [1], [0, 0, 1, 1], [], []>} : vector<2x128xf32>, vector<128x2xf32>, vector<2x2xf32> -> vector<2x2xf32>
    %cst_207 = arith.constant dense<0.000000e+00> : vector<2x2xf32>
    %592 = tpu.matmul %590, %538, %cst_207 {dimension_numbers = #tpu.dot_dimension_numbers<[1], [0], [0], [1], [0, 0, 1, 1], [], []>} : vector<2x2xf32>, vector<2x2xf32>, vector<2x2xf32> -> vector<2x2xf32>
    %593 = arith.addf %591, %592 : vector<2x2xf32>
    %594 = vector.broadcast %539 : vector<1x2xf32> to vector<2x2xf32>
    %595 = arith.addf %593, %594 : vector<2x2xf32>
    %596 = arith.cmpi eq, %542, %572 : vector<2x2xi32>
    %597 = arith.extui %596 : vector<2x2xi1> to vector<2x2xi32>
    %598 = arith.sitofp %597 : vector<2x2xi32> to vector<2x2xf32>
    %cst_208 = arith.constant dense<0xFF800000> : vector<2xf32>
    %599 = vector.multi_reduction <maximumf>, %595, %cst_208 [1] : vector<2x2xf32> to vector<2xf32>
    %600 = vector.shape_cast %599 : vector<2xf32> to vector<2x1xf32>
    %601 = vector.broadcast %600 : vector<2x1xf32> to vector<2x2xf32>
    %602 = arith.subf %595, %601 : vector<2x2xf32>
    %603 = math.exp %602 : vector<2x2xf32>
    %cst_209 = arith.constant dense<0.000000e+00> : vector<2xf32>
    %604 = vector.multi_reduction <add>, %603, %cst_209 [1] : vector<2x2xf32> to vector<2xf32>
    %605 = vector.shape_cast %604 : vector<2xf32> to vector<2x1xf32>
    %606 = math.log %605 : vector<2x1xf32>
    %607 = arith.addf %600, %606 : vector<2x1xf32>
    %608 = arith.mulf %598, %595 : vector<2x2xf32>
    %cst_210 = arith.constant dense<0.000000e+00> : vector<2xf32>
    %609 = vector.multi_reduction <add>, %608, %cst_210 [1] : vector<2x2xf32> to vector<2xf32>
    %610 = vector.shape_cast %609 : vector<2xf32> to vector<2x1xf32>
    %611 = arith.subf %607, %610 : vector<2x1xf32>
    %612 = vector.broadcast %540 : vector<1x2xf32> to vector<2x2xf32>
    %613 = arith.mulf %598, %612 : vector<2x2xf32>
    %cst_211 = arith.constant dense<0.000000e+00> : vector<2xf32>
    %614 = vector.multi_reduction <add>, %613, %cst_211 [1] : vector<2x2xf32> to vector<2xf32>
    %615 = vector.shape_cast %614 : vector<2xf32> to vector<2x1xf32>
    %616 = arith.mulf %615, %611 : vector<2x1xf32>
    %cst_212 = arith.constant dense<0.000000e+00> : vector<1xf32>
    %617 = vector.multi_reduction <add>, %616, %cst_212 [0] : vector<2x1xf32> to vector<1xf32>
    %618 = vector.shape_cast %617 : vector<1xf32> to vector<1x1xf32>
    %cst_213 = arith.constant dense<0.000000e+00> : vector<1xf32>
    %619 = vector.multi_reduction <add>, %615, %cst_213 [0] : vector<2x1xf32> to vector<1xf32>
    %620 = vector.shape_cast %619 : vector<1xf32> to vector<1x1xf32>
    %621 = arith.divf %618, %620 : vector<1x1xf32>
    %cst_214 = arith.constant 0.000000e+00 : f32
    %622 = vector.broadcast %cst_214 : f32 to vector<8x128xf32>
    %c0_215 = arith.constant 0 : index
    %c0_216 = arith.constant 0 : index
    %623 = vector.load %arg10[%c0_215, %c0_216] : memref<8x128xf32, #tpu.memory_space<vmem>>, vector<8x128xf32>
    tpu.vector_store %arg10[%c0_215, %c0_216], %622 {strides = array<i32>} : memref<8x128xf32, #tpu.memory_space<vmem>>, vector<8x128xf32>,
    %c0_217 = arith.constant 0 : index
    %c0_218 = arith.constant 0 : index
    %624 = vector.load %arg10[%c0_217, %c0_218] : memref<8x128xf32, #tpu.memory_space<vmem>>, vector<2x2xf32>
    tpu.vector_store %arg10[%c0_217, %c0_218], %595 {strides = array<i32>} : memref<8x128xf32, #tpu.memory_space<vmem>>, vector<2x2xf32>,
    %c2_219 = arith.constant 2 : index
    %c0_220 = arith.constant 0 : index
    %625 = vector.load %arg10[%c2_219, %c0_220] : memref<8x128xf32, #tpu.memory_space<vmem>>, vector<1x1xf32>
    tpu.vector_store %arg10[%c2_219, %c0_220], %621 {strides = array<i32>} : memref<8x128xf32, #tpu.memory_space<vmem>>, vector<1x1xf32>,
    return
  }
}

</mosaic_0001>

<llo_original>
// kernel: _forward_jit.1
$region0: #{_forward_jit.1}
  #allocation0 [shape = 'u32[]', space=smem, size = 0x4, offset = 0x4, fixed_abs, tag = 'smem constant byte address 0x4 - core index']
  #allocation1 [shape = 'u32[144,128]{1,0:T(1,128)}', space=vmem, size = 0x12000, scoped, tag = 'internal scratch']
  %s0 = inlined_call_operand.vmem [shape: s32[16,1], index: 0, kind: input, shape index: {}]
  %s1 = inlined_call_operand.vmem [shape: s32[2,8], index: 1, kind: input, shape index: {}]
  %s2 = inlined_call_operand.vmem [shape: f32[80,128], index: 2, kind: input, shape index: {}]
  %s3 = inlined_call_operand.vmem [shape: bf16[12,128,64], index: 3, kind: input, shape index: {}]
  %s4 = inlined_call_operand.vmem [shape: bf16[4,64,128], index: 4, kind: input, shape index: {}]
  %s5 = inlined_call_operand.vmem [shape: bf16[2,128,256], index: 5, kind: input, shape index: {}]
  %s6 = inlined_call_operand.vmem [shape: bf16[2,256,128], index: 6, kind: input, shape index: {}]
  %s7 = inlined_call_operand.vmem [shape: f32[2,16,256], index: 7, kind: input, shape index: {}]
  %s8 = inlined_call_operand.vmem [shape: f32[136,2], index: 8, kind: input, shape index: {}]
  %s9 = inlined_call_operand.vmem [shape: s32[2,3], index: 9, kind: input, shape index: {}]
  %s10 = inlined_call_operand.vmem [shape: f32[8,128], index: 10, kind: output, shape index: {}]
  %s11 = sld [smem:[#allocation0]]
  $region54: #{_forward_jit.1} parent=0
    _
  %s13 = ssub.s32 1, %s11
  %s14 = scalar_select 0, %s13, %s11
  $region1: #{_forward_jit.1} parent=0
    #allocation2 [shape = 'u8[1024]{0}', space=smem, size = 0x400, scoped, tag = 'input window, operand 9, single buffered']
    #allocation3 [shape = 's32[1]{0}', space=sflag, size = 0x4, scoped, tag = 'scoped memory for _forward_jit.1']
    %15 = vsyncpa [#allocation3], 0
    // Predicated region
    $region2: #{_forward_jit.1} parent=1 // pred_check
      _
    $region3: #{_forward_jit.1} parent=1 // pred_check_branch
      %17 = sbr.rel (0) target = $region5
    $region4: #{_forward_jit.1} parent=1 // pred_region
      _
    $region5: #{_forward_jit.1} parent=1 // pred_fallthru
      _
    // Predicated region
    $region6: #{_forward_jit.1} parent=1 // pred_check
      _
    $region7: #{_forward_jit.1} parent=1 // pred_check_branch
      %19 = sbr.rel (0) target = $region9
    $region8: #{_forward_jit.1} parent=1 // pred_region
      _
    $region9: #{_forward_jit.1} parent=1 // pred_fallthru
      _
    // Predicated region
    $region10: #{_forward_jit.1} parent=1 // pred_check
      _
    $region11: #{_forward_jit.1} parent=1 // pred_check_branch
      %21 = sbr.rel (0) target = $region13
    $region12: #{_forward_jit.1} parent=1 // pred_region
      _
    $region13: #{_forward_jit.1} parent=1 // pred_fallthru
      _
    // Predicated region
    $region14: #{_forward_jit.1} parent=1 // pred_check
      _
    $region15: #{_forward_jit.1} parent=1 // pred_check_branch
      %23 = sbr.rel (0) target = $region17
    $region16: #{_forward_jit.1} parent=1 // pred_region
      _
    $region17: #{_forward_jit.1} parent=1 // pred_fallthru
      _
    // Predicated region
    $region18: #{_forward_jit.1} parent=1 // pred_check
      _
    $region19: #{_forward_jit.1} parent=1 // pred_check_branch
      %25 = sbr.rel (0) target = $region21
    $region20: #{_forward_jit.1} parent=1 // pred_region
      _
    $region21: #{_forward_jit.1} parent=1 // pred_fallthru
      _
    // Predicated region
    $region22: #{_forward_jit.1} parent=1 // pred_check
      _
    $region23: #{_forward_jit.1} parent=1 // pred_check_branch
      %27 = sbr.rel (0) target = $region25
    $region24: #{_forward_jit.1} parent=1 // pred_region
      _
    $region25: #{_forward_jit.1} parent=1 // pred_fallthru
      _
    // Predicated region
    $region26: #{_forward_jit.1} parent=1 // pred_check
      _
    $region27: #{_forward_jit.1} parent=1 // pred_check_branch
      %29 = sbr.rel (0) target = $region29
    $region28: #{_forward_jit.1} parent=1 // pred_region
      _
    $region29: #{_forward_jit.1} parent=1 // pred_fallthru
      _
    // Predicated region
    $region30: #{_forward_jit.1} parent=1 // pred_check
      _
    $region31: #{_forward_jit.1} parent=1 // pred_check_branch
      %31 = sbr.rel (0) target = $region33
    $region32: #{_forward_jit.1} parent=1 // pred_region
      _
    $region33: #{_forward_jit.1} parent=1 // pred_fallthru
      _
    // Predicated region
    $region34: #{_forward_jit.1} parent=1 // pred_check
      _
    $region35: #{_forward_jit.1} parent=1 // pred_check_branch
      %33 = sbr.rel (0) target = $region37
    $region36: #{_forward_jit.1} parent=1 // pred_region
      _
    $region37: #{_forward_jit.1} parent=1 // pred_fallthru
      _
    // Predicated region
    $region38: #{_forward_jit.1} parent=1 // pred_check
      _
    $region39: #{_forward_jit.1} parent=1 // pred_check_branch
      %35 = sbr.rel (0) target = $region41
    $region40: #{_forward_jit.1} parent=1 // pred_region
      %s37 = ssub.s32 32, 32
      %38 = vsyncadd [#allocation3], %s37
      %s40 = sshll.u32 %s9, 4
      %s41 = int_to_ptr.vmem [resolvable:$true] %s40
      %43 = dma.vmem_to_smem %s41, 32, [#allocation2], [#allocation3]
    $region41: #{_forward_jit.1} parent=1 // pred_fallthru
      _
    // Predicated region
    $region42: #{_forward_jit.1} parent=1 // pred_check
      _
    $region43: #{_forward_jit.1} parent=1 // pred_check_branch
      %45 = sbr.rel (0) target = $region45
    $region44: #{_forward_jit.1} parent=1 // pred_region
      %46 = dma.done [#allocation3], 32
    $region45: #{_forward_jit.1} parent=1 // pred_fallthru
      _
    %47 = sfence
    %v49 = vld [vmem:[%s0] sm:$0xff]
    %v50 = vld [vmem:[%s0 + $0x8] sm:$0xff]
    %v51 = vlaneseq
    %v52 = vand.u32 %v51, 127
    %53 = vset.pattern.permute.xlu0 0
    %54 = vperm.xlu0 %53, %v49
    %v55 = vpop.permute.xlu0 %54
    %56 = vset.pattern.permute.xlu0 0
    %57 = vperm.xlu0 %56, %v50
    %v58 = vpop.permute.xlu0 %57
    %vm59 = vcmp.eq.s32.totalorder %v52, %v55
    %vm60 = vcmp.eq.s32.totalorder %v52, %v58
    %v61 = vsel %vm59, 1, 0
    %v62 = vsel %vm60, 1, 0
    %v63 = vcvt.s32.f32 %v61
    %v64 = vcvt.s32.f32 %v62
    %v65 = vpack.c.bf16 %v64, %v63
    %v66 = vld [vmem:[%s2] sm:$0xff]
    %v67 = vld [vmem:[%s2 + $0x8] sm:$0xff]
    %v68 = vld [vmem:[%s2 + $0x10] sm:$0xff]
    %v69 = vld [vmem:[%s2 + $0x18] sm:$0xff]
    %v70 = vld [vmem:[%s2 + $0x20] sm:$0xff]
    %v71 = vld [vmem:[%s2 + $0x28] sm:$0xff]
    %v72 = vld [vmem:[%s2 + $0x30] sm:$0xff]
    %v73 = vld [vmem:[%s2 + $0x38] sm:$0xff]
    %v74 = vld [vmem:[%s2 + $0x40] sm:$0xff]
    %v75 = vld [vmem:[%s2 + $0x48] sm:$0xff]
    %v76 = vpack.c.bf16 %v67, %v66
    %v77 = vpack.c.bf16 %v69, %v68
    %v78 = vpack.c.bf16 %v71, %v70
    %v79 = vpack.c.bf16 %v73, %v72
    %vm80 = vcmask 523264
    %v82 = vsel %vm80, %v65, 0
    %84 = vmatprep.subr.bf16.mxu0 0
    %85 = vmatpush1.bf16.msra.mxu0 0
    %86 = vmatprep.subr.bf16.mxu0 0
    %87 = vmatpush1.bf16.msra.mxu0 0
    %88 = vmatprep.subr.bf16.mxu0 0
    %89 = vmatpush1.bf16.msra.mxu0 0
    %90 = vmatprep.subr.bf16.mxu0 0
    %91 = vmatpush1.bf16.msra.mxu0 0
    %92 = vmatprep.subr.bf16.mxu0 0
    %93 = vmatpush1.bf16.msra.mxu0 %v79
    %94 = vmatprep.subr.bf16.mxu0 0
    %95 = vmatpush1.bf16.msra.mxu0 %v78
    %96 = vmatprep.subr.bf16.mxu0 0
    %97 = vmatpush1.bf16.msra.mxu0 %v77
    %98 = vmatprep.subr.bf16.mxu0 0
    %99 = vmatpush1.bf16.msra.mxu0 %v76
    %100 = vmatprep.subr.bf16.mxu0 0
    %101 = vmatpush2.bf16.msra.mxu0 0
    %102 = vmatprep.subr.bf16.mxu0 0
    %103 = vmatpush2.bf16.msra.mxu0 0
    %104 = vmatprep.subr.bf16.mxu0 0
    %105 = vmatpush2.bf16.msra.mxu0 0
    %106 = vmatprep.subr.bf16.mxu0 0
    %107 = vmatpush2.bf16.msra.mxu0 0
    %108 = vmatprep.subr.bf16.mxu0 0
    %109 = vmatpush2.bf16.msra.mxu0 0
    %110 = vmatprep.subr.bf16.mxu0 0
    %111 = vmatpush2.bf16.msra.mxu0 0
    %112 = vmatprep.subr.bf16.mxu0 0
    %113 = vmatpush2.bf16.msra.mxu0 0
    %114 = vmatprep.subr.bf16.mxu0 0
    %115 = vmatpush2.bf16.msra.mxu0 0
    %116 = vmatprep.mubr.bf16.mxu0 0
    %117 = vmatmul.mubr.bf16.gmra.mxu0 %v82
    %v118 = vpop.f32.mrf.mxu0
    %v119 = vadd.f32 %v74, %v118
    %v120 = vpop.f32.mrf.mxu0
    %v121 = vpop.f32.mrf.mxu0
    %v122 = vadd.f32 %v74, %v121
    %v123 = vpop.f32.mrf.mxu0
    %124 = vdwg.mxu0
    %125 = vadd.xlane.f32.xlu0 %v119
    %v126 = vpop.xlane.xlu0 %125
    %127 = vadd.xlane.f32.xlu0 %v122
    %v128 = vpop.xlane.xlu0 %127
    %v129 = vrcp.pop 128.0
    %v130 = vmul.f32 %v126, %v129
    %v131 = vmul.f32 %v128, %v129
    %v132 = vsub.f32 %v119, %v130
    %v133 = vsub.f32 %v122, %v131
    %v134 = vmul.f32 %v132, %v132
    %v135 = vmul.f32 %v133, %v133
    %136 = vadd.xlane.f32.xlu0 %v134
    %v137 = vpop.xlane.xlu0 %136
    %138 = vadd.xlane.f32.xlu0 %v135
    %v139 = vpop.xlane.xlu0 %138
    %v140 = vmul.f32 %v137, %v129
    %v141 = vmul.f32 %v139, %v129
    %v142 = vadd.f32 %v140, 1e-05
    %v143 = vadd.f32 %v141, 1e-05
    %v144 = vrsqrt.pop %v142
    %v145 = vrsqrt.pop %v143
    %v146 = vmul.f32 %v132, %v144
    %v147 = vmul.f32 %v133, %v145
    %v148 = vlaneseq
    %v149 = vshrl.u32 %v148, 7
    %v150 = vsub.s32 0, %v149
    %v151 = vrot.slane %v75, %v150
    %v152 = vmul.f32 %v146, %v151
    %v153 = vmul.f32 %v147, %v151
    %v154 = vlaneseq
    %v155 = vshrl.u32 %v154, 7
    %v156 = vsub.s32 1, %v155
    %v157 = vrot.slane %v75, %v156
    %v158 = vadd.f32 %v152, %v157
    %v159 = vadd.f32 %v153, %v157
    %v160 = vld [vmem:[%s1] sm:$0x3]
    %v161 = vcvt.s32.f32 %v160
    %v162 = vld [vmem:[%s7] sm:$0xff]
    %v163 = vld [vmem:[%s7 + $0x8] sm:$0xff]
    %v164 = vld [vmem:[%s7 + $0x10] sm:$0xff]
    %v165 = vpack.c.bf16 %v159, %v158
    %v166 = vld [vmem:[%s3] sm:$0xf]
    %v167 = vld [vmem:[%s3 + $0x4] sm:$0xf]
    %v168 = vld [vmem:[%s3 + $0x8] sm:$0xf]
    %v169 = vld [vmem:[%s3 + $0xc] sm:$0xf]
    %v170 = vld [vmem:[%s3 + $0x10] sm:$0xf]
    %v171 = vld [vmem:[%s3 + $0x14] sm:$0xf]
    %v172 = vld [vmem:[%s3 + $0x18] sm:$0xf]
    %v173 = vld [vmem:[%s3 + $0x1c] sm:$0xf]
    %v174 = vld [vmem:[%s3 + $0x20] sm:$0xf]
    %v175 = vld [vmem:[%s3 + $0x24] sm:$0xf]
    %v176 = vld [vmem:[%s3 + $0x28] sm:$0xf]
    %v177 = vld [vmem:[%s3 + $0x2c] sm:$0xf]
    %v178 = vld [vmem:[%s3 + $0x30] sm:$0xf]
    %v179 = vld [vmem:[%s3 + $0x34] sm:$0xf]
    %v180 = vld [vmem:[%s3 + $0x38] sm:$0xf]
    %v181 = vld [vmem:[%s3 + $0x3c] sm:$0xf]
    %v182 = vlaneseq
    %v183 = vshrl.u32 %v182, 7
    %v184 = vsub.s32 7, %v183
    %v185 = vrot.slane %v162, %v184
    %v202 = vunpack.c.l.b16 %v166
    %v203 = vunpack.c.l.b16 %v167
    %v204 = vunpack.c.l.b16 %v168
    %v205 = vunpack.c.l.b16 %v169
    %v206 = vunpack.c.l.b16 %v170
    %v207 = vunpack.c.l.b16 %v171
    %v208 = vunpack.c.l.b16 %v172
    %v209 = vunpack.c.l.b16 %v173
    %v210 = vunpack.c.l.b16 %v174
    %v211 = vunpack.c.l.b16 %v175
    %v212 = vunpack.c.l.b16 %v176
    %v213 = vunpack.c.l.b16 %v177
    %v214 = vunpack.c.l.b16 %v178
    %v215 = vunpack.c.l.b16 %v179
    %v216 = vunpack.c.l.b16 %v180
    %v217 = vunpack.c.l.b16 %v181
    %v218 = vpack.c.b16 %v203, %v202
    %v219 = vpack.c.b16 %v205, %v204
    %v220 = vpack.c.b16 %v207, %v206
    %v221 = vpack.c.b16 %v209, %v208
    %v222 = vpack.c.b16 %v211, %v210
    %v223 = vpack.c.b16 %v213, %v212
    %v224 = vpack.c.b16 %v215, %v214
    %v225 = vpack.c.b16 %v217, %v216
    %234 = vmatprep.subr.bf16.mxu0 0
    %235 = vmatpush1.bf16.msra.mxu0 %v225
    %236 = vmatprep.subr.bf16.mxu0 0
    %237 = vmatpush1.bf16.msra.mxu0 %v224
    %238 = vmatprep.subr.bf16.mxu0 0
    %239 = vmatpush1.bf16.msra.mxu0 %v223
    %240 = vmatprep.subr.bf16.mxu0 0
    %241 = vmatpush1.bf16.msra.mxu0 %v222
    %242 = vmatprep.subr.bf16.mxu0 0
    %243 = vmatpush1.bf16.msra.mxu0 %v221
    %244 = vmatprep.subr.bf16.mxu0 0
    %245 = vmatpush1.bf16.msra.mxu0 %v220
    %246 = vmatprep.subr.bf16.mxu0 0
    %247 = vmatpush1.bf16.msra.mxu0 %v219
    %248 = vmatprep.subr.bf16.mxu0 0
    %249 = vmatpush1.bf16.msra.mxu0 %v218
    %250 = vmatprep.subr.bf16.mxu0 0
    %251 = vmatpush2.bf16.msra.mxu0 0
    %252 = vmatprep.subr.bf16.mxu0 0
    %253 = vmatpush2.bf16.msra.mxu0 0
    %254 = vmatprep.subr.bf16.mxu0 0
    %255 = vmatpush2.bf16.msra.mxu0 0
    %256 = vmatprep.subr.bf16.mxu0 0
    %257 = vmatpush2.bf16.msra.mxu0 0
    %258 = vmatprep.subr.bf16.mxu0 0
    %259 = vmatpush2.bf16.msra.mxu0 0
    %260 = vmatprep.subr.bf16.mxu0 0
    %261 = vmatpush2.bf16.msra.mxu0 0
    %262 = vmatprep.subr.bf16.mxu0 0
    %263 = vmatpush2.bf16.msra.mxu0 0
    %264 = vmatprep.subr.bf16.mxu0 0
    %265 = vmatpush2.bf16.msra.mxu0 0
    %266 = vmatprep.mubr.bf16.mxu0 0
    %267 = vmatmul.mubr.bf16.gmra.mxu0 %v165
    %v268 = vpop.f32.mrf.mxu0
    %v269 = vadd.f32 %v185, %v268
    %v270 = vpop.f32.mrf.mxu0
    %v271 = vpop.f32.mrf.mxu0
    %v272 = vadd.f32 %v185, %v271
    %v273 = vpop.f32.mrf.mxu0
    %274 = vdwg.mxu0
    %s275 = scalar_lea.vmem %s3, 128
    %v276 = vld [vmem:[%s275] sm:$0xf]
    %v277 = vld [vmem:[%s275 + $0x4] sm:$0xf]
    %v278 = vld [vmem:[%s275 + $0x8] sm:$0xf]
    %v279 = vld [vmem:[%s275 + $0xc] sm:$0xf]
    %v280 = vld [vmem:[%s275 + $0x10] sm:$0xf]
    %v281 = vld [vmem:[%s275 + $0x14] sm:$0xf]
    %v282 = vld [vmem:[%s275 + $0x18] sm:$0xf]
    %v283 = vld [vmem:[%s275 + $0x1c] sm:$0xf]
    %v284 = vld [vmem:[%s275 + $0x20] sm:$0xf]
    %v285 = vld [vmem:[%s275 + $0x24] sm:$0xf]
    %v286 = vld [vmem:[%s275 + $0x28] sm:$0xf]
    %v287 = vld [vmem:[%s275 + $0x2c] sm:$0xf]
    %v288 = vld [vmem:[%s275 + $0x30] sm:$0xf]
    %v289 = vld [vmem:[%s275 + $0x34] sm:$0xf]
    %v290 = vld [vmem:[%s275 + $0x38] sm:$0xf]
    %v291 = vld [vmem:[%s275 + $0x3c] sm:$0xf]
    %v292 = vlaneseq
    %v293 = vshrl.u32 %v292, 7
    %v294 = vsub.s32 1, %v293
    %v295 = vrot.slane %v164, %v294
    %v312 = vunpack.c.l.b16 %v276
    %v313 = vunpack.c.l.b16 %v277
    %v314 = vunpack.c.l.b16 %v278
    %v315 = vunpack.c.l.b16 %v279
    %v316 = vunpack.c.l.b16 %v280
    %v317 = vunpack.c.l.b16 %v281
    %v318 = vunpack.c.l.b16 %v282
    %v319 = vunpack.c.l.b16 %v283
    %v320 = vunpack.c.l.b16 %v284
    %v321 = vunpack.c.l.b16 %v285
    %v322 = vunpack.c.l.b16 %v286
    %v323 = vunpack.c.l.b16 %v287
    %v324 = vunpack.c.l.b16 %v288
    %v325 = vunpack.c.l.b16 %v289
    %v326 = vunpack.c.l.b16 %v290
    %v327 = vunpack.c.l.b16 %v291
    %v328 = vpack.c.b16 %v313, %v312
    %v329 = vpack.c.b16 %v315, %v314
    %v330 = vpack.c.b16 %v317, %v316
    %v331 = vpack.c.b16 %v319, %v318
    %v332 = vpack.c.b16 %v321, %v320
    %v333 = vpack.c.b16 %v323, %v322
    %v334 = vpack.c.b16 %v325, %v324
    %v335 = vpack.c.b16 %v327, %v326
    %344 = vmatprep.subr.bf16.mxu0 0
    %345 = vmatpush1.bf16.msra.mxu0 %v335
    %346 = vmatprep.subr.bf16.mxu0 0
    %347 = vmatpush1.bf16.msra.mxu0 %v334
    %348 = vmatprep.subr.bf16.mxu0 0
    %349 = vmatpush1.bf16.msra.mxu0 %v333
    %350 = vmatprep.subr.bf16.mxu0 0
    %351 = vmatpush1.bf16.msra.mxu0 %v332
    %352 = vmatprep.subr.bf16.mxu0 0
    %353 = vmatpush1.bf16.msra.mxu0 %v331
    %354 = vmatprep.subr.bf16.mxu0 0
    %355 = vmatpush1.bf16.msra.mxu0 %v330
    %356 = vmatprep.subr.bf16.mxu0 0
    %357 = vmatpush1.bf16.msra.mxu0 %v329
    %358 = vmatprep.subr.bf16.mxu0 0
    %359 = vmatpush1.bf16.msra.mxu0 %v328
    %360 = vmatprep.subr.bf16.mxu0 0
    %361 = vmatpush2.bf16.msra.mxu0 0
    %362 = vmatprep.subr.bf16.mxu0 0
    %363 = vmatpush2.bf16.msra.mxu0 0
    %364 = vmatprep.subr.bf16.mxu0 0
    %365 = vmatpush2.bf16.msra.mxu0 0
    %366 = vmatprep.subr.bf16.mxu0 0
    %367 = vmatpush2.bf16.msra.mxu0 0
    %368 = vmatprep.subr.bf16.mxu0 0
    %369 = vmatpush2.bf16.msra.mxu0 0
    %370 = vmatprep.subr.bf16.mxu0 0
    %371 = vmatpush2.bf16.msra.mxu0 0
    %372 = vmatprep.subr.bf16.mxu0 0
    %373 = vmatpush2.bf16.msra.mxu0 0
    %374 = vmatprep.subr.bf16.mxu0 0
    %375 = vmatpush2.bf16.msra.mxu0 0
    %376 = vmatprep.mubr.bf16.mxu0 0
    %377 = vmatmul.mubr.bf16.gmra.mxu0 %v165
    %v378 = vpop.f32.mrf.mxu0
    %v379 = vadd.f32 %v295, %v378
    %v380 = vpop.f32.mrf.mxu0
    %v381 = vpop.f32.mrf.mxu0
    %v382 = vadd.f32 %v295, %v381
    %v383 = vpop.f32.mrf.mxu0
    %384 = vdwg.mxu0
    %s385 = scalar_lea.vmem %s3, 256
    %v386 = vld [vmem:[%s385] sm:$0xf]
    %v387 = vld [vmem:[%s385 + $0x4] sm:$0xf]
    %v388 = vld [vmem:[%s385 + $0x8] sm:$0xf]
    %v389 = vld [vmem:[%s385 + $0xc] sm:$0xf]
    %v390 = vld [vmem:[%s385 + $0x10] sm:$0xf]
    %v391 = vld [vmem:[%s385 + $0x14] sm:$0xf]
    %v392 = vld [vmem:[%s385 + $0x18] sm:$0xf]
    %v393 = vld [vmem:[%s385 + $0x1c] sm:$0xf]
    %v394 = vld [vmem:[%s385 + $0x20] sm:$0xf]
    %v395 = vld [vmem:[%s385 + $0x24] sm:$0xf]
    %v396 = vld [vmem:[%s385 + $0x28] sm:$0xf]
    %v397 = vld [vmem:[%s385 + $0x2c] sm:$0xf]
    %v398 = vld [vmem:[%s385 + $0x30] sm:$0xf]
    %v399 = vld [vmem:[%s385 + $0x34] sm:$0xf]
    %v400 = vld [vmem:[%s385 + $0x38] sm:$0xf]
    %v401 = vld [vmem:[%s385 + $0x3c] sm:$0xf]
    %v402 = vlaneseq
    %v403 = vshrl.u32 %v402, 7
    %v404 = vsub.s32 3, %v403
    %v405 = vrot.slane %v164, %v404
    %v422 = vunpack.c.l.b16 %v386
    %v423 = vunpack.c.l.b16 %v387
    %v424 = vunpack.c.l.b16 %v388
    %v425 = vunpack.c.l.b16 %v389
    %v426 = vunpack.c.l.b16 %v390
    %v427 = vunpack.c.l.b16 %v391
    %v428 = vunpack.c.l.b16 %v392
    %v429 = vunpack.c.l.b16 %v393
    %v430 = vunpack.c.l.b16 %v394
    %v431 = vunpack.c.l.b16 %v395
    %v432 = vunpack.c.l.b16 %v396
    %v433 = vunpack.c.l.b16 %v397
    %v434 = vunpack.c.l.b16 %v398
    %v435 = vunpack.c.l.b16 %v399
    %v436 = vunpack.c.l.b16 %v400
    %v437 = vunpack.c.l.b16 %v401
    %v438 = vpack.c.b16 %v423, %v422
    %v439 = vpack.c.b16 %v425, %v424
    %v440 = vpack.c.b16 %v427, %v426
    %v441 = vpack.c.b16 %v429, %v428
    %v442 = vpack.c.b16 %v431, %v430
    %v443 = vpack.c.b16 %v433, %v432
    %v444 = vpack.c.b16 %v435, %v434
    %v445 = vpack.c.b16 %v437, %v436
    %454 = vmatprep.subr.bf16.mxu0 0
    %455 = vmatpush1.bf16.msra.mxu0 %v445
    %456 = vmatprep.subr.bf16.mxu0 0
    %457 = vmatpush1.bf16.msra.mxu0 %v444
    %458 = vmatprep.subr.bf16.mxu0 0
    %459 = vmatpush1.bf16.msra.mxu0 %v443
    %460 = vmatprep.subr.bf16.mxu0 0
    %461 = vmatpush1.bf16.msra.mxu0 %v442
    %462 = vmatprep.subr.bf16.mxu0 0
    %463 = vmatpush1.bf16.msra.mxu0 %v441
    %464 = vmatprep.subr.bf16.mxu0 0
    %465 = vmatpush1.bf16.msra.mxu0 %v440
    %466 = vmatprep.subr.bf16.mxu0 0
    %467 = vmatpush1.bf16.msra.mxu0 %v439
    %468 = vmatprep.subr.bf16.mxu0 0
    %469 = vmatpush1.bf16.msra.mxu0 %v438
    %470 = vmatprep.subr.bf16.mxu0 0
    %471 = vmatpush2.bf16.msra.mxu0 0
    %472 = vmatprep.subr.bf16.mxu0 0
    %473 = vmatpush2.bf16.msra.mxu0 0
    %474 = vmatprep.subr.bf16.mxu0 0
    %475 = vmatpush2.bf16.msra.mxu0 0
    %476 = vmatprep.subr.bf16.mxu0 0
    %477 = vmatpush2.bf16.msra.mxu0 0
    %478 = vmatprep.subr.bf16.mxu0 0
    %479 = vmatpush2.bf16.msra.mxu0 0
    %480 = vmatprep.subr.bf16.mxu0 0
    %481 = vmatpush2.bf16.msra.mxu0 0
    %482 = vmatprep.subr.bf16.mxu0 0
    %483 = vmatpush2.bf16.msra.mxu0 0
    %484 = vmatprep.subr.bf16.mxu0 0
    %485 = vmatpush2.bf16.msra.mxu0 0
    %486 = vmatprep.mubr.bf16.mxu0 0
    %487 = vmatmul.mubr.bf16.gmra.mxu0 %v165
    %v488 = vpop.f32.mrf.mxu0
    %v489 = vadd.f32 %v405, %v488
    %v490 = vpop.f32.mrf.mxu0
    %v491 = vpop.f32.mrf.mxu0
    %v492 = vadd.f32 %v405, %v491
    %v493 = vpop.f32.mrf.mxu0
    %494 = vdwg.mxu0
    %s495 = scalar_lea.vmem %s3, 64
    %v496 = vld [vmem:[%s495] sm:$0xf]
    %v497 = vld [vmem:[%s495 + $0x4] sm:$0xf]
    %v498 = vld [vmem:[%s495 + $0x8] sm:$0xf]
    %v499 = vld [vmem:[%s495 + $0xc] sm:$0xf]
    %v500 = vld [vmem:[%s495 + $0x10] sm:$0xf]
    %v501 = vld [vmem:[%s495 + $0x14] sm:$0xf]
    %v502 = vld [vmem:[%s495 + $0x18] sm:$0xf]
    %v503 = vld [vmem:[%s495 + $0x1c] sm:$0xf]
    %v504 = vld [vmem:[%s495 + $0x20] sm:$0xf]
    %v505 = vld [vmem:[%s495 + $0x24] sm:$0xf]
    %v506 = vld [vmem:[%s495 + $0x28] sm:$0xf]
    %v507 = vld [vmem:[%s495 + $0x2c] sm:$0xf]
    %v508 = vld [vmem:[%s495 + $0x30] sm:$0xf]
    %v509 = vld [vmem:[%s495 + $0x34] sm:$0xf]
    %v510 = vld [vmem:[%s495 + $0x38] sm:$0xf]
    %v511 = vld [vmem:[%s495 + $0x3c] sm:$0xf]
    %v512 = vlaneseq
    %v513 = vshrl.u32 %v512, 7
    %v514 = vsub.s32 0, %v513
    %v515 = vrot.slane %v164, %v514
    %v532 = vunpack.c.l.b16 %v496
    %v533 = vunpack.c.l.b16 %v497
    %v534 = vunpack.c.l.b16 %v498
    %v535 = vunpack.c.l.b16 %v499
    %v536 = vunpack.c.l.b16 %v500
    %v537 = vunpack.c.l.b16 %v501
    %v538 = vunpack.c.l.b16 %v502
    %v539 = vunpack.c.l.b16 %v503
    %v540 = vunpack.c.l.b16 %v504
    %v541 = vunpack.c.l.b16 %v505
    %v542 = vunpack.c.l.b16 %v506
    %v543 = vunpack.c.l.b16 %v507
    %v544 = vunpack.c.l.b16 %v508
    %v545 = vunpack.c.l.b16 %v509
    %v546 = vunpack.c.l.b16 %v510
    %v547 = vunpack.c.l.b16 %v511
    %v548 = vpack.c.b16 %v533, %v532
    %v549 = vpack.c.b16 %v535, %v534
    %v550 = vpack.c.b16 %v537, %v536
    %v551 = vpack.c.b16 %v539, %v538
    %v552 = vpack.c.b16 %v541, %v540
    %v553 = vpack.c.b16 %v543, %v542
    %v554 = vpack.c.b16 %v545, %v544
    %v555 = vpack.c.b16 %v547, %v546
    %564 = vmatprep.subr.bf16.mxu0 0
    %565 = vmatpush1.bf16.msra.mxu0 %v555
    %566 = vmatprep.subr.bf16.mxu0 0
    %567 = vmatpush1.bf16.msra.mxu0 %v554
    %568 = vmatprep.subr.bf16.mxu0 0
    %569 = vmatpush1.bf16.msra.mxu0 %v553
    %570 = vmatprep.subr.bf16.mxu0 0
    %571 = vmatpush1.bf16.msra.mxu0 %v552
    %572 = vmatprep.subr.bf16.mxu0 0
    %573 = vmatpush1.bf16.msra.mxu0 %v551
    %574 = vmatprep.subr.bf16.mxu0 0
    %575 = vmatpush1.bf16.msra.mxu0 %v550
    %576 = vmatprep.subr.bf16.mxu0 0
    %577 = vmatpush1.bf16.msra.mxu0 %v549
    %578 = vmatprep.subr.bf16.mxu0 0
    %579 = vmatpush1.bf16.msra.mxu0 %v548
    %580 = vmatprep.subr.bf16.mxu0 0
    %581 = vmatpush2.bf16.msra.mxu0 0
    %582 = vmatprep.subr.bf16.mxu0 0
    %583 = vmatpush2.bf16.msra.mxu0 0
    %584 = vmatprep.subr.bf16.mxu0 0
    %585 = vmatpush2.bf16.msra.mxu0 0
    %586 = vmatprep.subr.bf16.mxu0 0
    %587 = vmatpush2.bf16.msra.mxu0 0
    %588 = vmatprep.subr.bf16.mxu0 0
    %589 = vmatpush2.bf16.msra.mxu0 0
    %590 = vmatprep.subr.bf16.mxu0 0
    %591 = vmatpush2.bf16.msra.mxu0 0
    %592 = vmatprep.subr.bf16.mxu0 0
    %593 = vmatpush2.bf16.msra.mxu0 0
    %594 = vmatprep.subr.bf16.mxu0 0
    %595 = vmatpush2.bf16.msra.mxu0 0
    %596 = vmatprep.mubr.bf16.mxu0 0
    %597 = vmatmul.mubr.bf16.gmra.mxu0 %v165
    %v598 = vpop.f32.mrf.mxu0
    %v599 = vadd.f32 %v515, %v598
    %v600 = vpop.f32.mrf.mxu0
    %v601 = vpop.f32.mrf.mxu0
    %v602 = vadd.f32 %v515, %v601
    %v603 = vpop.f32.mrf.mxu0
    %604 = vdwg.mxu0
    %s605 = scalar_lea.vmem %s3, 192
    %v606 = vld [vmem:[%s605] sm:$0xf]
    %v607 = vld [vmem:[%s605 + $0x4] sm:$0xf]
    %v608 = vld [vmem:[%s605 + $0x8] sm:$0xf]
    %v609 = vld [vmem:[%s605 + $0xc] sm:$0xf]
    %v610 = vld [vmem:[%s605 + $0x10] sm:$0xf]
    %v611 = vld [vmem:[%s605 + $0x14] sm:$0xf]
    %v612 = vld [vmem:[%s605 + $0x18] sm:$0xf]
    %v613 = vld [vmem:[%s605 + $0x1c] sm:$0xf]
    %v614 = vld [vmem:[%s605 + $0x20] sm:$0xf]
    %v615 = vld [vmem:[%s605 + $0x24] sm:$0xf]
    %v616 = vld [vmem:[%s605 + $0x28] sm:$0xf]
    %v617 = vld [vmem:[%s605 + $0x2c] sm:$0xf]
    %v618 = vld [vmem:[%s605 + $0x30] sm:$0xf]
    %v619 = vld [vmem:[%s605 + $0x34] sm:$0xf]
    %v620 = vld [vmem:[%s605 + $0x38] sm:$0xf]
    %v621 = vld [vmem:[%s605 + $0x3c] sm:$0xf]
    %v622 = vlaneseq
    %v623 = vshrl.u32 %v622, 7
    %v624 = vsub.s32 2, %v623
    %v625 = vrot.slane %v164, %v624
    %v642 = vunpack.c.l.b16 %v606
    %v643 = vunpack.c.l.b16 %v607
    %v644 = vunpack.c.l.b16 %v608
    %v645 = vunpack.c.l.b16 %v609
    %v646 = vunpack.c.l.b16 %v610
    %v647 = vunpack.c.l.b16 %v611
    %v648 = vunpack.c.l.b16 %v612
    %v649 = vunpack.c.l.b16 %v613
    %v650 = vunpack.c.l.b16 %v614
    %v651 = vunpack.c.l.b16 %v615
    %v652 = vunpack.c.l.b16 %v616
    %v653 = vunpack.c.l.b16 %v617
    %v654 = vunpack.c.l.b16 %v618
    %v655 = vunpack.c.l.b16 %v619
    %v656 = vunpack.c.l.b16 %v620
    %v657 = vunpack.c.l.b16 %v621
    %v658 = vpack.c.b16 %v643, %v642
    %v659 = vpack.c.b16 %v645, %v644
    %v660 = vpack.c.b16 %v647, %v646
    %v661 = vpack.c.b16 %v649, %v648
    %v662 = vpack.c.b16 %v651, %v650
    %v663 = vpack.c.b16 %v653, %v652
    %v664 = vpack.c.b16 %v655, %v654
    %v665 = vpack.c.b16 %v657, %v656
    %674 = vmatprep.subr.bf16.mxu0 0
    %675 = vmatpush1.bf16.msra.mxu0 %v665
    %676 = vmatprep.subr.bf16.mxu0 0
    %677 = vmatpush1.bf16.msra.mxu0 %v664
    %678 = vmatprep.subr.bf16.mxu0 0
    %679 = vmatpush1.bf16.msra.mxu0 %v663
    %680 = vmatprep.subr.bf16.mxu0 0
    %681 = vmatpush1.bf16.msra.mxu0 %v662
    %682 = vmatprep.subr.bf16.mxu0 0
    %683 = vmatpush1.bf16.msra.mxu0 %v661
    %684 = vmatprep.subr.bf16.mxu0 0
    %685 = vmatpush1.bf16.msra.mxu0 %v660
    %686 = vmatprep.subr.bf16.mxu0 0
    %687 = vmatpush1.bf16.msra.mxu0 %v659
    %688 = vmatprep.subr.bf16.mxu0 0
    %689 = vmatpush1.bf16.msra.mxu0 %v658
    %690 = vmatprep.subr.bf16.mxu0 0
    %691 = vmatpush2.bf16.msra.mxu0 0
    %692 = vmatprep.subr.bf16.mxu0 0
    %693 = vmatpush2.bf16.msra.mxu0 0
    %694 = vmatprep.subr.bf16.mxu0 0
    %695 = vmatpush2.bf16.msra.mxu0 0
    %696 = vmatprep.subr.bf16.mxu0 0
    %697 = vmatpush2.bf16.msra.mxu0 0
    %698 = vmatprep.subr.bf16.mxu0 0
    %699 = vmatpush2.bf16.msra.mxu0 0
    %700 = vmatprep.subr.bf16.mxu0 0
    %701 = vmatpush2.bf16.msra.mxu0 0
    %702 = vmatprep.subr.bf16.mxu0 0
    %703 = vmatpush2.bf16.msra.mxu0 0
    %704 = vmatprep.subr.bf16.mxu0 0
    %705 = vmatpush2.bf16.msra.mxu0 0
    %706 = vmatprep.mubr.bf16.mxu0 0
    %707 = vmatmul.mubr.bf16.gmra.mxu0 %v165
    %v708 = vpop.f32.mrf.mxu0
    %v709 = vadd.f32 %v625, %v708
    %v710 = vpop.f32.mrf.mxu0
    %v711 = vpop.f32.mrf.mxu0
    %v712 = vadd.f32 %v625, %v711
    %v713 = vpop.f32.mrf.mxu0
    %714 = vdwg.mxu0
    %s715 = scalar_lea.vmem %s3, 320
    %v716 = vld [vmem:[%s715] sm:$0xf]
    %v717 = vld [vmem:[%s715 + $0x4] sm:$0xf]
    %v718 = vld [vmem:[%s715 + $0x8] sm:$0xf]
    %v719 = vld [vmem:[%s715 + $0xc] sm:$0xf]
    %v720 = vld [vmem:[%s715 + $0x10] sm:$0xf]
    %v721 = vld [vmem:[%s715 + $0x14] sm:$0xf]
    %v722 = vld [vmem:[%s715 + $0x18] sm:$0xf]
    %v723 = vld [vmem:[%s715 + $0x1c] sm:$0xf]
    %v724 = vld [vmem:[%s715 + $0x20] sm:$0xf]
    %v725 = vld [vmem:[%s715 + $0x24] sm:$0xf]
    %v726 = vld [vmem:[%s715 + $0x28] sm:$0xf]
    %v727 = vld [vmem:[%s715 + $0x2c] sm:$0xf]
    %v728 = vld [vmem:[%s715 + $0x30] sm:$0xf]
    %v729 = vld [vmem:[%s715 + $0x34] sm:$0xf]
    %v730 = vld [vmem:[%s715 + $0x38] sm:$0xf]
    %v731 = vld [vmem:[%s715 + $0x3c] sm:$0xf]
    %v732 = vlaneseq
    %v733 = vshrl.u32 %v732, 7
    %v734 = vsub.s32 4, %v733
    %v735 = vrot.slane %v164, %v734
    %v752 = vunpack.c.l.b16 %v716
    %v753 = vunpack.c.l.b16 %v717
    %v754 = vunpack.c.l.b16 %v718
    %v755 = vunpack.c.l.b16 %v719
    %v756 = vunpack.c.l.b16 %v720
    %v757 = vunpack.c.l.b16 %v721
    %v758 = vunpack.c.l.b16 %v722
    %v759 = vunpack.c.l.b16 %v723
    %v760 = vunpack.c.l.b16 %v724
    %v761 = vunpack.c.l.b16 %v725
    %v762 = vunpack.c.l.b16 %v726
    %v763 = vunpack.c.l.b16 %v727
    %v764 = vunpack.c.l.b16 %v728
    %v765 = vunpack.c.l.b16 %v729
    %v766 = vunpack.c.l.b16 %v730
    %v767 = vunpack.c.l.b16 %v731
    %v768 = vpack.c.b16 %v753, %v752
    %v769 = vpack.c.b16 %v755, %v754
    %v770 = vpack.c.b16 %v757, %v756
    %v771 = vpack.c.b16 %v759, %v758
    %v772 = vpack.c.b16 %v761, %v760
    %v773 = vpack.c.b16 %v763, %v762
    %v774 = vpack.c.b16 %v765, %v764
    %v775 = vpack.c.b16 %v767, %v766
    %784 = vmatprep.subr.bf16.mxu0 0
    %785 = vmatpush1.bf16.msra.mxu0 %v775
    %786 = vmatprep.subr.bf16.mxu0 0
    %787 = vmatpush1.bf16.msra.mxu0 %v774
    %788 = vmatprep.subr.bf16.mxu0 0
    %789 = vmatpush1.bf16.msra.mxu0 %v773
    %790 = vmatprep.subr.bf16.mxu0 0
    %791 = vmatpush1.bf16.msra.mxu0 %v772
    %792 = vmatprep.subr.bf16.mxu0 0
    %793 = vmatpush1.bf16.msra.mxu0 %v771
    %794 = vmatprep.subr.bf16.mxu0 0
    %795 = vmatpush1.bf16.msra.mxu0 %v770
    %796 = vmatprep.subr.bf16.mxu0 0
    %797 = vmatpush1.bf16.msra.mxu0 %v769
    %798 = vmatprep.subr.bf16.mxu0 0
    %799 = vmatpush1.bf16.msra.mxu0 %v768
    %800 = vmatprep.subr.bf16.mxu0 0
    %801 = vmatpush2.bf16.msra.mxu0 0
    %802 = vmatprep.subr.bf16.mxu0 0
    %803 = vmatpush2.bf16.msra.mxu0 0
    %804 = vmatprep.subr.bf16.mxu0 0
    %805 = vmatpush2.bf16.msra.mxu0 0
    %806 = vmatprep.subr.bf16.mxu0 0
    %807 = vmatpush2.bf16.msra.mxu0 0
    %808 = vmatprep.subr.bf16.mxu0 0
    %809 = vmatpush2.bf16.msra.mxu0 0
    %810 = vmatprep.subr.bf16.mxu0 0
    %811 = vmatpush2.bf16.msra.mxu0 0
    %812 = vmatprep.subr.bf16.mxu0 0
    %813 = vmatpush2.bf16.msra.mxu0 0
    %814 = vmatprep.subr.bf16.mxu0 0
    %815 = vmatpush2.bf16.msra.mxu0 0
    %816 = vmatprep.mubr.bf16.mxu0 0
    %817 = vmatmul.mubr.bf16.gmra.mxu0 %v165
    %v818 = vpop.f32.mrf.mxu0
    %v819 = vadd.f32 %v735, %v818
    %v820 = vpop.f32.mrf.mxu0
    %v821 = vpop.f32.mrf.mxu0
    %v822 = vadd.f32 %v735, %v821
    %v823 = vpop.f32.mrf.mxu0
    %824 = vdwg.mxu0
    %v825 = vsub.f32 %v161, 1.0
    %v826 = vmul.f32 %v825, 1e+09
    %v827 = vpack.c.bf16 %v269, %v269
    %v828 = vpack.c.bf16 %v379, %v379
    %v829 = vpack.c.bf16 %v489, %v489
    %v831 = vsel %vm80, %v827, 0
    %v834 = vsel %vm80, %v828, 0
    %836 = vmatprep.subr.bf16.mxu0 0
    %837 = vmatpush1.bf16.xpose.msra.mxu0 0
    %838 = vmatprep.subr.bf16.mxu0 0
    %839 = vmatpush1.bf16.xpose.msra.mxu0 0
    %840 = vmatprep.subr.bf16.mxu0 0
    %841 = vmatpush1.bf16.xpose.msra.mxu0 0
    %842 = vmatprep.subr.bf16.mxu0 0
    %843 = vmatpush1.bf16.xpose.msra.mxu0 0
    %844 = vmatprep.subr.bf16.mxu0 0
    %845 = vmatpush1.bf16.xpose.msra.mxu0 0
    %846 = vmatprep.subr.bf16.mxu0 0
    %847 = vmatpush1.bf16.xpose.msra.mxu0 0
    %848 = vmatprep.subr.bf16.mxu0 0
    %849 = vmatpush1.bf16.xpose.msra.mxu0 0
    %850 = vmatprep.subr.bf16.mxu0 0
    %851 = vmatpush1.bf16.xpose.msra.mxu0 %v834
    %852 = vmatprep.subr.bf16.mxu0 0
    %853 = vmatpush2.bf16.xpose.msra.mxu0 0
    %854 = vmatprep.subr.bf16.mxu0 0
    %855 = vmatpush2.bf16.xpose.msra.mxu0 0
    %856 = vmatprep.subr.bf16.mxu0 0
    %857 = vmatpush2.bf16.xpose.msra.mxu0 0
    %858 = vmatprep.subr.bf16.mxu0 0
    %859 = vmatpush2.bf16.xpose.msra.mxu0 0
    %860 = vmatprep.subr.bf16.mxu0 0
    %861 = vmatpush2.bf16.xpose.msra.mxu0 0
    %862 = vmatprep.subr.bf16.mxu0 0
    %863 = vmatpush2.bf16.xpose.msra.mxu0 0
    %864 = vmatprep.subr.bf16.mxu0 0
    %865 = vmatpush2.bf16.xpose.msra.mxu0 0
    %866 = vmatprep.subr.bf16.mxu0 0
    %867 = vmatpush2.bf16.xpose.msra.mxu0 0
    %868 = vmatprep.mubr.bf16.mxu0 0
    %869 = vmatmul.mubr.bf16.gmra.mxu0 %v831
    %v870 = vpop.f32.mrf.mxu0
    %v871 = vadd.f32 0.0, %v870
    %v872 = vpop.f32.mrf.mxu0
    %v873 = vpop.f32.mrf.mxu0
    %v874 = vpop.f32.mrf.mxu0
    %875 = vdwg.mxu0
    %v876 = vmul.f32 %v871, 0.125
    %v877 = vlaneseq
    %v878 = vshrl.u32 %v877, 7
    %v879 = vsub.s32 0, %v878
    %v880 = vrot.slane %v826, %v879
    %v881 = vadd.f32 %v876, %v880
    %vm882 = vcmask 64512
    %v883 = vsel %vm882, %v881, -inf
    %884 = vmax.xlane.f32.xlu0 %v883
    %v885 = vpop.xlane.xlu0 %884
    %v886 = vsub.f32 %v881, %v885
    %v887 = vmul.f32 %v886, 1.442695
    %v888 = vpow.pop %v887
    %v889 = vsel %vm882, %v888, 0.0
    %890 = vadd.xlane.f32.xlu0 %v889
    %v891 = vpop.xlane.xlu0 %890
    %v892 = vrcp.pop %v891
    %v893 = vmul.f32 %v888, %v892
    %v894 = vpack.c.bf16 %v893, %v893
    %v896 = vsel %vm882, %v894, 0
    %vm898 = vcmask 1043456
    %v900 = vsel %vm898, %v829, 0
    %902 = vmatprep.subr.bf16.mxu0 0
    %903 = vmatpush1.bf16.msra.mxu0 0
    %904 = vmatprep.subr.bf16.mxu0 0
    %905 = vmatpush1.bf16.msra.mxu0 0
    %906 = vmatprep.subr.bf16.mxu0 0
    %907 = vmatpush1.bf16.msra.mxu0 0
    %908 = vmatprep.subr.bf16.mxu0 0
    %909 = vmatpush1.bf16.msra.mxu0 0
    %910 = vmatprep.subr.bf16.mxu0 0
    %911 = vmatpush1.bf16.msra.mxu0 0
    %912 = vmatprep.subr.bf16.mxu0 0
    %913 = vmatpush1.bf16.msra.mxu0 0
    %914 = vmatprep.subr.bf16.mxu0 0
    %915 = vmatpush1.bf16.msra.mxu0 0
    %916 = vmatprep.subr.bf16.mxu0 0
    %917 = vmatpush1.bf16.msra.mxu0 %v900
    %918 = vmatprep.subr.bf16.mxu0 0
    %919 = vmatpush2.bf16.msra.mxu0 0
    %920 = vmatprep.subr.bf16.mxu0 0
    %921 = vmatpush2.bf16.msra.mxu0 0
    %922 = vmatprep.subr.bf16.mxu0 0
    %923 = vmatpush2.bf16.msra.mxu0 0
    %924 = vmatprep.subr.bf16.mxu0 0
    %925 = vmatpush2.bf16.msra.mxu0 0
    %926 = vmatprep.subr.bf16.mxu0 0
    %927 = vmatpush2.bf16.msra.mxu0 0
    %928 = vmatprep.subr.bf16.mxu0 0
    %929 = vmatpush2.bf16.msra.mxu0 0
    %930 = vmatprep.subr.bf16.mxu0 0
    %931 = vmatpush2.bf16.msra.mxu0 0
    %932 = vmatprep.subr.bf16.mxu0 0
    %933 = vmatpush2.bf16.msra.mxu0 0
    %934 = vmatprep.mubr.bf16.mxu0 0
    %935 = vmatmul.mubr.bf16.gmra.mxu0 %v896
    %v936 = vpop.f32.mrf.mxu0
    %v937 = vadd.f32 0.0, %v936
    %v938 = vpop.f32.mrf.mxu0
    %v939 = vpop.f32.mrf.mxu0
    %v940 = vpop.f32.mrf.mxu0
    %941 = vdwg.mxu0
    %v942 = vpack.c.bf16 %v937, %v937
    %v943 = vld [vmem:[%s4] sm:$0xf]
    %v944 = vld [vmem:[%s4 + $0x4] sm:$0xf]
    %v945 = vld [vmem:[%s4 + $0x8] sm:$0xf]
    %v946 = vld [vmem:[%s4 + $0xc] sm:$0xf]
    %v947 = vld [vmem:[%s4 + $0x10] sm:$0xf]
    %v948 = vld [vmem:[%s4 + $0x14] sm:$0xf]
    %v949 = vld [vmem:[%s4 + $0x18] sm:$0xf]
    %v950 = vld [vmem:[%s4 + $0x1c] sm:$0xf]
    %v951 = vpack.c.bf16 %v599, %v599
    %v952 = vpack.c.bf16 %v709, %v709
    %v953 = vpack.c.bf16 %v819, %v819
    %v955 = vsel %vm80, %v951, 0
    %v958 = vsel %vm80, %v952, 0
    %960 = vmatprep.subr.bf16.mxu0 0
    %961 = vmatpush1.bf16.xpose.msra.mxu0 0
    %962 = vmatprep.subr.bf16.mxu0 0
    %963 = vmatpush1.bf16.xpose.msra.mxu0 0
    %964 = vmatprep.subr.bf16.mxu0 0
    %965 = vmatpush1.bf16.xpose.msra.mxu0 0
    %966 = vmatprep.subr.bf16.mxu0 0
    %967 = vmatpush1.bf16.xpose.msra.mxu0 0
    %968 = vmatprep.subr.bf16.mxu0 0
    %969 = vmatpush1.bf16.xpose.msra.mxu0 0
    %970 = vmatprep.subr.bf16.mxu0 0
    %971 = vmatpush1.bf16.xpose.msra.mxu0 0
    %972 = vmatprep.subr.bf16.mxu0 0
    %973 = vmatpush1.bf16.xpose.msra.mxu0 0
    %974 = vmatprep.subr.bf16.mxu0 0
    %975 = vmatpush1.bf16.xpose.msra.mxu0 %v958
    %976 = vmatprep.subr.bf16.mxu0 0
    %977 = vmatpush2.bf16.xpose.msra.mxu0 0
    %978 = vmatprep.subr.bf16.mxu0 0
    %979 = vmatpush2.bf16.xpose.msra.mxu0 0
    %980 = vmatprep.subr.bf16.mxu0 0
    %981 = vmatpush2.bf16.xpose.msra.mxu0 0
    %982 = vmatprep.subr.bf16.mxu0 0
    %983 = vmatpush2.bf16.xpose.msra.mxu0 0
    %984 = vmatprep.subr.bf16.mxu0 0
    %985 = vmatpush2.bf16.xpose.msra.mxu0 0
    %986 = vmatprep.subr.bf16.mxu0 0
    %987 = vmatpush2.bf16.xpose.msra.mxu0 0
    %988 = vmatprep.subr.bf16.mxu0 0
    %989 = vmatpush2.bf16.xpose.msra.mxu0 0
    %990 = vmatprep.subr.bf16.mxu0 0
    %991 = vmatpush2.bf16.xpose.msra.mxu0 0
    %992 = vmatprep.mubr.bf16.mxu0 0
    %993 = vmatmul.mubr.bf16.gmra.mxu0 %v955
    %v994 = vpop.f32.mrf.mxu0
    %v995 = vadd.f32 0.0, %v994
    %v996 = vpop.f32.mrf.mxu0
    %v997 = vpop.f32.mrf.mxu0
    %v998 = vpop.f32.mrf.mxu0
    %999 = vdwg.mxu0
    %v1000 = vmul.f32 %v995, 0.125
    %v1001 = vadd.f32 %v1000, %v880
    %v1002 = vsel %vm882, %v1001, -inf
    %1003 = vmax.xlane.f32.xlu0 %v1002
    %v1004 = vpop.xlane.xlu0 %1003
    %v1005 = vsub.f32 %v1001, %v1004
    %v1006 = vmul.f32 %v1005, 1.442695
    %v1007 = vpow.pop %v1006
    %v1008 = vsel %vm882, %v1007, 0.0
    %1009 = vadd.xlane.f32.xlu0 %v1008
    %v1010 = vpop.xlane.xlu0 %1009
    %v1011 = vrcp.pop %v1010
    %v1012 = vmul.f32 %v1007, %v1011
    %v1013 = vpack.c.bf16 %v1012, %v1012
    %v1015 = vsel %vm882, %v1013, 0
    %v1018 = vsel %vm898, %v953, 0
    %1020 = vmatprep.subr.bf16.mxu0 0
    %1021 = vmatpush1.bf16.msra.mxu0 0
    %1022 = vmatprep.subr.bf16.mxu0 0
    %1023 = vmatpush1.bf16.msra.mxu0 0
    %1024 = vmatprep.subr.bf16.mxu0 0
    %1025 = vmatpush1.bf16.msra.mxu0 0
    %1026 = vmatprep.subr.bf16.mxu0 0
    %1027 = vmatpush1.bf16.msra.mxu0 0
    %1028 = vmatprep.subr.bf16.mxu0 0
    %1029 = vmatpush1.bf16.msra.mxu0 0
    %1030 = vmatprep.subr.bf16.mxu0 0
    %1031 = vmatpush1.bf16.msra.mxu0 0
    %1032 = vmatprep.subr.bf16.mxu0 0
    %1033 = vmatpush1.bf16.msra.mxu0 0
    %1034 = vmatprep.subr.bf16.mxu0 0
    %1035 = vmatpush1.bf16.msra.mxu0 %v1018
    %1036 = vmatprep.subr.bf16.mxu0 0
    %1037 = vmatpush2.bf16.msra.mxu0 0
    %1038 = vmatprep.subr.bf16.mxu0 0
    %1039 = vmatpush2.bf16.msra.mxu0 0
    %1040 = vmatprep.subr.bf16.mxu0 0
    %1041 = vmatpush2.bf16.msra.mxu0 0
    %1042 = vmatprep.subr.bf16.mxu0 0
    %1043 = vmatpush2.bf16.msra.mxu0 0
    %1044 = vmatprep.subr.bf16.mxu0 0
    %1045 = vmatpush2.bf16.msra.mxu0 0
    %1046 = vmatprep.subr.bf16.mxu0 0
    %1047 = vmatpush2.bf16.msra.mxu0 0
    %1048 = vmatprep.subr.bf16.mxu0 0
    %1049 = vmatpush2.bf16.msra.mxu0 0
    %1050 = vmatprep.subr.bf16.mxu0 0
    %1051 = vmatpush2.bf16.msra.mxu0 0
    %1052 = vmatprep.mubr.bf16.mxu0 0
    %1053 = vmatmul.mubr.bf16.gmra.mxu0 %v1015
    %v1054 = vpop.f32.mrf.mxu0
    %v1055 = vadd.f32 0.0, %v1054
    %v1056 = vpop.f32.mrf.mxu0
    %v1057 = vpop.f32.mrf.mxu0
    %v1058 = vpop.f32.mrf.mxu0
    %1059 = vdwg.mxu0
    %v1060 = vpack.c.bf16 %v1055, %v1055
    %s1061 = scalar_lea.vmem %s4, 32
    %v1062 = vld [vmem:[%s1061] sm:$0xf]
    %v1063 = vld [vmem:[%s1061 + $0x4] sm:$0xf]
    %v1064 = vld [vmem:[%s1061 + $0x8] sm:$0xf]
    %v1065 = vld [vmem:[%s1061 + $0xc] sm:$0xf]
    %v1066 = vld [vmem:[%s1061 + $0x10] sm:$0xf]
    %v1067 = vld [vmem:[%s1061 + $0x14] sm:$0xf]
    %v1068 = vld [vmem:[%s1061 + $0x18] sm:$0xf]
    %v1069 = vld [vmem:[%s1061 + $0x1c] sm:$0xf]
    %v1078 = vunpack.c.l.b16 %v1062
    %v1079 = vunpack.c.l.b16 %v1063
    %v1080 = vunpack.c.l.b16 %v1064
    %v1081 = vunpack.c.l.b16 %v1065
    %v1082 = vunpack.c.l.b16 %v1066
    %v1083 = vunpack.c.l.b16 %v1067
    %v1084 = vunpack.c.l.b16 %v1068
    %v1085 = vunpack.c.l.b16 %v1069
    %v1086 = vpack.c.b16 %v1079, %v1078
    %v1087 = vpack.c.b16 %v1081, %v1080
    %v1088 = vpack.c.b16 %v1083, %v1082
    %v1089 = vpack.c.b16 %v1085, %v1084
    %v1095 = vsel %vm80, %v1060, 0
    %1097 = vmatprep.subr.bf16.mxu0 0
    %1098 = vmatpush1.bf16.msra.mxu0 0
    %1099 = vmatprep.subr.bf16.mxu0 0
    %1100 = vmatpush1.bf16.msra.mxu0 0
    %1101 = vmatprep.subr.bf16.mxu0 0
    %1102 = vmatpush1.bf16.msra.mxu0 0
    %1103 = vmatprep.subr.bf16.mxu0 0
    %1104 = vmatpush1.bf16.msra.mxu0 0
    %1105 = vmatprep.subr.bf16.mxu0 0
    %1106 = vmatpush1.bf16.msra.mxu0 %v1089
    %1107 = vmatprep.subr.bf16.mxu0 0
    %1108 = vmatpush1.bf16.msra.mxu0 %v1088
    %1109 = vmatprep.subr.bf16.mxu0 0
    %1110 = vmatpush1.bf16.msra.mxu0 %v1087
    %1111 = vmatprep.subr.bf16.mxu0 0
    %1112 = vmatpush1.bf16.msra.mxu0 %v1086
    %1113 = vmatprep.subr.bf16.mxu0 0
    %1114 = vmatpush2.bf16.msra.mxu0 0
    %1115 = vmatprep.subr.bf16.mxu0 0
    %1116 = vmatpush2.bf16.msra.mxu0 0
    %1117 = vmatprep.subr.bf16.mxu0 0
    %1118 = vmatpush2.bf16.msra.mxu0 0
    %1119 = vmatprep.subr.bf16.mxu0 0
    %1120 = vmatpush2.bf16.msra.mxu0 0
    %1121 = vmatprep.subr.bf16.mxu0 0
    %1122 = vmatpush2.bf16.msra.mxu0 0
    %1123 = vmatprep.subr.bf16.mxu0 0
    %1124 = vmatpush2.bf16.msra.mxu0 0
    %1125 = vmatprep.subr.bf16.mxu0 0
    %1126 = vmatpush2.bf16.msra.mxu0 0
    %1127 = vmatprep.subr.bf16.mxu0 0
    %1128 = vmatpush2.bf16.msra.mxu0 0
    %1129 = vmatprep.mubr.bf16.mxu0 0
    %1130 = vmatmul.mubr.bf16.gmra.mxu0 %v1095
    %v1131 = vpop.f32.mrf.mxu0
    %v1132 = vadd.f32 0.0, %v1131
    %v1133 = vpop.f32.mrf.mxu0
    %v1134 = vpop.f32.mrf.mxu0
    %v1135 = vpop.f32.mrf.mxu0
    %1136 = vdwg.mxu0
    %v1145 = vunpack.c.l.b16 %v943
    %v1146 = vunpack.c.l.b16 %v944
    %v1147 = vunpack.c.l.b16 %v945
    %v1148 = vunpack.c.l.b16 %v946
    %v1149 = vunpack.c.l.b16 %v947
    %v1150 = vunpack.c.l.b16 %v948
    %v1151 = vunpack.c.l.b16 %v949
    %v1152 = vunpack.c.l.b16 %v950
    %v1153 = vpack.c.b16 %v1146, %v1145
    %v1154 = vpack.c.b16 %v1148, %v1147
    %v1155 = vpack.c.b16 %v1150, %v1149
    %v1156 = vpack.c.b16 %v1152, %v1151
    %v1162 = vsel %vm80, %v942, 0
    %1164 = vmatprep.subr.bf16.mxu0 0
    %1165 = vmatpush1.bf16.msra.mxu0 0
    %1166 = vmatprep.subr.bf16.mxu0 0
    %1167 = vmatpush1.bf16.msra.mxu0 0
    %1168 = vmatprep.subr.bf16.mxu0 0
    %1169 = vmatpush1.bf16.msra.mxu0 0
    %1170 = vmatprep.subr.bf16.mxu0 0
    %1171 = vmatpush1.bf16.msra.mxu0 0
    %1172 = vmatprep.subr.bf16.mxu0 0
    %1173 = vmatpush1.bf16.msra.mxu0 %v1156
    %1174 = vmatprep.subr.bf16.mxu0 0
    %1175 = vmatpush1.bf16.msra.mxu0 %v1155
    %1176 = vmatprep.subr.bf16.mxu0 0
    %1177 = vmatpush1.bf16.msra.mxu0 %v1154
    %1178 = vmatprep.subr.bf16.mxu0 0
    %1179 = vmatpush1.bf16.msra.mxu0 %v1153
    %1180 = vmatprep.subr.bf16.mxu0 0
    %1181 = vmatpush2.bf16.msra.mxu0 0
    %1182 = vmatprep.subr.bf16.mxu0 0
    %1183 = vmatpush2.bf16.msra.mxu0 0
    %1184 = vmatprep.subr.bf16.mxu0 0
    %1185 = vmatpush2.bf16.msra.mxu0 0
    %1186 = vmatprep.subr.bf16.mxu0 0
    %1187 = vmatpush2.bf16.msra.mxu0 0
    %1188 = vmatprep.subr.bf16.mxu0 0
    %1189 = vmatpush2.bf16.msra.mxu0 0
    %1190 = vmatprep.subr.bf16.mxu0 0
    %1191 = vmatpush2.bf16.msra.mxu0 0
    %1192 = vmatprep.subr.bf16.mxu0 0
    %1193 = vmatpush2.bf16.msra.mxu0 0
    %1194 = vmatprep.subr.bf16.mxu0 0
    %1195 = vmatpush2.bf16.msra.mxu0 0
    %1196 = vmatprep.mubr.bf16.mxu0 0
    %1197 = vmatmul.mubr.bf16.gmra.mxu0 %v1162
    %v1198 = vpop.f32.mrf.mxu0
    %v1199 = vadd.f32 %v1132, %v1198
    %v1200 = vpop.f32.mrf.mxu0
    %v1201 = vpop.f32.mrf.mxu0
    %v1202 = vpop.f32.mrf.mxu0
    %1203 = vdwg.mxu0
    %v1204 = vpack.c.bf16 %v272, %v272
    %v1205 = vpack.c.bf16 %v382, %v382
    %v1206 = vpack.c.bf16 %v492, %v492
    %v1208 = vsel %vm80, %v1204, 0
    %v1211 = vsel %vm80, %v1205, 0
    %1213 = vmatprep.subr.bf16.mxu0 0
    %1214 = vmatpush1.bf16.xpose.msra.mxu0 0
    %1215 = vmatprep.subr.bf16.mxu0 0
    %1216 = vmatpush1.bf16.xpose.msra.mxu0 0
    %1217 = vmatprep.subr.bf16.mxu0 0
    %1218 = vmatpush1.bf16.xpose.msra.mxu0 0
    %1219 = vmatprep.subr.bf16.mxu0 0
    %1220 = vmatpush1.bf16.xpose.msra.mxu0 0
    %1221 = vmatprep.subr.bf16.mxu0 0
    %1222 = vmatpush1.bf16.xpose.msra.mxu0 0
    %1223 = vmatprep.subr.bf16.mxu0 0
    %1224 = vmatpush1.bf16.xpose.msra.mxu0 0
    %1225 = vmatprep.subr.bf16.mxu0 0
    %1226 = vmatpush1.bf16.xpose.msra.mxu0 0
    %1227 = vmatprep.subr.bf16.mxu0 0
    %1228 = vmatpush1.bf16.xpose.msra.mxu0 %v1211
    %1229 = vmatprep.subr.bf16.mxu0 0
    %1230 = vmatpush2.bf16.xpose.msra.mxu0 0
    %1231 = vmatprep.subr.bf16.mxu0 0
    %1232 = vmatpush2.bf16.xpose.msra.mxu0 0
    %1233 = vmatprep.subr.bf16.mxu0 0
    %1234 = vmatpush2.bf16.xpose.msra.mxu0 0
    %1235 = vmatprep.subr.bf16.mxu0 0
    %1236 = vmatpush2.bf16.xpose.msra.mxu0 0
    %1237 = vmatprep.subr.bf16.mxu0 0
    %1238 = vmatpush2.bf16.xpose.msra.mxu0 0
    %1239 = vmatprep.subr.bf16.mxu0 0
    %1240 = vmatpush2.bf16.xpose.msra.mxu0 0
    %1241 = vmatprep.subr.bf16.mxu0 0
    %1242 = vmatpush2.bf16.xpose.msra.mxu0 0
    %1243 = vmatprep.subr.bf16.mxu0 0
    %1244 = vmatpush2.bf16.xpose.msra.mxu0 0
    %1245 = vmatprep.mubr.bf16.mxu0 0
    %1246 = vmatmul.mubr.bf16.gmra.mxu0 %v1208
    %v1247 = vpop.f32.mrf.mxu0
    %v1248 = vadd.f32 0.0, %v1247
    %v1249 = vpop.f32.mrf.mxu0
    %v1250 = vpop.f32.mrf.mxu0
    %v1251 = vpop.f32.mrf.mxu0
    %1252 = vdwg.mxu0
    %v1253 = vmul.f32 %v1248, 0.125
    %v1254 = vlaneseq
    %v1255 = vshrl.u32 %v1254, 7
    %v1256 = vsub.s32 1, %v1255
    %v1257 = vrot.slane %v826, %v1256
    %v1258 = vadd.f32 %v1253, %v1257
    %v1259 = vsel %vm882, %v1258, -inf
    %1260 = vmax.xlane.f32.xlu0 %v1259
    %v1261 = vpop.xlane.xlu0 %1260
    %v1262 = vsub.f32 %v1258, %v1261
    %v1263 = vmul.f32 %v1262, 1.442695
    %v1264 = vpow.pop %v1263
    %v1265 = vsel %vm882, %v1264, 0.0
    %1266 = vadd.xlane.f32.xlu0 %v1265
    %v1267 = vpop.xlane.xlu0 %1266
    %v1268 = vrcp.pop %v1267
    %v1269 = vmul.f32 %v1264, %v1268
    %v1270 = vpack.c.bf16 %v1269, %v1269
    %v1272 = vsel %vm882, %v1270, 0
    %v1275 = vsel %vm898, %v1206, 0
    %1277 = vmatprep.subr.bf16.mxu0 0
    %1278 = vmatpush1.bf16.msra.mxu0 0
    %1279 = vmatprep.subr.bf16.mxu0 0
    %1280 = vmatpush1.bf16.msra.mxu0 0
    %1281 = vmatprep.subr.bf16.mxu0 0
    %1282 = vmatpush1.bf16.msra.mxu0 0
    %1283 = vmatprep.subr.bf16.mxu0 0
    %1284 = vmatpush1.bf16.msra.mxu0 0
    %1285 = vmatprep.subr.bf16.mxu0 0
    %1286 = vmatpush1.bf16.msra.mxu0 0
    %1287 = vmatprep.subr.bf16.mxu0 0
    %1288 = vmatpush1.bf16.msra.mxu0 0
    %1289 = vmatprep.subr.bf16.mxu0 0
    %1290 = vmatpush1.bf16.msra.mxu0 0
    %1291 = vmatprep.subr.bf16.mxu0 0
    %1292 = vmatpush1.bf16.msra.mxu0 %v1275
    %1293 = vmatprep.subr.bf16.mxu0 0
    %1294 = vmatpush2.bf16.msra.mxu0 0
    %1295 = vmatprep.subr.bf16.mxu0 0
    %1296 = vmatpush2.bf16.msra.mxu0 0
    %1297 = vmatprep.subr.bf16.mxu0 0
    %1298 = vmatpush2.bf16.msra.mxu0 0
    %1299 = vmatprep.subr.bf16.mxu0 0
    %1300 = vmatpush2.bf16.msra.mxu0 0
    %1301 = vmatprep.subr.bf16.mxu0 0
    %1302 = vmatpush2.bf16.msra.mxu0 0
    %1303 = vmatprep.subr.bf16.mxu0 0
    %1304 = vmatpush2.bf16.msra.mxu0 0
    %1305 = vmatprep.subr.bf16.mxu0 0
    %1306 = vmatpush2.bf16.msra.mxu0 0
    %1307 = vmatprep.subr.bf16.mxu0 0
    %1308 = vmatpush2.bf16.msra.mxu0 0
    %1309 = vmatprep.mubr.bf16.mxu0 0
    %1310 = vmatmul.mubr.bf16.gmra.mxu0 %v1272
    %v1311 = vpop.f32.mrf.mxu0
    %v1312 = vadd.f32 0.0, %v1311
    %v1313 = vpop.f32.mrf.mxu0
    %v1314 = vpop.f32.mrf.mxu0
    %v1315 = vpop.f32.mrf.mxu0
    %1316 = vdwg.mxu0
    %v1317 = vpack.c.bf16 %v1312, %v1312
    %v1318 = vpack.c.bf16 %v602, %v602
    %v1319 = vpack.c.bf16 %v712, %v712
    %v1320 = vpack.c.bf16 %v822, %v822
    %v1322 = vsel %vm80, %v1318, 0
    %v1325 = vsel %vm80, %v1319, 0
    %1327 = vmatprep.subr.bf16.mxu0 0
    %1328 = vmatpush1.bf16.xpose.msra.mxu0 0
    %1329 = vmatprep.subr.bf16.mxu0 0
    %1330 = vmatpush1.bf16.xpose.msra.mxu0 0
    %1331 = vmatprep.subr.bf16.mxu0 0
    %1332 = vmatpush1.bf16.xpose.msra.mxu0 0
    %1333 = vmatprep.subr.bf16.mxu0 0
    %1334 = vmatpush1.bf16.xpose.msra.mxu0 0
    %1335 = vmatprep.subr.bf16.mxu0 0
    %1336 = vmatpush1.bf16.xpose.msra.mxu0 0
    %1337 = vmatprep.subr.bf16.mxu0 0
    %1338 = vmatpush1.bf16.xpose.msra.mxu0 0
    %1339 = vmatprep.subr.bf16.mxu0 0
    %1340 = vmatpush1.bf16.xpose.msra.mxu0 0
    %1341 = vmatprep.subr.bf16.mxu0 0
    %1342 = vmatpush1.bf16.xpose.msra.mxu0 %v1325
    %1343 = vmatprep.subr.bf16.mxu0 0
    %1344 = vmatpush2.bf16.xpose.msra.mxu0 0
    %1345 = vmatprep.subr.bf16.mxu0 0
    %1346 = vmatpush2.bf16.xpose.msra.mxu0 0
    %1347 = vmatprep.subr.bf16.mxu0 0
    %1348 = vmatpush2.bf16.xpose.msra.mxu0 0
    %1349 = vmatprep.subr.bf16.mxu0 0
    %1350 = vmatpush2.bf16.xpose.msra.mxu0 0
    %1351 = vmatprep.subr.bf16.mxu0 0
    %1352 = vmatpush2.bf16.xpose.msra.mxu0 0
    %1353 = vmatprep.subr.bf16.mxu0 0
    %1354 = vmatpush2.bf16.xpose.msra.mxu0 0
    %1355 = vmatprep.subr.bf16.mxu0 0
    %1356 = vmatpush2.bf16.xpose.msra.mxu0 0
    %1357 = vmatprep.subr.bf16.mxu0 0
    %1358 = vmatpush2.bf16.xpose.msra.mxu0 0
    %1359 = vmatprep.mubr.bf16.mxu0 0
    %1360 = vmatmul.mubr.bf16.gmra.mxu0 %v1322
    %v1361 = vpop.f32.mrf.mxu0
    %v1362 = vadd.f32 0.0, %v1361
    %v1363 = vpop.f32.mrf.mxu0
    %v1364 = vpop.f32.mrf.mxu0
    %v1365 = vpop.f32.mrf.mxu0
    %1366 = vdwg.mxu0
    %v1367 = vmul.f32 %v1362, 0.125
    %v1368 = vadd.f32 %v1367, %v1257
    %v1369 = vsel %vm882, %v1368, -inf
    %1370 = vmax.xlane.f32.xlu0 %v1369
    %v1371 = vpop.xlane.xlu0 %1370
    %v1372 = vsub.f32 %v1368, %v1371
    %v1373 = vmul.f32 %v1372, 1.442695
    %v1374 = vpow.pop %v1373
    %v1375 = vsel %vm882, %v1374, 0.0
    %1376 = vadd.xlane.f32.xlu0 %v1375
    %v1377 = vpop.xlane.xlu0 %1376
    %v1378 = vrcp.pop %v1377
    %v1379 = vmul.f32 %v1374, %v1378
    %v1380 = vpack.c.bf16 %v1379, %v1379
    %v1382 = vsel %vm882, %v1380, 0
    %v1385 = vsel %vm898, %v1320, 0
    %1387 = vmatprep.subr.bf16.mxu0 0
    %1388 = vmatpush1.bf16.msra.mxu0 0
    %1389 = vmatprep.subr.bf16.mxu0 0
    %1390 = vmatpush1.bf16.msra.mxu0 0
    %1391 = vmatprep.subr.bf16.mxu0 0
    %1392 = vmatpush1.bf16.msra.mxu0 0
    %1393 = vmatprep.subr.bf16.mxu0 0
    %1394 = vmatpush1.bf16.msra.mxu0 0
    %1395 = vmatprep.subr.bf16.mxu0 0
    %1396 = vmatpush1.bf16.msra.mxu0 0
    %1397 = vmatprep.subr.bf16.mxu0 0
    %1398 = vmatpush1.bf16.msra.mxu0 0
    %1399 = vmatprep.subr.bf16.mxu0 0
    %1400 = vmatpush1.bf16.msra.mxu0 0
    %1401 = vmatprep.subr.bf16.mxu0 0
    %1402 = vmatpush1.bf16.msra.mxu0 %v1385
    %1403 = vmatprep.subr.bf16.mxu0 0
    %1404 = vmatpush2.bf16.msra.mxu0 0
    %1405 = vmatprep.subr.bf16.mxu0 0
    %1406 = vmatpush2.bf16.msra.mxu0 0
    %1407 = vmatprep.subr.bf16.mxu0 0
    %1408 = vmatpush2.bf16.msra.mxu0 0
    %1409 = vmatprep.subr.bf16.mxu0 0
    %1410 = vmatpush2.bf16.msra.mxu0 0
    %1411 = vmatprep.subr.bf16.mxu0 0
    %1412 = vmatpush2.bf16.msra.mxu0 0
    %1413 = vmatprep.subr.bf16.mxu0 0
    %1414 = vmatpush2.bf16.msra.mxu0 0
    %1415 = vmatprep.subr.bf16.mxu0 0
    %1416 = vmatpush2.bf16.msra.mxu0 0
    %1417 = vmatprep.subr.bf16.mxu0 0
    %1418 = vmatpush2.bf16.msra.mxu0 0
    %1419 = vmatprep.mubr.bf16.mxu0 0
    %1420 = vmatmul.mubr.bf16.gmra.mxu0 %v1382
    %v1421 = vpop.f32.mrf.mxu0
    %v1422 = vadd.f32 0.0, %v1421
    %v1423 = vpop.f32.mrf.mxu0
    %v1424 = vpop.f32.mrf.mxu0
    %v1425 = vpop.f32.mrf.mxu0
    %1426 = vdwg.mxu0
    %v1427 = vpack.c.bf16 %v1422, %v1422
    %v1429 = vsel %vm80, %v1427, 0
    %1431 = vmatprep.subr.bf16.mxu0 0
    %1432 = vmatpush1.bf16.msra.mxu0 0
    %1433 = vmatprep.subr.bf16.mxu0 0
    %1434 = vmatpush1.bf16.msra.mxu0 0
    %1435 = vmatprep.subr.bf16.mxu0 0
    %1436 = vmatpush1.bf16.msra.mxu0 0
    %1437 = vmatprep.subr.bf16.mxu0 0
    %1438 = vmatpush1.bf16.msra.mxu0 0
    %1439 = vmatprep.subr.bf16.mxu0 0
    %1440 = vmatpush1.bf16.msra.mxu0 %v1089
    %1441 = vmatprep.subr.bf16.mxu0 0
    %1442 = vmatpush1.bf16.msra.mxu0 %v1088
    %1443 = vmatprep.subr.bf16.mxu0 0
    %1444 = vmatpush1.bf16.msra.mxu0 %v1087
    %1445 = vmatprep.subr.bf16.mxu0 0
    %1446 = vmatpush1.bf16.msra.mxu0 %v1086
    %1447 = vmatprep.subr.bf16.mxu0 0
    %1448 = vmatpush2.bf16.msra.mxu0 0
    %1449 = vmatprep.subr.bf16.mxu0 0
    %1450 = vmatpush2.bf16.msra.mxu0 0
    %1451 = vmatprep.subr.bf16.mxu0 0
    %1452 = vmatpush2.bf16.msra.mxu0 0
    %1453 = vmatprep.subr.bf16.mxu0 0
    %1454 = vmatpush2.bf16.msra.mxu0 0
    %1455 = vmatprep.subr.bf16.mxu0 0
    %1456 = vmatpush2.bf16.msra.mxu0 0
    %1457 = vmatprep.subr.bf16.mxu0 0
    %1458 = vmatpush2.bf16.msra.mxu0 0
    %1459 = vmatprep.subr.bf16.mxu0 0
    %1460 = vmatpush2.bf16.msra.mxu0 0
    %1461 = vmatprep.subr.bf16.mxu0 0
    %1462 = vmatpush2.bf16.msra.mxu0 0
    %1463 = vmatprep.mubr.bf16.mxu0 0
    %1464 = vmatmul.mubr.bf16.gmra.mxu0 %v1429
    %v1465 = vpop.f32.mrf.mxu0
    %v1466 = vadd.f32 0.0, %v1465
    %v1467 = vpop.f32.mrf.mxu0
    %v1468 = vpop.f32.mrf.mxu0
    %v1469 = vpop.f32.mrf.mxu0
    %1470 = vdwg.mxu0
    %v1472 = vsel %vm80, %v1317, 0
    %1474 = vmatprep.subr.bf16.mxu0 0
    %1475 = vmatpush1.bf16.msra.mxu0 0
    %1476 = vmatprep.subr.bf16.mxu0 0
    %1477 = vmatpush1.bf16.msra.mxu0 0
    %1478 = vmatprep.subr.bf16.mxu0 0
    %1479 = vmatpush1.bf16.msra.mxu0 0
    %1480 = vmatprep.subr.bf16.mxu0 0
    %1481 = vmatpush1.bf16.msra.mxu0 0
    %1482 = vmatprep.subr.bf16.mxu0 0
    %1483 = vmatpush1.bf16.msra.mxu0 %v1156
    %1484 = vmatprep.subr.bf16.mxu0 0
    %1485 = vmatpush1.bf16.msra.mxu0 %v1155
    %1486 = vmatprep.subr.bf16.mxu0 0
    %1487 = vmatpush1.bf16.msra.mxu0 %v1154
    %1488 = vmatprep.subr.bf16.mxu0 0
    %1489 = vmatpush1.bf16.msra.mxu0 %v1153
    %1490 = vmatprep.subr.bf16.mxu0 0
    %1491 = vmatpush2.bf16.msra.mxu0 0
    %1492 = vmatprep.subr.bf16.mxu0 0
    %1493 = vmatpush2.bf16.msra.mxu0 0
    %1494 = vmatprep.subr.bf16.mxu0 0
    %1495 = vmatpush2.bf16.msra.mxu0 0
    %1496 = vmatprep.subr.bf16.mxu0 0
    %1497 = vmatpush2.bf16.msra.mxu0 0
    %1498 = vmatprep.subr.bf16.mxu0 0
    %1499 = vmatpush2.bf16.msra.mxu0 0
    %1500 = vmatprep.subr.bf16.mxu0 0
    %1501 = vmatpush2.bf16.msra.mxu0 0
    %1502 = vmatprep.subr.bf16.mxu0 0
    %1503 = vmatpush2.bf16.msra.mxu0 0
    %1504 = vmatprep.subr.bf16.mxu0 0
    %1505 = vmatpush2.bf16.msra.mxu0 0
    %1506 = vmatprep.mubr.bf16.mxu0 0
    %1507 = vmatmul.mubr.bf16.gmra.mxu0 %v1472
    %v1508 = vpop.f32.mrf.mxu0
    %v1509 = vadd.f32 %v1466, %v1508
    %v1510 = vpop.f32.mrf.mxu0
    %v1511 = vpop.f32.mrf.mxu0
    %v1512 = vpop.f32.mrf.mxu0
    %1513 = vdwg.mxu0
    %v1514 = vlaneseq
    %v1515 = vshrl.u32 %v1514, 7
    %v1516 = vsub.s32 0, %v1515
    %v1517 = vrot.slane %v162, %v1516
    %v1518 = vadd.f32 %v1199, %v1517
    %v1519 = vadd.f32 %v1509, %v1517
    %v1520 = vadd.f32 %v158, %v1518
    %v1521 = vadd.f32 %v159, %v1519
    %1522 = vadd.xlane.f32.xlu0 %v1520
    %v1523 = vpop.xlane.xlu0 %1522
    %1524 = vadd.xlane.f32.xlu0 %v1521
    %v1525 = vpop.xlane.xlu0 %1524
    %v1526 = vmul.f32 %v1523, %v129
    %v1527 = vmul.f32 %v1525, %v129
    %v1528 = vsub.f32 %v1520, %v1526
    %v1529 = vsub.f32 %v1521, %v1527
    %v1530 = vmul.f32 %v1528, %v1528
    %v1531 = vmul.f32 %v1529, %v1529
    %1532 = vadd.xlane.f32.xlu0 %v1530
    %v1533 = vpop.xlane.xlu0 %1532
    %1534 = vadd.xlane.f32.xlu0 %v1531
    %v1535 = vpop.xlane.xlu0 %1534
    %v1536 = vmul.f32 %v1533, %v129
    %v1537 = vmul.f32 %v1535, %v129
    %v1538 = vadd.f32 %v1536, 1e-05
    %v1539 = vadd.f32 %v1537, 1e-05
    %v1540 = vrsqrt.pop %v1538
    %v1541 = vrsqrt.pop %v1539
    %v1542 = vmul.f32 %v1528, %v1540
    %v1543 = vmul.f32 %v1529, %v1541
    %v1544 = vlaneseq
    %v1545 = vshrl.u32 %v1544, 7
    %v1546 = vsub.s32 1, %v1545
    %v1547 = vrot.slane %v162, %v1546
    %v1548 = vmul.f32 %v1542, %v1547
    %v1549 = vmul.f32 %v1543, %v1547
    %v1550 = vlaneseq
    %v1551 = vshrl.u32 %v1550, 7
    %v1552 = vsub.s32 2, %v1551
    %v1553 = vrot.slane %v162, %v1552
    %v1554 = vadd.f32 %v1548, %v1553
    %v1555 = vadd.f32 %v1549, %v1553
    %v1556 = vpack.c.bf16 %v1555, %v1554
    %v1557 = vld [vmem:[%s5] sm:$0xff]
    %v1558 = vld [vmem:[%s5 + $0x8] sm:$0xff]
    %v1559 = vld [vmem:[%s5 + $0x10] sm:$0xff]
    %v1560 = vld [vmem:[%s5 + $0x18] sm:$0xff]
    %v1561 = vld [vmem:[%s5 + $0x20] sm:$0xff]
    %v1562 = vld [vmem:[%s5 + $0x28] sm:$0xff]
    %v1563 = vld [vmem:[%s5 + $0x30] sm:$0xff]
    %v1564 = vld [vmem:[%s5 + $0x38] sm:$0xff]
    %v1565 = vld [vmem:[%s5 + $0x40] sm:$0xff]
    %v1566 = vld [vmem:[%s5 + $0x48] sm:$0xff]
    %v1567 = vld [vmem:[%s5 + $0x50] sm:$0xff]
    %v1568 = vld [vmem:[%s5 + $0x58] sm:$0xff]
    %v1569 = vld [vmem:[%s5 + $0x60] sm:$0xff]
    %v1570 = vld [vmem:[%s5 + $0x68] sm:$0xff]
    %v1571 = vld [vmem:[%s5 + $0x70] sm:$0xff]
    %v1572 = vld [vmem:[%s5 + $0x78] sm:$0xff]
    %v1573 = vlaneseq
    %v1574 = vshrl.u32 %v1573, 7
    %v1575 = vsub.s32 3, %v1574
    %v1576 = vrot.slane %v162, %v1575
    %v1577 = vlaneseq
    %v1578 = vshrl.u32 %v1577, 7
    %v1579 = vsub.s32 3, %v1578
    %v1580 = vrot.slane %v163, %v1579
    %v1597 = vunpack.c.l.b16 %v1557
    %v1598 = vunpack.c.h.b16 %v1557
    %v1599 = vunpack.c.l.b16 %v1558
    %v1600 = vunpack.c.h.b16 %v1558
    %v1601 = vunpack.c.l.b16 %v1559
    %v1602 = vunpack.c.h.b16 %v1559
    %v1603 = vunpack.c.l.b16 %v1560
    %v1604 = vunpack.c.h.b16 %v1560
    %v1605 = vunpack.c.l.b16 %v1561
    %v1606 = vunpack.c.h.b16 %v1561
    %v1607 = vunpack.c.l.b16 %v1562
    %v1608 = vunpack.c.h.b16 %v1562
    %v1609 = vunpack.c.l.b16 %v1563
    %v1610 = vunpack.c.h.b16 %v1563
    %v1611 = vunpack.c.l.b16 %v1564
    %v1612 = vunpack.c.h.b16 %v1564
    %v1613 = vunpack.c.l.b16 %v1565
    %v1614 = vunpack.c.h.b16 %v1565
    %v1615 = vunpack.c.l.b16 %v1566
    %v1616 = vunpack.c.h.b16 %v1566
    %v1617 = vunpack.c.l.b16 %v1567
    %v1618 = vunpack.c.h.b16 %v1567
    %v1619 = vunpack.c.l.b16 %v1568
    %v1620 = vunpack.c.h.b16 %v1568
    %v1621 = vunpack.c.l.b16 %v1569
    %v1622 = vunpack.c.h.b16 %v1569
    %v1623 = vunpack.c.l.b16 %v1570
    %v1624 = vunpack.c.h.b16 %v1570
    %v1625 = vunpack.c.l.b16 %v1571
    %v1626 = vunpack.c.h.b16 %v1571
    %v1627 = vunpack.c.l.b16 %v1572
    %v1628 = vunpack.c.h.b16 %v1572
    %v1629 = vpack.c.b16 %v1599, %v1597
    %v1630 = vpack.c.b16 %v1600, %v1598
    %v1631 = vpack.c.b16 %v1603, %v1601
    %v1632 = vpack.c.b16 %v1604, %v1602
    %v1633 = vpack.c.b16 %v1607, %v1605
    %v1634 = vpack.c.b16 %v1608, %v1606
    %v1635 = vpack.c.b16 %v1611, %v1609
    %v1636 = vpack.c.b16 %v1612, %v1610
    %v1637 = vpack.c.b16 %v1615, %v1613
    %v1638 = vpack.c.b16 %v1616, %v1614
    %v1639 = vpack.c.b16 %v1619, %v1617
    %v1640 = vpack.c.b16 %v1620, %v1618
    %v1641 = vpack.c.b16 %v1623, %v1621
    %v1642 = vpack.c.b16 %v1624, %v1622
    %v1643 = vpack.c.b16 %v1627, %v1625
    %v1644 = vpack.c.b16 %v1628, %v1626
    %1661 = vmatprep.subr.bf16.mxu0 %v1644
    %1662 = vmatpush1.bf16.msra.mxu0 %v1643
    %1663 = vmatprep.subr.bf16.mxu0 %v1642
    %1664 = vmatpush1.bf16.msra.mxu0 %v1641
    %1665 = vmatprep.subr.bf16.mxu0 %v1640
    %1666 = vmatpush1.bf16.msra.mxu0 %v1639
    %1667 = vmatprep.subr.bf16.mxu0 %v1638
    %1668 = vmatpush1.bf16.msra.mxu0 %v1637
    %1669 = vmatprep.subr.bf16.mxu0 %v1636
    %1670 = vmatpush1.bf16.msra.mxu0 %v1635
    %1671 = vmatprep.subr.bf16.mxu0 %v1634
    %1672 = vmatpush1.bf16.msra.mxu0 %v1633
    %1673 = vmatprep.subr.bf16.mxu0 %v1632
    %1674 = vmatpush1.bf16.msra.mxu0 %v1631
    %1675 = vmatprep.subr.bf16.mxu0 %v1630
    %1676 = vmatpush1.bf16.msra.mxu0 %v1629
    %1677 = vmatprep.subr.bf16.mxu0 0
    %1678 = vmatpush2.bf16.msra.mxu0 0
    %1679 = vmatprep.subr.bf16.mxu0 0
    %1680 = vmatpush2.bf16.msra.mxu0 0
    %1681 = vmatprep.subr.bf16.mxu0 0
    %1682 = vmatpush2.bf16.msra.mxu0 0
    %1683 = vmatprep.subr.bf16.mxu0 0
    %1684 = vmatpush2.bf16.msra.mxu0 0
    %1685 = vmatprep.subr.bf16.mxu0 0
    %1686 = vmatpush2.bf16.msra.mxu0 0
    %1687 = vmatprep.subr.bf16.mxu0 0
    %1688 = vmatpush2.bf16.msra.mxu0 0
    %1689 = vmatprep.subr.bf16.mxu0 0
    %1690 = vmatpush2.bf16.msra.mxu0 0
    %1691 = vmatprep.subr.bf16.mxu0 0
    %1692 = vmatpush2.bf16.msra.mxu0 0
    %1693 = vmatprep.mubr.bf16.mxu0 0
    %1694 = vmatmul.mubr.bf16.gmra.mxu0 %v1556
    %v1695 = vpop.f32.mrf.mxu0
    %v1696 = vadd.f32 %v1576, %v1695
    %v1697 = vpop.f32.mrf.mxu0
    %v1698 = vadd.f32 %v1580, %v1697
    %v1699 = vpop.f32.mrf.mxu0
    %v1700 = vadd.f32 %v1576, %v1699
    %v1701 = vpop.f32.mrf.mxu0
    %v1702 = vadd.f32 %v1580, %v1701
    %1703 = vdwg.mxu0
    %v1704 = vmul.f32 %v1696, %v1696
    %v1705 = vmul.f32 %v1698, %v1698
    %v1706 = vmul.f32 %v1700, %v1700
    %v1707 = vmul.f32 %v1702, %v1702
    %v1708 = vmul.f32 %v1696, %v1704
    %v1709 = vmul.f32 %v1698, %v1705
    %v1710 = vmul.f32 %v1700, %v1706
    %v1711 = vmul.f32 %v1702, %v1707
    %v1712 = vmul.f32 %v1708, 0.044715
    %v1713 = vmul.f32 %v1709, 0.044715
    %v1714 = vmul.f32 %v1710, 0.044715
    %v1715 = vmul.f32 %v1711, 0.044715
    %v1716 = vadd.f32 %v1696, %v1712
    %v1717 = vadd.f32 %v1698, %v1713
    %v1718 = vadd.f32 %v1700, %v1714
    %v1719 = vadd.f32 %v1702, %v1715
    %v1720 = vmul.f32 %v1716, 0.7978846
    %v1721 = vmul.f32 %v1717, 0.7978846
    %v1722 = vmul.f32 %v1718, 0.7978846
    %v1723 = vmul.f32 %v1719, 0.7978846
    %v1724 = vtanh.pop %v1720
    %v1725 = vtanh.pop %v1721
    %v1726 = vtanh.pop %v1722
    %v1727 = vtanh.pop %v1723
    %v1728 = vadd.f32 %v1724, 1.0
    %v1729 = vadd.f32 %v1725, 1.0
    %v1730 = vadd.f32 %v1726, 1.0
    %v1731 = vadd.f32 %v1727, 1.0
    %v1732 = vmul.f32 %v1728, 0.5
    %v1733 = vmul.f32 %v1729, 0.5
    %v1734 = vmul.f32 %v1730, 0.5
    %v1735 = vmul.f32 %v1731, 0.5
    %v1736 = vmul.f32 %v1696, %v1732
    %v1737 = vmul.f32 %v1698, %v1733
    %v1738 = vmul.f32 %v1700, %v1734
    %v1739 = vmul.f32 %v1702, %v1735
    %v1740 = vpack.c.bf16 %v1738, %v1736
    %v1741 = vpack.c.bf16 %v1739, %v1737
    %v1742 = vld [vmem:[%s6] sm:$0xf]
    %v1743 = vld [vmem:[%s6 + $0x4] sm:$0xf]
    %v1744 = vld [vmem:[%s6 + $0x8] sm:$0xf]
    %v1745 = vld [vmem:[%s6 + $0xc] sm:$0xf]
    %v1746 = vld [vmem:[%s6 + $0x10] sm:$0xf]
    %v1747 = vld [vmem:[%s6 + $0x14] sm:$0xf]
    %v1748 = vld [vmem:[%s6 + $0x18] sm:$0xf]
    %v1749 = vld [vmem:[%s6 + $0x1c] sm:$0xf]
    %v1750 = vld [vmem:[%s6 + $0x20] sm:$0xf]
    %v1751 = vld [vmem:[%s6 + $0x24] sm:$0xf]
    %v1752 = vld [vmem:[%s6 + $0x28] sm:$0xf]
    %v1753 = vld [vmem:[%s6 + $0x2c] sm:$0xf]
    %v1754 = vld [vmem:[%s6 + $0x30] sm:$0xf]
    %v1755 = vld [vmem:[%s6 + $0x34] sm:$0xf]
    %v1756 = vld [vmem:[%s6 + $0x38] sm:$0xf]
    %v1757 = vld [vmem:[%s6 + $0x3c] sm:$0xf]
    %v1758 = vld [vmem:[%s6 + $0x40] sm:$0xf]
    %v1759 = vld [vmem:[%s6 + $0x44] sm:$0xf]
    %v1760 = vld [vmem:[%s6 + $0x48] sm:$0xf]
    %v1761 = vld [vmem:[%s6 + $0x4c] sm:$0xf]
    %v1762 = vld [vmem:[%s6 + $0x50] sm:$0xf]
    %v1763 = vld [vmem:[%s6 + $0x54] sm:$0xf]
    %v1764 = vld [vmem:[%s6 + $0x58] sm:$0xf]
    %v1765 = vld [vmem:[%s6 + $0x5c] sm:$0xf]
    %v1766 = vld [vmem:[%s6 + $0x60] sm:$0xf]
    %v1767 = vld [vmem:[%s6 + $0x64] sm:$0xf]
    %v1768 = vld [vmem:[%s6 + $0x68] sm:$0xf]
    %v1769 = vld [vmem:[%s6 + $0x6c] sm:$0xf]
    %v1770 = vld [vmem:[%s6 + $0x70] sm:$0xf]
    %v1771 = vld [vmem:[%s6 + $0x74] sm:$0xf]
    %v1772 = vld [vmem:[%s6 + $0x78] sm:$0xf]
    %v1773 = vld [vmem:[%s6 + $0x7c] sm:$0xf]
    %v1774 = vlaneseq
    %v1775 = vshrl.u32 %v1774, 7
    %v1776 = vsub.s32 4, %v1775
    %v1777 = vrot.slane %v162, %v1776
    %v1810 = vunpack.c.l.b16 %v1742
    %v1811 = vunpack.c.l.b16 %v1743
    %v1812 = vunpack.c.l.b16 %v1744
    %v1813 = vunpack.c.l.b16 %v1745
    %v1814 = vunpack.c.l.b16 %v1746
    %v1815 = vunpack.c.l.b16 %v1747
    %v1816 = vunpack.c.l.b16 %v1748
    %v1817 = vunpack.c.l.b16 %v1749
    %v1818 = vunpack.c.l.b16 %v1750
    %v1819 = vunpack.c.l.b16 %v1751
    %v1820 = vunpack.c.l.b16 %v1752
    %v1821 = vunpack.c.l.b16 %v1753
    %v1822 = vunpack.c.l.b16 %v1754
    %v1823 = vunpack.c.l.b16 %v1755
    %v1824 = vunpack.c.l.b16 %v1756
    %v1825 = vunpack.c.l.b16 %v1757
    %v1826 = vunpack.c.l.b16 %v1758
    %v1827 = vunpack.c.l.b16 %v1759
    %v1828 = vunpack.c.l.b16 %v1760
    %v1829 = vunpack.c.l.b16 %v1761
    %v1830 = vunpack.c.l.b16 %v1762
    %v1831 = vunpack.c.l.b16 %v1763
    %v1832 = vunpack.c.l.b16 %v1764
    %v1833 = vunpack.c.l.b16 %v1765
    %v1834 = vunpack.c.l.b16 %v1766
    %v1835 = vunpack.c.l.b16 %v1767
    %v1836 = vunpack.c.l.b16 %v1768
    %v1837 = vunpack.c.l.b16 %v1769
    %v1838 = vunpack.c.l.b16 %v1770
    %v1839 = vunpack.c.l.b16 %v1771
    %v1840 = vunpack.c.l.b16 %v1772
    %v1841 = vunpack.c.l.b16 %v1773
    %v1842 = vpack.c.b16 %v1811, %v1810
    %v1843 = vpack.c.b16 %v1813, %v1812
    %v1844 = vpack.c.b16 %v1815, %v1814
    %v1845 = vpack.c.b16 %v1817, %v1816
    %v1846 = vpack.c.b16 %v1819, %v1818
    %v1847 = vpack.c.b16 %v1821, %v1820
    %v1848 = vpack.c.b16 %v1823, %v1822
    %v1849 = vpack.c.b16 %v1825, %v1824
    %v1850 = vpack.c.b16 %v1827, %v1826
    %v1851 = vpack.c.b16 %v1829, %v1828
    %v1852 = vpack.c.b16 %v1831, %v1830
    %v1853 = vpack.c.b16 %v1833, %v1832
    %v1854 = vpack.c.b16 %v1835, %v1834
    %v1855 = vpack.c.b16 %v1837, %v1836
    %v1856 = vpack.c.b16 %v1839, %v1838
    %v1857 = vpack.c.b16 %v1841, %v1840
    %1874 = vmatprep.subr.bf16.mxu0 0
    %1875 = vmatpush1.bf16.msra.mxu0 %v1849
    %1876 = vmatprep.subr.bf16.mxu0 0
    %1877 = vmatpush1.bf16.msra.mxu0 %v1848
    %1878 = vmatprep.subr.bf16.mxu0 0
    %1879 = vmatpush1.bf16.msra.mxu0 %v1847
    %1880 = vmatprep.subr.bf16.mxu0 0
    %1881 = vmatpush1.bf16.msra.mxu0 %v1846
    %1882 = vmatprep.subr.bf16.mxu0 0
    %1883 = vmatpush1.bf16.msra.mxu0 %v1845
    %1884 = vmatprep.subr.bf16.mxu0 0
    %1885 = vmatpush1.bf16.msra.mxu0 %v1844
    %1886 = vmatprep.subr.bf16.mxu0 0
    %1887 = vmatpush1.bf16.msra.mxu0 %v1843
    %1888 = vmatprep.subr.bf16.mxu0 0
    %1889 = vmatpush1.bf16.msra.mxu0 %v1842
    %1890 = vmatprep.subr.bf16.mxu0 0
    %1891 = vmatpush2.bf16.msra.mxu0 %v1857
    %1892 = vmatprep.subr.bf16.mxu0 0
    %1893 = vmatpush2.bf16.msra.mxu0 %v1856
    %1894 = vmatprep.subr.bf16.mxu0 0
    %1895 = vmatpush2.bf16.msra.mxu0 %v1855
    %1896 = vmatprep.subr.bf16.mxu0 0
    %1897 = vmatpush2.bf16.msra.mxu0 %v1854
    %1898 = vmatprep.subr.bf16.mxu0 0
    %1899 = vmatpush2.bf16.msra.mxu0 %v1853
    %1900 = vmatprep.subr.bf16.mxu0 0
    %1901 = vmatpush2.bf16.msra.mxu0 %v1852
    %1902 = vmatprep.subr.bf16.mxu0 0
    %1903 = vmatpush2.bf16.msra.mxu0 %v1851
    %1904 = vmatprep.subr.bf16.mxu0 0
    %1905 = vmatpush2.bf16.msra.mxu0 %v1850
    %1906 = vmatprep.mubr.bf16.mxu0 %v1741
    %1907 = vmatmul.mubr.bf16.gmra.mxu0 %v1740
    %v1908 = vpop.f32.mrf.mxu0
    %v1909 = vadd.f32 %v1777, %v1908
    %v1910 = vpop.f32.mrf.mxu0
    %v1911 = vpop.f32.mrf.mxu0
    %v1912 = vadd.f32 %v1777, %v1911
    %v1913 = vpop.f32.mrf.mxu0
    %1914 = vdwg.mxu0
    %v1915 = vadd.f32 %v1554, %v1909
    %v1916 = vadd.f32 %v1555, %v1912
    %1917 = vadd.xlane.f32.xlu0 %v1915
    %v1918 = vpop.xlane.xlu0 %1917
    %1919 = vadd.xlane.f32.xlu0 %v1916
    %v1920 = vpop.xlane.xlu0 %1919
    %v1921 = vmul.f32 %v1918, %v129
    %v1922 = vmul.f32 %v1920, %v129
    %v1923 = vsub.f32 %v1915, %v1921
    %v1924 = vsub.f32 %v1916, %v1922
    %v1925 = vmul.f32 %v1923, %v1923
    %v1926 = vmul.f32 %v1924, %v1924
    %1927 = vadd.xlane.f32.xlu0 %v1925
    %v1928 = vpop.xlane.xlu0 %1927
    %1929 = vadd.xlane.f32.xlu0 %v1926
    %v1930 = vpop.xlane.xlu0 %1929
    %v1931 = vmul.f32 %v1928, %v129
    %v1932 = vmul.f32 %v1930, %v129
    %v1933 = vadd.f32 %v1931, 1e-05
    %v1934 = vadd.f32 %v1932, 1e-05
    %v1935 = vrsqrt.pop %v1933
    %v1936 = vrsqrt.pop %v1934
    %v1937 = vmul.f32 %v1923, %v1935
    %v1938 = vmul.f32 %v1924, %v1936
    %v1939 = vlaneseq
    %v1940 = vshrl.u32 %v1939, 7
    %v1941 = vsub.s32 5, %v1940
    %v1942 = vrot.slane %v162, %v1941
    %v1943 = vmul.f32 %v1937, %v1942
    %v1944 = vmul.f32 %v1938, %v1942
    %v1945 = vlaneseq
    %v1946 = vshrl.u32 %v1945, 7
    %v1947 = vsub.s32 6, %v1946
    %v1948 = vrot.slane %v162, %v1947
    %v1949 = vadd.f32 %v1943, %v1948
    %v1950 = vadd.f32 %v1944, %v1948
    %s1951 = scalar_lea.vmem %s7, 32
    %v1952 = vld [vmem:[%s1951] sm:$0xff]
    %v1953 = vld [vmem:[%s1951 + $0x8] sm:$0xff]
    %v1954 = vld [vmem:[%s1951 + $0x10] sm:$0xff]
    %v1955 = vpack.c.bf16 %v1950, %v1949
    %s1956 = scalar_lea.vmem %s3, 384
    %v1957 = vld [vmem:[%s1956] sm:$0xf]
    %v1958 = vld [vmem:[%s1956 + $0x4] sm:$0xf]
    %v1959 = vld [vmem:[%s1956 + $0x8] sm:$0xf]
    %v1960 = vld [vmem:[%s1956 + $0xc] sm:$0xf]
    %v1961 = vld [vmem:[%s1956 + $0x10] sm:$0xf]
    %v1962 = vld [vmem:[%s1956 + $0x14] sm:$0xf]
    %v1963 = vld [vmem:[%s1956 + $0x18] sm:$0xf]
    %v1964 = vld [vmem:[%s1956 + $0x1c] sm:$0xf]
    %v1965 = vld [vmem:[%s1956 + $0x20] sm:$0xf]
    %v1966 = vld [vmem:[%s1956 + $0x24] sm:$0xf]
    %v1967 = vld [vmem:[%s1956 + $0x28] sm:$0xf]
    %v1968 = vld [vmem:[%s1956 + $0x2c] sm:$0xf]
    %v1969 = vld [vmem:[%s1956 + $0x30] sm:$0xf]
    %v1970 = vld [vmem:[%s1956 + $0x34] sm:$0xf]
    %v1971 = vld [vmem:[%s1956 + $0x38] sm:$0xf]
    %v1972 = vld [vmem:[%s1956 + $0x3c] sm:$0xf]
    %v1973 = vlaneseq
    %v1974 = vshrl.u32 %v1973, 7
    %v1975 = vsub.s32 7, %v1974
    %v1976 = vrot.slane %v1952, %v1975
    %v1993 = vunpack.c.l.b16 %v1957
    %v1994 = vunpack.c.l.b16 %v1958
    %v1995 = vunpack.c.l.b16 %v1959
    %v1996 = vunpack.c.l.b16 %v1960
    %v1997 = vunpack.c.l.b16 %v1961
    %v1998 = vunpack.c.l.b16 %v1962
    %v1999 = vunpack.c.l.b16 %v1963
    %v2000 = vunpack.c.l.b16 %v1964
    %v2001 = vunpack.c.l.b16 %v1965
    %v2002 = vunpack.c.l.b16 %v1966
    %v2003 = vunpack.c.l.b16 %v1967
    %v2004 = vunpack.c.l.b16 %v1968
    %v2005 = vunpack.c.l.b16 %v1969
    %v2006 = vunpack.c.l.b16 %v1970
    %v2007 = vunpack.c.l.b16 %v1971
    %v2008 = vunpack.c.l.b16 %v1972
    %v2009 = vpack.c.b16 %v1994, %v1993
    %v2010 = vpack.c.b16 %v1996, %v1995
    %v2011 = vpack.c.b16 %v1998, %v1997
    %v2012 = vpack.c.b16 %v2000, %v1999
    %v2013 = vpack.c.b16 %v2002, %v2001
    %v2014 = vpack.c.b16 %v2004, %v2003
    %v2015 = vpack.c.b16 %v2006, %v2005
    %v2016 = vpack.c.b16 %v2008, %v2007
    %2025 = vmatprep.subr.bf16.mxu0 0
    %2026 = vmatpush1.bf16.msra.mxu0 %v2016
    %2027 = vmatprep.subr.bf16.mxu0 0
    %2028 = vmatpush1.bf16.msra.mxu0 %v2015
    %2029 = vmatprep.subr.bf16.mxu0 0
    %2030 = vmatpush1.bf16.msra.mxu0 %v2014
    %2031 = vmatprep.subr.bf16.mxu0 0
    %2032 = vmatpush1.bf16.msra.mxu0 %v2013
    %2033 = vmatprep.subr.bf16.mxu0 0
    %2034 = vmatpush1.bf16.msra.mxu0 %v2012
    %2035 = vmatprep.subr.bf16.mxu0 0
    %2036 = vmatpush1.bf16.msra.mxu0 %v2011
    %2037 = vmatprep.subr.bf16.mxu0 0
    %2038 = vmatpush1.bf16.msra.mxu0 %v2010
    %2039 = vmatprep.subr.bf16.mxu0 0
    %2040 = vmatpush1.bf16.msra.mxu0 %v2009
    %2041 = vmatprep.subr.bf16.mxu0 0
    %2042 = vmatpush2.bf16.msra.mxu0 0
    %2043 = vmatprep.subr.bf16.mxu0 0
    %2044 = vmatpush2.bf16.msra.mxu0 0
    %2045 = vmatprep.subr.bf16.mxu0 0
    %2046 = vmatpush2.bf16.msra.mxu0 0
    %2047 = vmatprep.subr.bf16.mxu0 0
    %2048 = vmatpush2.bf16.msra.mxu0 0
    %2049 = vmatprep.subr.bf16.mxu0 0
    %2050 = vmatpush2.bf16.msra.mxu0 0
    %2051 = vmatprep.subr.bf16.mxu0 0
    %2052 = vmatpush2.bf16.msra.mxu0 0
    %2053 = vmatprep.subr.bf16.mxu0 0
    %2054 = vmatpush2.bf16.msra.mxu0 0
    %2055 = vmatprep.subr.bf16.mxu0 0
    %2056 = vmatpush2.bf16.msra.mxu0 0
    %2057 = vmatprep.mubr.bf16.mxu0 0
    %2058 = vmatmul.mubr.bf16.gmra.mxu0 %v1955
    %v2059 = vpop.f32.mrf.mxu0
    %v2060 = vadd.f32 %v1976, %v2059
    %v2061 = vpop.f32.mrf.mxu0
    %v2062 = vpop.f32.mrf.mxu0
    %v2063 = vadd.f32 %v1976, %v2062
    %v2064 = vpop.f32.mrf.mxu0
    %2065 = vdwg.mxu0
    %s2066 = scalar_lea.vmem %s3, 512
    %v2067 = vld [vmem:[%s2066] sm:$0xf]
    %v2068 = vld [vmem:[%s2066 + $0x4] sm:$0xf]
    %v2069 = vld [vmem:[%s2066 + $0x8] sm:$0xf]
    %v2070 = vld [vmem:[%s2066 + $0xc] sm:$0xf]
    %v2071 = vld [vmem:[%s2066 + $0x10] sm:$0xf]
    %v2072 = vld [vmem:[%s2066 + $0x14] sm:$0xf]
    %v2073 = vld [vmem:[%s2066 + $0x18] sm:$0xf]
    %v2074 = vld [vmem:[%s2066 + $0x1c] sm:$0xf]
    %v2075 = vld [vmem:[%s2066 + $0x20] sm:$0xf]
    %v2076 = vld [vmem:[%s2066 + $0x24] sm:$0xf]
    %v2077 = vld [vmem:[%s2066 + $0x28] sm:$0xf]
    %v2078 = vld [vmem:[%s2066 + $0x2c] sm:$0xf]
    %v2079 = vld [vmem:[%s2066 + $0x30] sm:$0xf]
    %v2080 = vld [vmem:[%s2066 + $0x34] sm:$0xf]
    %v2081 = vld [vmem:[%s2066 + $0x38] sm:$0xf]
    %v2082 = vld [vmem:[%s2066 + $0x3c] sm:$0xf]
    %v2083 = vlaneseq
    %v2084 = vshrl.u32 %v2083, 7
    %v2085 = vsub.s32 1, %v2084
    %v2086 = vrot.slane %v1954, %v2085
    %v2103 = vunpack.c.l.b16 %v2067
    %v2104 = vunpack.c.l.b16 %v2068
    %v2105 = vunpack.c.l.b16 %v2069
    %v2106 = vunpack.c.l.b16 %v2070
    %v2107 = vunpack.c.l.b16 %v2071
    %v2108 = vunpack.c.l.b16 %v2072
    %v2109 = vunpack.c.l.b16 %v2073
    %v2110 = vunpack.c.l.b16 %v2074
    %v2111 = vunpack.c.l.b16 %v2075
    %v2112 = vunpack.c.l.b16 %v2076
    %v2113 = vunpack.c.l.b16 %v2077
    %v2114 = vunpack.c.l.b16 %v2078
    %v2115 = vunpack.c.l.b16 %v2079
    %v2116 = vunpack.c.l.b16 %v2080
    %v2117 = vunpack.c.l.b16 %v2081
    %v2118 = vunpack.c.l.b16 %v2082
    %v2119 = vpack.c.b16 %v2104, %v2103
    %v2120 = vpack.c.b16 %v2106, %v2105
    %v2121 = vpack.c.b16 %v2108, %v2107
    %v2122 = vpack.c.b16 %v2110, %v2109
    %v2123 = vpack.c.b16 %v2112, %v2111
    %v2124 = vpack.c.b16 %v2114, %v2113
    %v2125 = vpack.c.b16 %v2116, %v2115
    %v2126 = vpack.c.b16 %v2118, %v2117
    %2135 = vmatprep.subr.bf16.mxu0 0
    %2136 = vmatpush1.bf16.msra.mxu0 %v2126
    %2137 = vmatprep.subr.bf16.mxu0 0
    %2138 = vmatpush1.bf16.msra.mxu0 %v2125
    %2139 = vmatprep.subr.bf16.mxu0 0
    %2140 = vmatpush1.bf16.msra.mxu0 %v2124
    %2141 = vmatprep.subr.bf16.mxu0 0
    %2142 = vmatpush1.bf16.msra.mxu0 %v2123
    %2143 = vmatprep.subr.bf16.mxu0 0
    %2144 = vmatpush1.bf16.msra.mxu0 %v2122
    %2145 = vmatprep.subr.bf16.mxu0 0
    %2146 = vmatpush1.bf16.msra.mxu0 %v2121
    %2147 = vmatprep.subr.bf16.mxu0 0
    %2148 = vmatpush1.bf16.msra.mxu0 %v2120
    %2149 = vmatprep.subr.bf16.mxu0 0
    %2150 = vmatpush1.bf16.msra.mxu0 %v2119
    %2151 = vmatprep.subr.bf16.mxu0 0
    %2152 = vmatpush2.bf16.msra.mxu0 0
    %2153 = vmatprep.subr.bf16.mxu0 0
    %2154 = vmatpush2.bf16.msra.mxu0 0
    %2155 = vmatprep.subr.bf16.mxu0 0
    %2156 = vmatpush2.bf16.msra.mxu0 0
    %2157 = vmatprep.subr.bf16.mxu0 0
    %2158 = vmatpush2.bf16.msra.mxu0 0
    %2159 = vmatprep.subr.bf16.mxu0 0
    %2160 = vmatpush2.bf16.msra.mxu0 0
    %2161 = vmatprep.subr.bf16.mxu0 0
    %2162 = vmatpush2.bf16.msra.mxu0 0
    %2163 = vmatprep.subr.bf16.mxu0 0
    %2164 = vmatpush2.bf16.msra.mxu0 0
    %2165 = vmatprep.subr.bf16.mxu0 0
    %2166 = vmatpush2.bf16.msra.mxu0 0
    %2167 = vmatprep.mubr.bf16.mxu0 0
    %2168 = vmatmul.mubr.bf16.gmra.mxu0 %v1955
    %v2169 = vpop.f32.mrf.mxu0
    %v2170 = vadd.f32 %v2086, %v2169
    %v2171 = vpop.f32.mrf.mxu0
    %v2172 = vpop.f32.mrf.mxu0
    %v2173 = vadd.f32 %v2086, %v2172
    %v2174 = vpop.f32.mrf.mxu0
    %2175 = vdwg.mxu0
    %s2176 = scalar_lea.vmem %s3, 640
    %v2177 = vld [vmem:[%s2176] sm:$0xf]
    %v2178 = vld [vmem:[%s2176 + $0x4] sm:$0xf]
    %v2179 = vld [vmem:[%s2176 + $0x8] sm:$0xf]
    %v2180 = vld [vmem:[%s2176 + $0xc] sm:$0xf]
    %v2181 = vld [vmem:[%s2176 + $0x10] sm:$0xf]
    %v2182 = vld [vmem:[%s2176 + $0x14] sm:$0xf]
    %v2183 = vld [vmem:[%s2176 + $0x18] sm:$0xf]
    %v2184 = vld [vmem:[%s2176 + $0x1c] sm:$0xf]
    %v2185 = vld [vmem:[%s2176 + $0x20] sm:$0xf]
    %v2186 = vld [vmem:[%s2176 + $0x24] sm:$0xf]
    %v2187 = vld [vmem:[%s2176 + $0x28] sm:$0xf]
    %v2188 = vld [vmem:[%s2176 + $0x2c] sm:$0xf]
    %v2189 = vld [vmem:[%s2176 + $0x30] sm:$0xf]
    %v2190 = vld [vmem:[%s2176 + $0x34] sm:$0xf]
    %v2191 = vld [vmem:[%s2176 + $0x38] sm:$0xf]
    %v2192 = vld [vmem:[%s2176 + $0x3c] sm:$0xf]
    %v2193 = vlaneseq
    %v2194 = vshrl.u32 %v2193, 7
    %v2195 = vsub.s32 3, %v2194
    %v2196 = vrot.slane %v1954, %v2195
    %v2213 = vunpack.c.l.b16 %v2177
    %v2214 = vunpack.c.l.b16 %v2178
    %v2215 = vunpack.c.l.b16 %v2179
    %v2216 = vunpack.c.l.b16 %v2180
    %v2217 = vunpack.c.l.b16 %v2181
    %v2218 = vunpack.c.l.b16 %v2182
    %v2219 = vunpack.c.l.b16 %v2183
    %v2220 = vunpack.c.l.b16 %v2184
    %v2221 = vunpack.c.l.b16 %v2185
    %v2222 = vunpack.c.l.b16 %v2186
    %v2223 = vunpack.c.l.b16 %v2187
    %v2224 = vunpack.c.l.b16 %v2188
    %v2225 = vunpack.c.l.b16 %v2189
    %v2226 = vunpack.c.l.b16 %v2190
    %v2227 = vunpack.c.l.b16 %v2191
    %v2228 = vunpack.c.l.b16 %v2192
    %v2229 = vpack.c.b16 %v2214, %v2213
    %v2230 = vpack.c.b16 %v2216, %v2215
    %v2231 = vpack.c.b16 %v2218, %v2217
    %v2232 = vpack.c.b16 %v2220, %v2219
    %v2233 = vpack.c.b16 %v2222, %v2221
    %v2234 = vpack.c.b16 %v2224, %v2223
    %v2235 = vpack.c.b16 %v2226, %v2225
    %v2236 = vpack.c.b16 %v2228, %v2227
    %2245 = vmatprep.subr.bf16.mxu0 0
    %2246 = vmatpush1.bf16.msra.mxu0 %v2236
    %2247 = vmatprep.subr.bf16.mxu0 0
    %2248 = vmatpush1.bf16.msra.mxu0 %v2235
    %2249 = vmatprep.subr.bf16.mxu0 0
    %2250 = vmatpush1.bf16.msra.mxu0 %v2234
    %2251 = vmatprep.subr.bf16.mxu0 0
    %2252 = vmatpush1.bf16.msra.mxu0 %v2233
    %2253 = vmatprep.subr.bf16.mxu0 0
    %2254 = vmatpush1.bf16.msra.mxu0 %v2232
    %2255 = vmatprep.subr.bf16.mxu0 0
    %2256 = vmatpush1.bf16.msra.mxu0 %v2231
    %2257 = vmatprep.subr.bf16.mxu0 0
    %2258 = vmatpush1.bf16.msra.mxu0 %v2230
    %2259 = vmatprep.subr.bf16.mxu0 0
    %2260 = vmatpush1.bf16.msra.mxu0 %v2229
    %2261 = vmatprep.subr.bf16.mxu0 0
    %2262 = vmatpush2.bf16.msra.mxu0 0
    %2263 = vmatprep.subr.bf16.mxu0 0
    %2264 = vmatpush2.bf16.msra.mxu0 0
    %2265 = vmatprep.subr.bf16.mxu0 0
    %2266 = vmatpush2.bf16.msra.mxu0 0
    %2267 = vmatprep.subr.bf16.mxu0 0
    %2268 = vmatpush2.bf16.msra.mxu0 0
    %2269 = vmatprep.subr.bf16.mxu0 0
    %2270 = vmatpush2.bf16.msra.mxu0 0
    %2271 = vmatprep.subr.bf16.mxu0 0
    %2272 = vmatpush2.bf16.msra.mxu0 0
    %2273 = vmatprep.subr.bf16.mxu0 0
    %2274 = vmatpush2.bf16.msra.mxu0 0
    %2275 = vmatprep.subr.bf16.mxu0 0
    %2276 = vmatpush2.bf16.msra.mxu0 0
    %2277 = vmatprep.mubr.bf16.mxu0 0
    %2278 = vmatmul.mubr.bf16.gmra.mxu0 %v1955
    %v2279 = vpop.f32.mrf.mxu0
    %v2280 = vadd.f32 %v2196, %v2279
    %v2281 = vpop.f32.mrf.mxu0
    %v2282 = vpop.f32.mrf.mxu0
    %v2283 = vadd.f32 %v2196, %v2282
    %v2284 = vpop.f32.mrf.mxu0
    %2285 = vdwg.mxu0
    %s2286 = scalar_lea.vmem %s3, 448
    %v2287 = vld [vmem:[%s2286] sm:$0xf]
    %v2288 = vld [vmem:[%s2286 + $0x4] sm:$0xf]
    %v2289 = vld [vmem:[%s2286 + $0x8] sm:$0xf]
    %v2290 = vld [vmem:[%s2286 + $0xc] sm:$0xf]
    %v2291 = vld [vmem:[%s2286 + $0x10] sm:$0xf]
    %v2292 = vld [vmem:[%s2286 + $0x14] sm:$0xf]
    %v2293 = vld [vmem:[%s2286 + $0x18] sm:$0xf]
    %v2294 = vld [vmem:[%s2286 + $0x1c] sm:$0xf]
    %v2295 = vld [vmem:[%s2286 + $0x20] sm:$0xf]
    %v2296 = vld [vmem:[%s2286 + $0x24] sm:$0xf]
    %v2297 = vld [vmem:[%s2286 + $0x28] sm:$0xf]
    %v2298 = vld [vmem:[%s2286 + $0x2c] sm:$0xf]
    %v2299 = vld [vmem:[%s2286 + $0x30] sm:$0xf]
    %v2300 = vld [vmem:[%s2286 + $0x34] sm:$0xf]
    %v2301 = vld [vmem:[%s2286 + $0x38] sm:$0xf]
    %v2302 = vld [vmem:[%s2286 + $0x3c] sm:$0xf]
    %v2303 = vlaneseq
    %v2304 = vshrl.u32 %v2303, 7
    %v2305 = vsub.s32 0, %v2304
    %v2306 = vrot.slane %v1954, %v2305
    %v2323 = vunpack.c.l.b16 %v2287
    %v2324 = vunpack.c.l.b16 %v2288
    %v2325 = vunpack.c.l.b16 %v2289
    %v2326 = vunpack.c.l.b16 %v2290
    %v2327 = vunpack.c.l.b16 %v2291
    %v2328 = vunpack.c.l.b16 %v2292
    %v2329 = vunpack.c.l.b16 %v2293
    %v2330 = vunpack.c.l.b16 %v2294
    %v2331 = vunpack.c.l.b16 %v2295
    %v2332 = vunpack.c.l.b16 %v2296
    %v2333 = vunpack.c.l.b16 %v2297
    %v2334 = vunpack.c.l.b16 %v2298
    %v2335 = vunpack.c.l.b16 %v2299
    %v2336 = vunpack.c.l.b16 %v2300
    %v2337 = vunpack.c.l.b16 %v2301
    %v2338 = vunpack.c.l.b16 %v2302
    %v2339 = vpack.c.b16 %v2324, %v2323
    %v2340 = vpack.c.b16 %v2326, %v2325
    %v2341 = vpack.c.b16 %v2328, %v2327
    %v2342 = vpack.c.b16 %v2330, %v2329
    %v2343 = vpack.c.b16 %v2332, %v2331
    %v2344 = vpack.c.b16 %v2334, %v2333
    %v2345 = vpack.c.b16 %v2336, %v2335
    %v2346 = vpack.c.b16 %v2338, %v2337
    %2355 = vmatprep.subr.bf16.mxu0 0
    %2356 = vmatpush1.bf16.msra.mxu0 %v2346
    %2357 = vmatprep.subr.bf16.mxu0 0
    %2358 = vmatpush1.bf16.msra.mxu0 %v2345
    %2359 = vmatprep.subr.bf16.mxu0 0
    %2360 = vmatpush1.bf16.msra.mxu0 %v2344
    %2361 = vmatprep.subr.bf16.mxu0 0
    %2362 = vmatpush1.bf16.msra.mxu0 %v2343
    %2363 = vmatprep.subr.bf16.mxu0 0
    %2364 = vmatpush1.bf16.msra.mxu0 %v2342
    %2365 = vmatprep.subr.bf16.mxu0 0
    %2366 = vmatpush1.bf16.msra.mxu0 %v2341
    %2367 = vmatprep.subr.bf16.mxu0 0
    %2368 = vmatpush1.bf16.msra.mxu0 %v2340
    %2369 = vmatprep.subr.bf16.mxu0 0
    %2370 = vmatpush1.bf16.msra.mxu0 %v2339
    %2371 = vmatprep.subr.bf16.mxu0 0
    %2372 = vmatpush2.bf16.msra.mxu0 0
    %2373 = vmatprep.subr.bf16.mxu0 0
    %2374 = vmatpush2.bf16.msra.mxu0 0
    %2375 = vmatprep.subr.bf16.mxu0 0
    %2376 = vmatpush2.bf16.msra.mxu0 0
    %2377 = vmatprep.subr.bf16.mxu0 0
    %2378 = vmatpush2.bf16.msra.mxu0 0
    %2379 = vmatprep.subr.bf16.mxu0 0
    %2380 = vmatpush2.bf16.msra.mxu0 0
    %2381 = vmatprep.subr.bf16.mxu0 0
    %2382 = vmatpush2.bf16.msra.mxu0 0
    %2383 = vmatprep.subr.bf16.mxu0 0
    %2384 = vmatpush2.bf16.msra.mxu0 0
    %2385 = vmatprep.subr.bf16.mxu0 0
    %2386 = vmatpush2.bf16.msra.mxu0 0
    %2387 = vmatprep.mubr.bf16.mxu0 0
    %2388 = vmatmul.mubr.bf16.gmra.mxu0 %v1955
    %v2389 = vpop.f32.mrf.mxu0
    %v2390 = vadd.f32 %v2306, %v2389
    %v2391 = vpop.f32.mrf.mxu0
    %v2392 = vpop.f32.mrf.mxu0
    %v2393 = vadd.f32 %v2306, %v2392
    %v2394 = vpop.f32.mrf.mxu0
    %2395 = vdwg.mxu0
    %s2396 = scalar_lea.vmem %s3, 576
    %v2397 = vld [vmem:[%s2396] sm:$0xf]
    %v2398 = vld [vmem:[%s2396 + $0x4] sm:$0xf]
    %v2399 = vld [vmem:[%s2396 + $0x8] sm:$0xf]
    %v2400 = vld [vmem:[%s2396 + $0xc] sm:$0xf]
    %v2401 = vld [vmem:[%s2396 + $0x10] sm:$0xf]
    %v2402 = vld [vmem:[%s2396 + $0x14] sm:$0xf]
    %v2403 = vld [vmem:[%s2396 + $0x18] sm:$0xf]
    %v2404 = vld [vmem:[%s2396 + $0x1c] sm:$0xf]
    %v2405 = vld [vmem:[%s2396 + $0x20] sm:$0xf]
    %v2406 = vld [vmem:[%s2396 + $0x24] sm:$0xf]
    %v2407 = vld [vmem:[%s2396 + $0x28] sm:$0xf]
    %v2408 = vld [vmem:[%s2396 + $0x2c] sm:$0xf]
    %v2409 = vld [vmem:[%s2396 + $0x30] sm:$0xf]
    %v2410 = vld [vmem:[%s2396 + $0x34] sm:$0xf]
    %v2411 = vld [vmem:[%s2396 + $0x38] sm:$0xf]
    %v2412 = vld [vmem:[%s2396 + $0x3c] sm:$0xf]
    %v2413 = vlaneseq
    %v2414 = vshrl.u32 %v2413, 7
    %v2415 = vsub.s32 2, %v2414
    %v2416 = vrot.slane %v1954, %v2415
    %v2433 = vunpack.c.l.b16 %v2397
    %v2434 = vunpack.c.l.b16 %v2398
    %v2435 = vunpack.c.l.b16 %v2399
    %v2436 = vunpack.c.l.b16 %v2400
    %v2437 = vunpack.c.l.b16 %v2401
    %v2438 = vunpack.c.l.b16 %v2402
    %v2439 = vunpack.c.l.b16 %v2403
    %v2440 = vunpack.c.l.b16 %v2404
    %v2441 = vunpack.c.l.b16 %v2405
    %v2442 = vunpack.c.l.b16 %v2406
    %v2443 = vunpack.c.l.b16 %v2407
    %v2444 = vunpack.c.l.b16 %v2408
    %v2445 = vunpack.c.l.b16 %v2409
    %v2446 = vunpack.c.l.b16 %v2410
    %v2447 = vunpack.c.l.b16 %v2411
    %v2448 = vunpack.c.l.b16 %v2412
    %v2449 = vpack.c.b16 %v2434, %v2433
    %v2450 = vpack.c.b16 %v2436, %v2435
    %v2451 = vpack.c.b16 %v2438, %v2437
    %v2452 = vpack.c.b16 %v2440, %v2439
    %v2453 = vpack.c.b16 %v2442, %v2441
    %v2454 = vpack.c.b16 %v2444, %v2443
    %v2455 = vpack.c.b16 %v2446, %v2445
    %v2456 = vpack.c.b16 %v2448, %v2447
    %2465 = vmatprep.subr.bf16.mxu0 0
    %2466 = vmatpush1.bf16.msra.mxu0 %v2456
    %2467 = vmatprep.subr.bf16.mxu0 0
    %2468 = vmatpush1.bf16.msra.mxu0 %v2455
    %2469 = vmatprep.subr.bf16.mxu0 0
    %2470 = vmatpush1.bf16.msra.mxu0 %v2454
    %2471 = vmatprep.subr.bf16.mxu0 0
    %2472 = vmatpush1.bf16.msra.mxu0 %v2453
    %2473 = vmatprep.subr.bf16.mxu0 0
    %2474 = vmatpush1.bf16.msra.mxu0 %v2452
    %2475 = vmatprep.subr.bf16.mxu0 0
    %2476 = vmatpush1.bf16.msra.mxu0 %v2451
    %2477 = vmatprep.subr.bf16.mxu0 0
    %2478 = vmatpush1.bf16.msra.mxu0 %v2450
    %2479 = vmatprep.subr.bf16.mxu0 0
    %2480 = vmatpush1.bf16.msra.mxu0 %v2449
    %2481 = vmatprep.subr.bf16.mxu0 0
    %2482 = vmatpush2.bf16.msra.mxu0 0
    %2483 = vmatprep.subr.bf16.mxu0 0
    %2484 = vmatpush2.bf16.msra.mxu0 0
    %2485 = vmatprep.subr.bf16.mxu0 0
    %2486 = vmatpush2.bf16.msra.mxu0 0
    %2487 = vmatprep.subr.bf16.mxu0 0
    %2488 = vmatpush2.bf16.msra.mxu0 0
    %2489 = vmatprep.subr.bf16.mxu0 0
    %2490 = vmatpush2.bf16.msra.mxu0 0
    %2491 = vmatprep.subr.bf16.mxu0 0
    %2492 = vmatpush2.bf16.msra.mxu0 0
    %2493 = vmatprep.subr.bf16.mxu0 0
    %2494 = vmatpush2.bf16.msra.mxu0 0
    %2495 = vmatprep.subr.bf16.mxu0 0
    %2496 = vmatpush2.bf16.msra.mxu0 0
    %2497 = vmatprep.mubr.bf16.mxu0 0
    %2498 = vmatmul.mubr.bf16.gmra.mxu0 %v1955
    %v2499 = vpop.f32.mrf.mxu0
    %v2500 = vadd.f32 %v2416, %v2499
    %v2501 = vpop.f32.mrf.mxu0
    %v2502 = vpop.f32.mrf.mxu0
    %v2503 = vadd.f32 %v2416, %v2502
    %v2504 = vpop.f32.mrf.mxu0
    %2505 = vdwg.mxu0
    %s2506 = scalar_lea.vmem %s3, 704
    %v2507 = vld [vmem:[%s2506] sm:$0xf]
    %v2508 = vld [vmem:[%s2506 + $0x4] sm:$0xf]
    %v2509 = vld [vmem:[%s2506 + $0x8] sm:$0xf]
    %v2510 = vld [vmem:[%s2506 + $0xc] sm:$0xf]
    %v2511 = vld [vmem:[%s2506 + $0x10] sm:$0xf]
    %v2512 = vld [vmem:[%s2506 + $0x14] sm:$0xf]
    %v2513 = vld [vmem:[%s2506 + $0x18] sm:$0xf]
    %v2514 = vld [vmem:[%s2506 + $0x1c] sm:$0xf]
    %v2515 = vld [vmem:[%s2506 + $0x20] sm:$0xf]
    %v2516 = vld [vmem:[%s2506 + $0x24] sm:$0xf]
    %v2517 = vld [vmem:[%s2506 + $0x28] sm:$0xf]
    %v2518 = vld [vmem:[%s2506 + $0x2c] sm:$0xf]
    %v2519 = vld [vmem:[%s2506 + $0x30] sm:$0xf]
    %v2520 = vld [vmem:[%s2506 + $0x34] sm:$0xf]
    %v2521 = vld [vmem:[%s2506 + $0x38] sm:$0xf]
    %v2522 = vld [vmem:[%s2506 + $0x3c] sm:$0xf]
    %v2523 = vlaneseq
    %v2524 = vshrl.u32 %v2523, 7
    %v2525 = vsub.s32 4, %v2524
    %v2526 = vrot.slane %v1954, %v2525
    %v2543 = vunpack.c.l.b16 %v2507
    %v2544 = vunpack.c.l.b16 %v2508
    %v2545 = vunpack.c.l.b16 %v2509
    %v2546 = vunpack.c.l.b16 %v2510
    %v2547 = vunpack.c.l.b16 %v2511
    %v2548 = vunpack.c.l.b16 %v2512
    %v2549 = vunpack.c.l.b16 %v2513
    %v2550 = vunpack.c.l.b16 %v2514
    %v2551 = vunpack.c.l.b16 %v2515
    %v2552 = vunpack.c.l.b16 %v2516
    %v2553 = vunpack.c.l.b16 %v2517
    %v2554 = vunpack.c.l.b16 %v2518
    %v2555 = vunpack.c.l.b16 %v2519
    %v2556 = vunpack.c.l.b16 %v2520
    %v2557 = vunpack.c.l.b16 %v2521
    %v2558 = vunpack.c.l.b16 %v2522
    %v2559 = vpack.c.b16 %v2544, %v2543
    %v2560 = vpack.c.b16 %v2546, %v2545
    %v2561 = vpack.c.b16 %v2548, %v2547
    %v2562 = vpack.c.b16 %v2550, %v2549
    %v2563 = vpack.c.b16 %v2552, %v2551
    %v2564 = vpack.c.b16 %v2554, %v2553
    %v2565 = vpack.c.b16 %v2556, %v2555
    %v2566 = vpack.c.b16 %v2558, %v2557
    %2575 = vmatprep.subr.bf16.mxu0 0
    %2576 = vmatpush1.bf16.msra.mxu0 %v2566
    %2577 = vmatprep.subr.bf16.mxu0 0
    %2578 = vmatpush1.bf16.msra.mxu0 %v2565
    %2579 = vmatprep.subr.bf16.mxu0 0
    %2580 = vmatpush1.bf16.msra.mxu0 %v2564
    %2581 = vmatprep.subr.bf16.mxu0 0
    %2582 = vmatpush1.bf16.msra.mxu0 %v2563
    %2583 = vmatprep.subr.bf16.mxu0 0
    %2584 = vmatpush1.bf16.msra.mxu0 %v2562
    %2585 = vmatprep.subr.bf16.mxu0 0
    %2586 = vmatpush1.bf16.msra.mxu0 %v2561
    %2587 = vmatprep.subr.bf16.mxu0 0
    %2588 = vmatpush1.bf16.msra.mxu0 %v2560
    %2589 = vmatprep.subr.bf16.mxu0 0
    %2590 = vmatpush1.bf16.msra.mxu0 %v2559
    %2591 = vmatprep.subr.bf16.mxu0 0
    %2592 = vmatpush2.bf16.msra.mxu0 0
    %2593 = vmatprep.subr.bf16.mxu0 0
    %2594 = vmatpush2.bf16.msra.mxu0 0
    %2595 = vmatprep.subr.bf16.mxu0 0
    %2596 = vmatpush2.bf16.msra.mxu0 0
    %2597 = vmatprep.subr.bf16.mxu0 0
    %2598 = vmatpush2.bf16.msra.mxu0 0
    %2599 = vmatprep.subr.bf16.mxu0 0
    %2600 = vmatpush2.bf16.msra.mxu0 0
    %2601 = vmatprep.subr.bf16.mxu0 0
    %2602 = vmatpush2.bf16.msra.mxu0 0
    %2603 = vmatprep.subr.bf16.mxu0 0
    %2604 = vmatpush2.bf16.msra.mxu0 0
    %2605 = vmatprep.subr.bf16.mxu0 0
    %2606 = vmatpush2.bf16.msra.mxu0 0
    %2607 = vmatprep.mubr.bf16.mxu0 0
    %2608 = vmatmul.mubr.bf16.gmra.mxu0 %v1955
    %v2609 = vpop.f32.mrf.mxu0
    %v2610 = vadd.f32 %v2526, %v2609
    %v2611 = vpop.f32.mrf.mxu0
    %v2612 = vpop.f32.mrf.mxu0
    %v2613 = vadd.f32 %v2526, %v2612
    %v2614 = vpop.f32.mrf.mxu0
    %2615 = vdwg.mxu0
    %v2616 = vpack.c.bf16 %v2060, %v2060
    %v2617 = vpack.c.bf16 %v2170, %v2170
    %v2618 = vpack.c.bf16 %v2280, %v2280
    %v2620 = vsel %vm80, %v2616, 0
    %v2623 = vsel %vm80, %v2617, 0
    %2625 = vmatprep.subr.bf16.mxu0 0
    %2626 = vmatpush1.bf16.xpose.msra.mxu0 0
    %2627 = vmatprep.subr.bf16.mxu0 0
    %2628 = vmatpush1.bf16.xpose.msra.mxu0 0
    %2629 = vmatprep.subr.bf16.mxu0 0
    %2630 = vmatpush1.bf16.xpose.msra.mxu0 0
    %2631 = vmatprep.subr.bf16.mxu0 0
    %2632 = vmatpush1.bf16.xpose.msra.mxu0 0
    %2633 = vmatprep.subr.bf16.mxu0 0
    %2634 = vmatpush1.bf16.xpose.msra.mxu0 0
    %2635 = vmatprep.subr.bf16.mxu0 0
    %2636 = vmatpush1.bf16.xpose.msra.mxu0 0
    %2637 = vmatprep.subr.bf16.mxu0 0
    %2638 = vmatpush1.bf16.xpose.msra.mxu0 0
    %2639 = vmatprep.subr.bf16.mxu0 0
    %2640 = vmatpush1.bf16.xpose.msra.mxu0 %v2623
    %2641 = vmatprep.subr.bf16.mxu0 0
    %2642 = vmatpush2.bf16.xpose.msra.mxu0 0
    %2643 = vmatprep.subr.bf16.mxu0 0
    %2644 = vmatpush2.bf16.xpose.msra.mxu0 0
    %2645 = vmatprep.subr.bf16.mxu0 0
    %2646 = vmatpush2.bf16.xpose.msra.mxu0 0
    %2647 = vmatprep.subr.bf16.mxu0 0
    %2648 = vmatpush2.bf16.xpose.msra.mxu0 0
    %2649 = vmatprep.subr.bf16.mxu0 0
    %2650 = vmatpush2.bf16.xpose.msra.mxu0 0
    %2651 = vmatprep.subr.bf16.mxu0 0
    %2652 = vmatpush2.bf16.xpose.msra.mxu0 0
    %2653 = vmatprep.subr.bf16.mxu0 0
    %2654 = vmatpush2.bf16.xpose.msra.mxu0 0
    %2655 = vmatprep.subr.bf16.mxu0 0
    %2656 = vmatpush2.bf16.xpose.msra.mxu0 0
    %2657 = vmatprep.mubr.bf16.mxu0 0
    %2658 = vmatmul.mubr.bf16.gmra.mxu0 %v2620
    %v2659 = vpop.f32.mrf.mxu0
    %v2660 = vadd.f32 0.0, %v2659
    %v2661 = vpop.f32.mrf.mxu0
    %v2662 = vpop.f32.mrf.mxu0
    %v2663 = vpop.f32.mrf.mxu0
    %2664 = vdwg.mxu0
    %v2665 = vmul.f32 %v2660, 0.125
    %v2666 = vadd.f32 %v2665, %v880
    %v2667 = vsel %vm882, %v2666, -inf
    %2668 = vmax.xlane.f32.xlu0 %v2667
    %v2669 = vpop.xlane.xlu0 %2668
    %v2670 = vsub.f32 %v2666, %v2669
    %v2671 = vmul.f32 %v2670, 1.442695
    %v2672 = vpow.pop %v2671
    %v2673 = vsel %vm882, %v2672, 0.0
    %2674 = vadd.xlane.f32.xlu0 %v2673
    %v2675 = vpop.xlane.xlu0 %2674
    %v2676 = vrcp.pop %v2675
    %v2677 = vmul.f32 %v2672, %v2676
    %v2678 = vpack.c.bf16 %v2677, %v2677
    %v2680 = vsel %vm882, %v2678, 0
    %v2683 = vsel %vm898, %v2618, 0
    %2685 = vmatprep.subr.bf16.mxu0 0
    %2686 = vmatpush1.bf16.msra.mxu0 0
    %2687 = vmatprep.subr.bf16.mxu0 0
    %2688 = vmatpush1.bf16.msra.mxu0 0
    %2689 = vmatprep.subr.bf16.mxu0 0
    %2690 = vmatpush1.bf16.msra.mxu0 0
    %2691 = vmatprep.subr.bf16.mxu0 0
    %2692 = vmatpush1.bf16.msra.mxu0 0
    %2693 = vmatprep.subr.bf16.mxu0 0
    %2694 = vmatpush1.bf16.msra.mxu0 0
    %2695 = vmatprep.subr.bf16.mxu0 0
    %2696 = vmatpush1.bf16.msra.mxu0 0
    %2697 = vmatprep.subr.bf16.mxu0 0
    %2698 = vmatpush1.bf16.msra.mxu0 0
    %2699 = vmatprep.subr.bf16.mxu0 0
    %2700 = vmatpush1.bf16.msra.mxu0 %v2683
    %2701 = vmatprep.subr.bf16.mxu0 0
    %2702 = vmatpush2.bf16.msra.mxu0 0
    %2703 = vmatprep.subr.bf16.mxu0 0
    %2704 = vmatpush2.bf16.msra.mxu0 0
    %2705 = vmatprep.subr.bf16.mxu0 0
    %2706 = vmatpush2.bf16.msra.mxu0 0
    %2707 = vmatprep.subr.bf16.mxu0 0
    %2708 = vmatpush2.bf16.msra.mxu0 0
    %2709 = vmatprep.subr.bf16.mxu0 0
    %2710 = vmatpush2.bf16.msra.mxu0 0
    %2711 = vmatprep.subr.bf16.mxu0 0
    %2712 = vmatpush2.bf16.msra.mxu0 0
    %2713 = vmatprep.subr.bf16.mxu0 0
    %2714 = vmatpush2.bf16.msra.mxu0 0
    %2715 = vmatprep.subr.bf16.mxu0 0
    %2716 = vmatpush2.bf16.msra.mxu0 0
    %2717 = vmatprep.mubr.bf16.mxu0 0
    %2718 = vmatmul.mubr.bf16.gmra.mxu0 %v2680
    %v2719 = vpop.f32.mrf.mxu0
    %v2720 = vadd.f32 0.0, %v2719
    %v2721 = vpop.f32.mrf.mxu0
    %v2722 = vpop.f32.mrf.mxu0
    %v2723 = vpop.f32.mrf.mxu0
    %2724 = vdwg.mxu0
    %v2725 = vpack.c.bf16 %v2720, %v2720
    %s2726 = scalar_lea.vmem %s4, 64
    %v2727 = vld [vmem:[%s2726] sm:$0xf]
    %v2728 = vld [vmem:[%s2726 + $0x4] sm:$0xf]
    %v2729 = vld [vmem:[%s2726 + $0x8] sm:$0xf]
    %v2730 = vld [vmem:[%s2726 + $0xc] sm:$0xf]
    %v2731 = vld [vmem:[%s2726 + $0x10] sm:$0xf]
    %v2732 = vld [vmem:[%s2726 + $0x14] sm:$0xf]
    %v2733 = vld [vmem:[%s2726 + $0x18] sm:$0xf]
    %v2734 = vld [vmem:[%s2726 + $0x1c] sm:$0xf]
    %v2735 = vpack.c.bf16 %v2390, %v2390
    %v2736 = vpack.c.bf16 %v2500, %v2500
    %v2737 = vpack.c.bf16 %v2610, %v2610
    %v2739 = vsel %vm80, %v2735, 0
    %v2742 = vsel %vm80, %v2736, 0
    %2744 = vmatprep.subr.bf16.mxu0 0
    %2745 = vmatpush1.bf16.xpose.msra.mxu0 0
    %2746 = vmatprep.subr.bf16.mxu0 0
    %2747 = vmatpush1.bf16.xpose.msra.mxu0 0
    %2748 = vmatprep.subr.bf16.mxu0 0
    %2749 = vmatpush1.bf16.xpose.msra.mxu0 0
    %2750 = vmatprep.subr.bf16.mxu0 0
    %2751 = vmatpush1.bf16.xpose.msra.mxu0 0
    %2752 = vmatprep.subr.bf16.mxu0 0
    %2753 = vmatpush1.bf16.xpose.msra.mxu0 0
    %2754 = vmatprep.subr.bf16.mxu0 0
    %2755 = vmatpush1.bf16.xpose.msra.mxu0 0
    %2756 = vmatprep.subr.bf16.mxu0 0
    %2757 = vmatpush1.bf16.xpose.msra.mxu0 0
    %2758 = vmatprep.subr.bf16.mxu0 0
    %2759 = vmatpush1.bf16.xpose.msra.mxu0 %v2742
    %2760 = vmatprep.subr.bf16.mxu0 0
    %2761 = vmatpush2.bf16.xpose.msra.mxu0 0
    %2762 = vmatprep.subr.bf16.mxu0 0
    %2763 = vmatpush2.bf16.xpose.msra.mxu0 0
    %2764 = vmatprep.subr.bf16.mxu0 0
    %2765 = vmatpush2.bf16.xpose.msra.mxu0 0
    %2766 = vmatprep.subr.bf16.mxu0 0
    %2767 = vmatpush2.bf16.xpose.msra.mxu0 0
    %2768 = vmatprep.subr.bf16.mxu0 0
    %2769 = vmatpush2.bf16.xpose.msra.mxu0 0
    %2770 = vmatprep.subr.bf16.mxu0 0
    %2771 = vmatpush2.bf16.xpose.msra.mxu0 0
    %2772 = vmatprep.subr.bf16.mxu0 0
    %2773 = vmatpush2.bf16.xpose.msra.mxu0 0
    %2774 = vmatprep.subr.bf16.mxu0 0
    %2775 = vmatpush2.bf16.xpose.msra.mxu0 0
    %2776 = vmatprep.mubr.bf16.mxu0 0
    %2777 = vmatmul.mubr.bf16.gmra.mxu0 %v2739
    %v2778 = vpop.f32.mrf.mxu0
    %v2779 = vadd.f32 0.0, %v2778
    %v2780 = vpop.f32.mrf.mxu0
    %v2781 = vpop.f32.mrf.mxu0
    %v2782 = vpop.f32.mrf.mxu0
    %2783 = vdwg.mxu0
    %v2784 = vmul.f32 %v2779, 0.125
    %v2785 = vadd.f32 %v2784, %v880
    %v2786 = vsel %vm882, %v2785, -inf
    %2787 = vmax.xlane.f32.xlu0 %v2786
    %v2788 = vpop.xlane.xlu0 %2787
    %v2789 = vsub.f32 %v2785, %v2788
    %v2790 = vmul.f32 %v2789, 1.442695
    %v2791 = vpow.pop %v2790
    %v2792 = vsel %vm882, %v2791, 0.0
    %2793 = vadd.xlane.f32.xlu0 %v2792
    %v2794 = vpop.xlane.xlu0 %2793
    %v2795 = vrcp.pop %v2794
    %v2796 = vmul.f32 %v2791, %v2795
    %v2797 = vpack.c.bf16 %v2796, %v2796
    %v2799 = vsel %vm882, %v2797, 0
    %v2802 = vsel %vm898, %v2737, 0
    %2804 = vmatprep.subr.bf16.mxu0 0
    %2805 = vmatpush1.bf16.msra.mxu0 0
    %2806 = vmatprep.subr.bf16.mxu0 0
    %2807 = vmatpush1.bf16.msra.mxu0 0
    %2808 = vmatprep.subr.bf16.mxu0 0
    %2809 = vmatpush1.bf16.msra.mxu0 0
    %2810 = vmatprep.subr.bf16.mxu0 0
    %2811 = vmatpush1.bf16.msra.mxu0 0
    %2812 = vmatprep.subr.bf16.mxu0 0
    %2813 = vmatpush1.bf16.msra.mxu0 0
    %2814 = vmatprep.subr.bf16.mxu0 0
    %2815 = vmatpush1.bf16.msra.mxu0 0
    %2816 = vmatprep.subr.bf16.mxu0 0
    %2817 = vmatpush1.bf16.msra.mxu0 0
    %2818 = vmatprep.subr.bf16.mxu0 0
    %2819 = vmatpush1.bf16.msra.mxu0 %v2802
    %2820 = vmatprep.subr.bf16.mxu0 0
    %2821 = vmatpush2.bf16.msra.mxu0 0
    %2822 = vmatprep.subr.bf16.mxu0 0
    %2823 = vmatpush2.bf16.msra.mxu0 0
    %2824 = vmatprep.subr.bf16.mxu0 0
    %2825 = vmatpush2.bf16.msra.mxu0 0
    %2826 = vmatprep.subr.bf16.mxu0 0
    %2827 = vmatpush2.bf16.msra.mxu0 0
    %2828 = vmatprep.subr.bf16.mxu0 0
    %2829 = vmatpush2.bf16.msra.mxu0 0
    %2830 = vmatprep.subr.bf16.mxu0 0
    %2831 = vmatpush2.bf16.msra.mxu0 0
    %2832 = vmatprep.subr.bf16.mxu0 0
    %2833 = vmatpush2.bf16.msra.mxu0 0
    %2834 = vmatprep.subr.bf16.mxu0 0
    %2835 = vmatpush2.bf16.msra.mxu0 0
    %2836 = vmatprep.mubr.bf16.mxu0 0
    %2837 = vmatmul.mubr.bf16.gmra.mxu0 %v2799
    %v2838 = vpop.f32.mrf.mxu0
    %v2839 = vadd.f32 0.0, %v2838
    %v2840 = vpop.f32.mrf.mxu0
    %v2841 = vpop.f32.mrf.mxu0
    %v2842 = vpop.f32.mrf.mxu0
    %2843 = vdwg.mxu0
    %v2844 = vpack.c.bf16 %v2839, %v2839
    %s2845 = scalar_lea.vmem %s4, 96
    %v2846 = vld [vmem:[%s2845] sm:$0xf]
    %v2847 = vld [vmem:[%s2845 + $0x4] sm:$0xf]
    %v2848 = vld [vmem:[%s2845 + $0x8] sm:$0xf]
    %v2849 = vld [vmem:[%s2845 + $0xc] sm:$0xf]
    %v2850 = vld [vmem:[%s2845 + $0x10] sm:$0xf]
    %v2851 = vld [vmem:[%s2845 + $0x14] sm:$0xf]
    %v2852 = vld [vmem:[%s2845 + $0x18] sm:$0xf]
    %v2853 = vld [vmem:[%s2845 + $0x1c] sm:$0xf]
    %v2862 = vunpack.c.l.b16 %v2846
    %v2863 = vunpack.c.l.b16 %v2847
    %v2864 = vunpack.c.l.b16 %v2848
    %v2865 = vunpack.c.l.b16 %v2849
    %v2866 = vunpack.c.l.b16 %v2850
    %v2867 = vunpack.c.l.b16 %v2851
    %v2868 = vunpack.c.l.b16 %v2852
    %v2869 = vunpack.c.l.b16 %v2853
    %v2870 = vpack.c.b16 %v2863, %v2862
    %v2871 = vpack.c.b16 %v2865, %v2864
    %v2872 = vpack.c.b16 %v2867, %v2866
    %v2873 = vpack.c.b16 %v2869, %v2868
    %v2879 = vsel %vm80, %v2844, 0
    %2881 = vmatprep.subr.bf16.mxu0 0
    %2882 = vmatpush1.bf16.msra.mxu0 0
    %2883 = vmatprep.subr.bf16.mxu0 0
    %2884 = vmatpush1.bf16.msra.mxu0 0
    %2885 = vmatprep.subr.bf16.mxu0 0
    %2886 = vmatpush1.bf16.msra.mxu0 0
    %2887 = vmatprep.subr.bf16.mxu0 0
    %2888 = vmatpush1.bf16.msra.mxu0 0
    %2889 = vmatprep.subr.bf16.mxu0 0
    %2890 = vmatpush1.bf16.msra.mxu0 %v2873
    %2891 = vmatprep.subr.bf16.mxu0 0
    %2892 = vmatpush1.bf16.msra.mxu0 %v2872
    %2893 = vmatprep.subr.bf16.mxu0 0
    %2894 = vmatpush1.bf16.msra.mxu0 %v2871
    %2895 = vmatprep.subr.bf16.mxu0 0
    %2896 = vmatpush1.bf16.msra.mxu0 %v2870
    %2897 = vmatprep.subr.bf16.mxu0 0
    %2898 = vmatpush2.bf16.msra.mxu0 0
    %2899 = vmatprep.subr.bf16.mxu0 0
    %2900 = vmatpush2.bf16.msra.mxu0 0
    %2901 = vmatprep.subr.bf16.mxu0 0
    %2902 = vmatpush2.bf16.msra.mxu0 0
    %2903 = vmatprep.subr.bf16.mxu0 0
    %2904 = vmatpush2.bf16.msra.mxu0 0
    %2905 = vmatprep.subr.bf16.mxu0 0
    %2906 = vmatpush2.bf16.msra.mxu0 0
    %2907 = vmatprep.subr.bf16.mxu0 0
    %2908 = vmatpush2.bf16.msra.mxu0 0
    %2909 = vmatprep.subr.bf16.mxu0 0
    %2910 = vmatpush2.bf16.msra.mxu0 0
    %2911 = vmatprep.subr.bf16.mxu0 0
    %2912 = vmatpush2.bf16.msra.mxu0 0
    %2913 = vmatprep.mubr.bf16.mxu0 0
    %2914 = vmatmul.mubr.bf16.gmra.mxu0 %v2879
    %v2915 = vpop.f32.mrf.mxu0
    %v2916 = vadd.f32 0.0, %v2915
    %v2917 = vpop.f32.mrf.mxu0
    %v2918 = vpop.f32.mrf.mxu0
    %v2919 = vpop.f32.mrf.mxu0
    %2920 = vdwg.mxu0
    %v2929 = vunpack.c.l.b16 %v2727
    %v2930 = vunpack.c.l.b16 %v2728
    %v2931 = vunpack.c.l.b16 %v2729
    %v2932 = vunpack.c.l.b16 %v2730
    %v2933 = vunpack.c.l.b16 %v2731
    %v2934 = vunpack.c.l.b16 %v2732
    %v2935 = vunpack.c.l.b16 %v2733
    %v2936 = vunpack.c.l.b16 %v2734
    %v2937 = vpack.c.b16 %v2930, %v2929
    %v2938 = vpack.c.b16 %v2932, %v2931
    %v2939 = vpack.c.b16 %v2934, %v2933
    %v2940 = vpack.c.b16 %v2936, %v2935
    %v2946 = vsel %vm80, %v2725, 0
    %2948 = vmatprep.subr.bf16.mxu0 0
    %2949 = vmatpush1.bf16.msra.mxu0 0
    %2950 = vmatprep.subr.bf16.mxu0 0
    %2951 = vmatpush1.bf16.msra.mxu0 0
    %2952 = vmatprep.subr.bf16.mxu0 0
    %2953 = vmatpush1.bf16.msra.mxu0 0
    %2954 = vmatprep.subr.bf16.mxu0 0
    %2955 = vmatpush1.bf16.msra.mxu0 0
    %2956 = vmatprep.subr.bf16.mxu0 0
    %2957 = vmatpush1.bf16.msra.mxu0 %v2940
    %2958 = vmatprep.subr.bf16.mxu0 0
    %2959 = vmatpush1.bf16.msra.mxu0 %v2939
    %2960 = vmatprep.subr.bf16.mxu0 0
    %2961 = vmatpush1.bf16.msra.mxu0 %v2938
    %2962 = vmatprep.subr.bf16.mxu0 0
    %2963 = vmatpush1.bf16.msra.mxu0 %v2937
    %2964 = vmatprep.subr.bf16.mxu0 0
    %2965 = vmatpush2.bf16.msra.mxu0 0
    %2966 = vmatprep.subr.bf16.mxu0 0
    %2967 = vmatpush2.bf16.msra.mxu0 0
    %2968 = vmatprep.subr.bf16.mxu0 0
    %2969 = vmatpush2.bf16.msra.mxu0 0
    %2970 = vmatprep.subr.bf16.mxu0 0
    %2971 = vmatpush2.bf16.msra.mxu0 0
    %2972 = vmatprep.subr.bf16.mxu0 0
    %2973 = vmatpush2.bf16.msra.mxu0 0
    %2974 = vmatprep.subr.bf16.mxu0 0
    %2975 = vmatpush2.bf16.msra.mxu0 0
    %2976 = vmatprep.subr.bf16.mxu0 0
    %2977 = vmatpush2.bf16.msra.mxu0 0
    %2978 = vmatprep.subr.bf16.mxu0 0
    %2979 = vmatpush2.bf16.msra.mxu0 0
    %2980 = vmatprep.mubr.bf16.mxu0 0
    %2981 = vmatmul.mubr.bf16.gmra.mxu0 %v2946
    %v2982 = vpop.f32.mrf.mxu0
    %v2983 = vadd.f32 %v2916, %v2982
    %v2984 = vpop.f32.mrf.mxu0
    %v2985 = vpop.f32.mrf.mxu0
    %v2986 = vpop.f32.mrf.mxu0
    %2987 = vdwg.mxu0
    %v2988 = vpack.c.bf16 %v2063, %v2063
    %v2989 = vpack.c.bf16 %v2173, %v2173
    %v2990 = vpack.c.bf16 %v2283, %v2283
    %v2992 = vsel %vm80, %v2988, 0
    %v2995 = vsel %vm80, %v2989, 0
    %2997 = vmatprep.subr.bf16.mxu0 0
    %2998 = vmatpush1.bf16.xpose.msra.mxu0 0
    %2999 = vmatprep.subr.bf16.mxu0 0
    %3000 = vmatpush1.bf16.xpose.msra.mxu0 0
    %3001 = vmatprep.subr.bf16.mxu0 0
    %3002 = vmatpush1.bf16.xpose.msra.mxu0 0
    %3003 = vmatprep.subr.bf16.mxu0 0
    %3004 = vmatpush1.bf16.xpose.msra.mxu0 0
    %3005 = vmatprep.subr.bf16.mxu0 0
    %3006 = vmatpush1.bf16.xpose.msra.mxu0 0
    %3007 = vmatprep.subr.bf16.mxu0 0
    %3008 = vmatpush1.bf16.xpose.msra.mxu0 0
    %3009 = vmatprep.subr.bf16.mxu0 0
    %3010 = vmatpush1.bf16.xpose.msra.mxu0 0
    %3011 = vmatprep.subr.bf16.mxu0 0
    %3012 = vmatpush1.bf16.xpose.msra.mxu0 %v2995
    %3013 = vmatprep.subr.bf16.mxu0 0
    %3014 = vmatpush2.bf16.xpose.msra.mxu0 0
    %3015 = vmatprep.subr.bf16.mxu0 0
    %3016 = vmatpush2.bf16.xpose.msra.mxu0 0
    %3017 = vmatprep.subr.bf16.mxu0 0
    %3018 = vmatpush2.bf16.xpose.msra.mxu0 0
    %3019 = vmatprep.subr.bf16.mxu0 0
    %3020 = vmatpush2.bf16.xpose.msra.mxu0 0
    %3021 = vmatprep.subr.bf16.mxu0 0
    %3022 = vmatpush2.bf16.xpose.msra.mxu0 0
    %3023 = vmatprep.subr.bf16.mxu0 0
    %3024 = vmatpush2.bf16.xpose.msra.mxu0 0
    %3025 = vmatprep.subr.bf16.mxu0 0
    %3026 = vmatpush2.bf16.xpose.msra.mxu0 0
    %3027 = vmatprep.subr.bf16.mxu0 0
    %3028 = vmatpush2.bf16.xpose.msra.mxu0 0
    %3029 = vmatprep.mubr.bf16.mxu0 0
    %3030 = vmatmul.mubr.bf16.gmra.mxu0 %v2992
    %v3031 = vpop.f32.mrf.mxu0
    %v3032 = vadd.f32 0.0, %v3031
    %v3033 = vpop.f32.mrf.mxu0
    %v3034 = vpop.f32.mrf.mxu0
    %v3035 = vpop.f32.mrf.mxu0
    %3036 = vdwg.mxu0
    %v3037 = vmul.f32 %v3032, 0.125
    %v3038 = vadd.f32 %v3037, %v1257
    %v3039 = vsel %vm882, %v3038, -inf
    %3040 = vmax.xlane.f32.xlu0 %v3039
    %v3041 = vpop.xlane.xlu0 %3040
    %v3042 = vsub.f32 %v3038, %v3041
    %v3043 = vmul.f32 %v3042, 1.442695
    %v3044 = vpow.pop %v3043
    %v3045 = vsel %vm882, %v3044, 0.0
    %3046 = vadd.xlane.f32.xlu0 %v3045
    %v3047 = vpop.xlane.xlu0 %3046
    %v3048 = vrcp.pop %v3047
    %v3049 = vmul.f32 %v3044, %v3048
    %v3050 = vpack.c.bf16 %v3049, %v3049
    %v3052 = vsel %vm882, %v3050, 0
    %v3055 = vsel %vm898, %v2990, 0
    %3057 = vmatprep.subr.bf16.mxu0 0
    %3058 = vmatpush1.bf16.msra.mxu0 0
    %3059 = vmatprep.subr.bf16.mxu0 0
    %3060 = vmatpush1.bf16.msra.mxu0 0
    %3061 = vmatprep.subr.bf16.mxu0 0
    %3062 = vmatpush1.bf16.msra.mxu0 0
    %3063 = vmatprep.subr.bf16.mxu0 0
    %3064 = vmatpush1.bf16.msra.mxu0 0
    %3065 = vmatprep.subr.bf16.mxu0 0
    %3066 = vmatpush1.bf16.msra.mxu0 0
    %3067 = vmatprep.subr.bf16.mxu0 0
    %3068 = vmatpush1.bf16.msra.mxu0 0
    %3069 = vmatprep.subr.bf16.mxu0 0
    %3070 = vmatpush1.bf16.msra.mxu0 0
    %3071 = vmatprep.subr.bf16.mxu0 0
    %3072 = vmatpush1.bf16.msra.mxu0 %v3055
    %3073 = vmatprep.subr.bf16.mxu0 0
    %3074 = vmatpush2.bf16.msra.mxu0 0
    %3075 = vmatprep.subr.bf16.mxu0 0
    %3076 = vmatpush2.bf16.msra.mxu0 0
    %3077 = vmatprep.subr.bf16.mxu0 0
    %3078 = vmatpush2.bf16.msra.mxu0 0
    %3079 = vmatprep.subr.bf16.mxu0 0
    %3080 = vmatpush2.bf16.msra.mxu0 0
    %3081 = vmatprep.subr.bf16.mxu0 0
    %3082 = vmatpush2.bf16.msra.mxu0 0
    %3083 = vmatprep.subr.bf16.mxu0 0
    %3084 = vmatpush2.bf16.msra.mxu0 0
    %3085 = vmatprep.subr.bf16.mxu0 0
    %3086 = vmatpush2.bf16.msra.mxu0 0
    %3087 = vmatprep.subr.bf16.mxu0 0
    %3088 = vmatpush2.bf16.msra.mxu0 0
    %3089 = vmatprep.mubr.bf16.mxu0 0
    %3090 = vmatmul.mubr.bf16.gmra.mxu0 %v3052
    %v3091 = vpop.f32.mrf.mxu0
    %v3092 = vadd.f32 0.0, %v3091
    %v3093 = vpop.f32.mrf.mxu0
    %v3094 = vpop.f32.mrf.mxu0
    %v3095 = vpop.f32.mrf.mxu0
    %3096 = vdwg.mxu0
    %v3097 = vpack.c.bf16 %v3092, %v3092
    %v3098 = vpack.c.bf16 %v2393, %v2393
    %v3099 = vpack.c.bf16 %v2503, %v2503
    %v3100 = vpack.c.bf16 %v2613, %v2613
    %v3102 = vsel %vm80, %v3098, 0
    %v3105 = vsel %vm80, %v3099, 0
    %3107 = vmatprep.subr.bf16.mxu0 0
    %3108 = vmatpush1.bf16.xpose.msra.mxu0 0
    %3109 = vmatprep.subr.bf16.mxu0 0
    %3110 = vmatpush1.bf16.xpose.msra.mxu0 0
    %3111 = vmatprep.subr.bf16.mxu0 0
    %3112 = vmatpush1.bf16.xpose.msra.mxu0 0
    %3113 = vmatprep.subr.bf16.mxu0 0
    %3114 = vmatpush1.bf16.xpose.msra.mxu0 0
    %3115 = vmatprep.subr.bf16.mxu0 0
    %3116 = vmatpush1.bf16.xpose.msra.mxu0 0
    %3117 = vmatprep.subr.bf16.mxu0 0
    %3118 = vmatpush1.bf16.xpose.msra.mxu0 0
    %3119 = vmatprep.subr.bf16.mxu0 0
    %3120 = vmatpush1.bf16.xpose.msra.mxu0 0
    %3121 = vmatprep.subr.bf16.mxu0 0
    %3122 = vmatpush1.bf16.xpose.msra.mxu0 %v3105
    %3123 = vmatprep.subr.bf16.mxu0 0
    %3124 = vmatpush2.bf16.xpose.msra.mxu0 0
    %3125 = vmatprep.subr.bf16.mxu0 0
    %3126 = vmatpush2.bf16.xpose.msra.mxu0 0
    %3127 = vmatprep.subr.bf16.mxu0 0
    %3128 = vmatpush2.bf16.xpose.msra.mxu0 0
    %3129 = vmatprep.subr.bf16.mxu0 0
    %3130 = vmatpush2.bf16.xpose.msra.mxu0 0
    %3131 = vmatprep.subr.bf16.mxu0 0
    %3132 = vmatpush2.bf16.xpose.msra.mxu0 0
    %3133 = vmatprep.subr.bf16.mxu0 0
    %3134 = vmatpush2.bf16.xpose.msra.mxu0 0
    %3135 = vmatprep.subr.bf16.mxu0 0
    %3136 = vmatpush2.bf16.xpose.msra.mxu0 0
    %3137 = vmatprep.subr.bf16.mxu0 0
    %3138 = vmatpush2.bf16.xpose.msra.mxu0 0
    %3139 = vmatprep.mubr.bf16.mxu0 0
    %3140 = vmatmul.mubr.bf16.gmra.mxu0 %v3102
    %v3141 = vpop.f32.mrf.mxu0
    %v3142 = vadd.f32 0.0, %v3141
    %v3143 = vpop.f32.mrf.mxu0
    %v3144 = vpop.f32.mrf.mxu0
    %v3145 = vpop.f32.mrf.mxu0
    %3146 = vdwg.mxu0
    %v3147 = vmul.f32 %v3142, 0.125
    %v3148 = vadd.f32 %v3147, %v1257
    %v3149 = vsel %vm882, %v3148, -inf
    %3150 = vmax.xlane.f32.xlu0 %v3149
    %v3151 = vpop.xlane.xlu0 %3150
    %v3152 = vsub.f32 %v3148, %v3151
    %v3153 = vmul.f32 %v3152, 1.442695
    %v3154 = vpow.pop %v3153
    %v3155 = vsel %vm882, %v3154, 0.0
    %3156 = vadd.xlane.f32.xlu0 %v3155
    %v3157 = vpop.xlane.xlu0 %3156
    %v3158 = vrcp.pop %v3157
    %v3159 = vmul.f32 %v3154, %v3158
    %v3160 = vpack.c.bf16 %v3159, %v3159
    %v3162 = vsel %vm882, %v3160, 0
    %v3165 = vsel %vm898, %v3100, 0
    %3167 = vmatprep.subr.bf16.mxu0 0
    %3168 = vmatpush1.bf16.msra.mxu0 0
    %3169 = vmatprep.subr.bf16.mxu0 0
    %3170 = vmatpush1.bf16.msra.mxu0 0
    %3171 = vmatprep.subr.bf16.mxu0 0
    %3172 = vmatpush1.bf16.msra.mxu0 0
    %3173 = vmatprep.subr.bf16.mxu0 0
    %3174 = vmatpush1.bf16.msra.mxu0 0
    %3175 = vmatprep.subr.bf16.mxu0 0
    %3176 = vmatpush1.bf16.msra.mxu0 0
    %3177 = vmatprep.subr.bf16.mxu0 0
    %3178 = vmatpush1.bf16.msra.mxu0 0
    %3179 = vmatprep.subr.bf16.mxu0 0
    %3180 = vmatpush1.bf16.msra.mxu0 0
    %3181 = vmatprep.subr.bf16.mxu0 0
    %3182 = vmatpush1.bf16.msra.mxu0 %v3165
    %3183 = vmatprep.subr.bf16.mxu0 0
    %3184 = vmatpush2.bf16.msra.mxu0 0
    %3185 = vmatprep.subr.bf16.mxu0 0
    %3186 = vmatpush2.bf16.msra.mxu0 0
    %3187 = vmatprep.subr.bf16.mxu0 0
    %3188 = vmatpush2.bf16.msra.mxu0 0
    %3189 = vmatprep.subr.bf16.mxu0 0
    %3190 = vmatpush2.bf16.msra.mxu0 0
    %3191 = vmatprep.subr.bf16.mxu0 0
    %3192 = vmatpush2.bf16.msra.mxu0 0
    %3193 = vmatprep.subr.bf16.mxu0 0
    %3194 = vmatpush2.bf16.msra.mxu0 0
    %3195 = vmatprep.subr.bf16.mxu0 0
    %3196 = vmatpush2.bf16.msra.mxu0 0
    %3197 = vmatprep.subr.bf16.mxu0 0
    %3198 = vmatpush2.bf16.msra.mxu0 0
    %3199 = vmatprep.mubr.bf16.mxu0 0
    %3200 = vmatmul.mubr.bf16.gmra.mxu0 %v3162
    %v3201 = vpop.f32.mrf.mxu0
    %v3202 = vadd.f32 0.0, %v3201
    %v3203 = vpop.f32.mrf.mxu0
    %v3204 = vpop.f32.mrf.mxu0
    %v3205 = vpop.f32.mrf.mxu0
    %3206 = vdwg.mxu0
    %v3207 = vpack.c.bf16 %v3202, %v3202
    %v3209 = vsel %vm80, %v3207, 0
    %3211 = vmatprep.subr.bf16.mxu0 0
    %3212 = vmatpush1.bf16.msra.mxu0 0
    %3213 = vmatprep.subr.bf16.mxu0 0
    %3214 = vmatpush1.bf16.msra.mxu0 0
    %3215 = vmatprep.subr.bf16.mxu0 0
    %3216 = vmatpush1.bf16.msra.mxu0 0
    %3217 = vmatprep.subr.bf16.mxu0 0
    %3218 = vmatpush1.bf16.msra.mxu0 0
    %3219 = vmatprep.subr.bf16.mxu0 0
    %3220 = vmatpush1.bf16.msra.mxu0 %v2873
    %3221 = vmatprep.subr.bf16.mxu0 0
    %3222 = vmatpush1.bf16.msra.mxu0 %v2872
    %3223 = vmatprep.subr.bf16.mxu0 0
    %3224 = vmatpush1.bf16.msra.mxu0 %v2871
    %3225 = vmatprep.subr.bf16.mxu0 0
    %3226 = vmatpush1.bf16.msra.mxu0 %v2870
    %3227 = vmatprep.subr.bf16.mxu0 0
    %3228 = vmatpush2.bf16.msra.mxu0 0
    %3229 = vmatprep.subr.bf16.mxu0 0
    %3230 = vmatpush2.bf16.msra.mxu0 0
    %3231 = vmatprep.subr.bf16.mxu0 0
    %3232 = vmatpush2.bf16.msra.mxu0 0
    %3233 = vmatprep.subr.bf16.mxu0 0
    %3234 = vmatpush2.bf16.msra.mxu0 0
    %3235 = vmatprep.subr.bf16.mxu0 0
    %3236 = vmatpush2.bf16.msra.mxu0 0
    %3237 = vmatprep.subr.bf16.mxu0 0
    %3238 = vmatpush2.bf16.msra.mxu0 0
    %3239 = vmatprep.subr.bf16.mxu0 0
    %3240 = vmatpush2.bf16.msra.mxu0 0
    %3241 = vmatprep.subr.bf16.mxu0 0
    %3242 = vmatpush2.bf16.msra.mxu0 0
    %3243 = vmatprep.mubr.bf16.mxu0 0
    %3244 = vmatmul.mubr.bf16.gmra.mxu0 %v3209
    %v3245 = vpop.f32.mrf.mxu0
    %v3246 = vadd.f32 0.0, %v3245
    %v3247 = vpop.f32.mrf.mxu0
    %v3248 = vpop.f32.mrf.mxu0
    %v3249 = vpop.f32.mrf.mxu0
    %3250 = vdwg.mxu0
    %v3252 = vsel %vm80, %v3097, 0
    %3254 = vmatprep.subr.bf16.mxu0 0
    %3255 = vmatpush1.bf16.msra.mxu0 0
    %3256 = vmatprep.subr.bf16.mxu0 0
    %3257 = vmatpush1.bf16.msra.mxu0 0
    %3258 = vmatprep.subr.bf16.mxu0 0
    %3259 = vmatpush1.bf16.msra.mxu0 0
    %3260 = vmatprep.subr.bf16.mxu0 0
    %3261 = vmatpush1.bf16.msra.mxu0 0
    %3262 = vmatprep.subr.bf16.mxu0 0
    %3263 = vmatpush1.bf16.msra.mxu0 %v2940
    %3264 = vmatprep.subr.bf16.mxu0 0
    %3265 = vmatpush1.bf16.msra.mxu0 %v2939
    %3266 = vmatprep.subr.bf16.mxu0 0
    %3267 = vmatpush1.bf16.msra.mxu0 %v2938
    %3268 = vmatprep.subr.bf16.mxu0 0
    %3269 = vmatpush1.bf16.msra.mxu0 %v2937
    %3270 = vmatprep.subr.bf16.mxu0 0
    %3271 = vmatpush2.bf16.msra.mxu0 0
    %3272 = vmatprep.subr.bf16.mxu0 0
    %3273 = vmatpush2.bf16.msra.mxu0 0
    %3274 = vmatprep.subr.bf16.mxu0 0
    %3275 = vmatpush2.bf16.msra.mxu0 0
    %3276 = vmatprep.subr.bf16.mxu0 0
    %3277 = vmatpush2.bf16.msra.mxu0 0
    %3278 = vmatprep.subr.bf16.mxu0 0
    %3279 = vmatpush2.bf16.msra.mxu0 0
    %3280 = vmatprep.subr.bf16.mxu0 0
    %3281 = vmatpush2.bf16.msra.mxu0 0
    %3282 = vmatprep.subr.bf16.mxu0 0
    %3283 = vmatpush2.bf16.msra.mxu0 0
    %3284 = vmatprep.subr.bf16.mxu0 0
    %3285 = vmatpush2.bf16.msra.mxu0 0
    %3286 = vmatprep.mubr.bf16.mxu0 0
    %3287 = vmatmul.mubr.bf16.gmra.mxu0 %v3252
    %v3288 = vpop.f32.mrf.mxu0
    %v3289 = vadd.f32 %v3246, %v3288
    %v3290 = vpop.f32.mrf.mxu0
    %v3291 = vpop.f32.mrf.mxu0
    %v3292 = vpop.f32.mrf.mxu0
    %3293 = vdwg.mxu0
    %v3294 = vlaneseq
    %v3295 = vshrl.u32 %v3294, 7
    %v3296 = vsub.s32 0, %v3295
    %v3297 = vrot.slane %v1952, %v3296
    %v3298 = vadd.f32 %v2983, %v3297
    %v3299 = vadd.f32 %v3289, %v3297
    %v3300 = vadd.f32 %v1949, %v3298
    %v3301 = vadd.f32 %v1950, %v3299
    %3302 = vadd.xlane.f32.xlu0 %v3300
    %v3303 = vpop.xlane.xlu0 %3302
    %3304 = vadd.xlane.f32.xlu0 %v3301
    %v3305 = vpop.xlane.xlu0 %3304
    %v3306 = vmul.f32 %v3303, %v129
    %v3307 = vmul.f32 %v3305, %v129
    %v3308 = vsub.f32 %v3300, %v3306
    %v3309 = vsub.f32 %v3301, %v3307
    %v3310 = vmul.f32 %v3308, %v3308
    %v3311 = vmul.f32 %v3309, %v3309
    %3312 = vadd.xlane.f32.xlu0 %v3310
    %v3313 = vpop.xlane.xlu0 %3312
    %3314 = vadd.xlane.f32.xlu0 %v3311
    %v3315 = vpop.xlane.xlu0 %3314
    %v3316 = vmul.f32 %v3313, %v129
    %v3317 = vmul.f32 %v3315, %v129
    %v3318 = vadd.f32 %v3316, 1e-05
    %v3319 = vadd.f32 %v3317, 1e-05
    %v3320 = vrsqrt.pop %v3318
    %v3321 = vrsqrt.pop %v3319
    %v3322 = vmul.f32 %v3308, %v3320
    %v3323 = vmul.f32 %v3309, %v3321
    %v3324 = vlaneseq
    %v3325 = vshrl.u32 %v3324, 7
    %v3326 = vsub.s32 1, %v3325
    %v3327 = vrot.slane %v1952, %v3326
    %v3328 = vmul.f32 %v3322, %v3327
    %v3329 = vmul.f32 %v3323, %v3327
    %v3330 = vlaneseq
    %v3331 = vshrl.u32 %v3330, 7
    %v3332 = vsub.s32 2, %v3331
    %v3333 = vrot.slane %v1952, %v3332
    %v3334 = vadd.f32 %v3328, %v3333
    %v3335 = vadd.f32 %v3329, %v3333
    %v3336 = vpack.c.bf16 %v3335, %v3334
    %s3337 = scalar_lea.vmem %s5, 128
    %v3338 = vld [vmem:[%s3337] sm:$0xff]
    %v3339 = vld [vmem:[%s3337 + $0x8] sm:$0xff]
    %v3340 = vld [vmem:[%s3337 + $0x10] sm:$0xff]
    %v3341 = vld [vmem:[%s3337 + $0x18] sm:$0xff]
    %v3342 = vld [vmem:[%s3337 + $0x20] sm:$0xff]
    %v3343 = vld [vmem:[%s3337 + $0x28] sm:$0xff]
    %v3344 = vld [vmem:[%s3337 + $0x30] sm:$0xff]
    %v3345 = vld [vmem:[%s3337 + $0x38] sm:$0xff]
    %v3346 = vld [vmem:[%s3337 + $0x40] sm:$0xff]
    %v3347 = vld [vmem:[%s3337 + $0x48] sm:$0xff]
    %v3348 = vld [vmem:[%s3337 + $0x50] sm:$0xff]
    %v3349 = vld [vmem:[%s3337 + $0x58] sm:$0xff]
    %v3350 = vld [vmem:[%s3337 + $0x60] sm:$0xff]
    %v3351 = vld [vmem:[%s3337 + $0x68] sm:$0xff]
    %v3352 = vld [vmem:[%s3337 + $0x70] sm:$0xff]
    %v3353 = vld [vmem:[%s3337 + $0x78] sm:$0xff]
    %v3354 = vlaneseq
    %v3355 = vshrl.u32 %v3354, 7
    %v3356 = vsub.s32 3, %v3355
    %v3357 = vrot.slane %v1952, %v3356
    %v3358 = vlaneseq
    %v3359 = vshrl.u32 %v3358, 7
    %v3360 = vsub.s32 3, %v3359
    %v3361 = vrot.slane %v1953, %v3360
    %v3378 = vunpack.c.l.b16 %v3338
    %v3379 = vunpack.c.h.b16 %v3338
    %v3380 = vunpack.c.l.b16 %v3339
    %v3381 = vunpack.c.h.b16 %v3339
    %v3382 = vunpack.c.l.b16 %v3340
    %v3383 = vunpack.c.h.b16 %v3340
    %v3384 = vunpack.c.l.b16 %v3341
    %v3385 = vunpack.c.h.b16 %v3341
    %v3386 = vunpack.c.l.b16 %v3342
    %v3387 = vunpack.c.h.b16 %v3342
    %v3388 = vunpack.c.l.b16 %v3343
    %v3389 = vunpack.c.h.b16 %v3343
    %v3390 = vunpack.c.l.b16 %v3344
    %v3391 = vunpack.c.h.b16 %v3344
    %v3392 = vunpack.c.l.b16 %v3345
    %v3393 = vunpack.c.h.b16 %v3345
    %v3394 = vunpack.c.l.b16 %v3346
    %v3395 = vunpack.c.h.b16 %v3346
    %v3396 = vunpack.c.l.b16 %v3347
    %v3397 = vunpack.c.h.b16 %v3347
    %v3398 = vunpack.c.l.b16 %v3348
    %v3399 = vunpack.c.h.b16 %v3348
    %v3400 = vunpack.c.l.b16 %v3349
    %v3401 = vunpack.c.h.b16 %v3349
    %v3402 = vunpack.c.l.b16 %v3350
    %v3403 = vunpack.c.h.b16 %v3350
    %v3404 = vunpack.c.l.b16 %v3351
    %v3405 = vunpack.c.h.b16 %v3351
    %v3406 = vunpack.c.l.b16 %v3352
    %v3407 = vunpack.c.h.b16 %v3352
    %v3408 = vunpack.c.l.b16 %v3353
    %v3409 = vunpack.c.h.b16 %v3353
    %v3410 = vpack.c.b16 %v3380, %v3378
    %v3411 = vpack.c.b16 %v3381, %v3379
    %v3412 = vpack.c.b16 %v3384, %v3382
    %v3413 = vpack.c.b16 %v3385, %v3383
    %v3414 = vpack.c.b16 %v3388, %v3386
    %v3415 = vpack.c.b16 %v3389, %v3387
    %v3416 = vpack.c.b16 %v3392, %v3390
    %v3417 = vpack.c.b16 %v3393, %v3391
    %v3418 = vpack.c.b16 %v3396, %v3394
    %v3419 = vpack.c.b16 %v3397, %v3395
    %v3420 = vpack.c.b16 %v3400, %v3398
    %v3421 = vpack.c.b16 %v3401, %v3399
    %v3422 = vpack.c.b16 %v3404, %v3402
    %v3423 = vpack.c.b16 %v3405, %v3403
    %v3424 = vpack.c.b16 %v3408, %v3406
    %v3425 = vpack.c.b16 %v3409, %v3407
    %3442 = vmatprep.subr.bf16.mxu0 %v3425
    %3443 = vmatpush1.bf16.msra.mxu0 %v3424
    %3444 = vmatprep.subr.bf16.mxu0 %v3423
    %3445 = vmatpush1.bf16.msra.mxu0 %v3422
    %3446 = vmatprep.subr.bf16.mxu0 %v3421
    %3447 = vmatpush1.bf16.msra.mxu0 %v3420
    %3448 = vmatprep.subr.bf16.mxu0 %v3419
    %3449 = vmatpush1.bf16.msra.mxu0 %v3418
    %3450 = vmatprep.subr.bf16.mxu0 %v3417
    %3451 = vmatpush1.bf16.msra.mxu0 %v3416
    %3452 = vmatprep.subr.bf16.mxu0 %v3415
    %3453 = vmatpush1.bf16.msra.mxu0 %v3414
    %3454 = vmatprep.subr.bf16.mxu0 %v3413
    %3455 = vmatpush1.bf16.msra.mxu0 %v3412
    %3456 = vmatprep.subr.bf16.mxu0 %v3411
    %3457 = vmatpush1.bf16.msra.mxu0 %v3410
    %3458 = vmatprep.subr.bf16.mxu0 0
    %3459 = vmatpush2.bf16.msra.mxu0 0
    %3460 = vmatprep.subr.bf16.mxu0 0
    %3461 = vmatpush2.bf16.msra.mxu0 0
    %3462 = vmatprep.subr.bf16.mxu0 0
    %3463 = vmatpush2.bf16.msra.mxu0 0
    %3464 = vmatprep.subr.bf16.mxu0 0
    %3465 = vmatpush2.bf16.msra.mxu0 0
    %3466 = vmatprep.subr.bf16.mxu0 0
    %3467 = vmatpush2.bf16.msra.mxu0 0
    %3468 = vmatprep.subr.bf16.mxu0 0
    %3469 = vmatpush2.bf16.msra.mxu0 0
    %3470 = vmatprep.subr.bf16.mxu0 0
    %3471 = vmatpush2.bf16.msra.mxu0 0
    %3472 = vmatprep.subr.bf16.mxu0 0
    %3473 = vmatpush2.bf16.msra.mxu0 0
    %3474 = vmatprep.mubr.bf16.mxu0 0
    %3475 = vmatmul.mubr.bf16.gmra.mxu0 %v3336
    %v3476 = vpop.f32.mrf.mxu0
    %v3477 = vadd.f32 %v3357, %v3476
    %v3478 = vpop.f32.mrf.mxu0
    %v3479 = vadd.f32 %v3361, %v3478
    %v3480 = vpop.f32.mrf.mxu0
    %v3481 = vadd.f32 %v3357, %v3480
    %v3482 = vpop.f32.mrf.mxu0
    %v3483 = vadd.f32 %v3361, %v3482
    %3484 = vdwg.mxu0
    %v3485 = vmul.f32 %v3477, %v3477
    %v3486 = vmul.f32 %v3479, %v3479
    %v3487 = vmul.f32 %v3481, %v3481
    %v3488 = vmul.f32 %v3483, %v3483
    %v3489 = vmul.f32 %v3477, %v3485
    %v3490 = vmul.f32 %v3479, %v3486
    %v3491 = vmul.f32 %v3481, %v3487
    %v3492 = vmul.f32 %v3483, %v3488
    %v3493 = vmul.f32 %v3489, 0.044715
    %v3494 = vmul.f32 %v3490, 0.044715
    %v3495 = vmul.f32 %v3491, 0.044715
    %v3496 = vmul.f32 %v3492, 0.044715
    %v3497 = vadd.f32 %v3477, %v3493
    %v3498 = vadd.f32 %v3479, %v3494
    %v3499 = vadd.f32 %v3481, %v3495
    %v3500 = vadd.f32 %v3483, %v3496
    %v3501 = vmul.f32 %v3497, 0.7978846
    %v3502 = vmul.f32 %v3498, 0.7978846
    %v3503 = vmul.f32 %v3499, 0.7978846
    %v3504 = vmul.f32 %v3500, 0.7978846
    %v3505 = vtanh.pop %v3501
    %v3506 = vtanh.pop %v3502
    %v3507 = vtanh.pop %v3503
    %v3508 = vtanh.pop %v3504
    %v3509 = vadd.f32 %v3505, 1.0
    %v3510 = vadd.f32 %v3506, 1.0
    %v3511 = vadd.f32 %v3507, 1.0
    %v3512 = vadd.f32 %v3508, 1.0
    %v3513 = vmul.f32 %v3509, 0.5
    %v3514 = vmul.f32 %v3510, 0.5
    %v3515 = vmul.f32 %v3511, 0.5
    %v3516 = vmul.f32 %v3512, 0.5
    %v3517 = vmul.f32 %v3477, %v3513
    %v3518 = vmul.f32 %v3479, %v3514
    %v3519 = vmul.f32 %v3481, %v3515
    %v3520 = vmul.f32 %v3483, %v3516
    %v3521 = vpack.c.bf16 %v3519, %v3517
    %v3522 = vpack.c.bf16 %v3520, %v3518
    %s3523 = scalar_lea.vmem %s6, 128
    %v3524 = vld [vmem:[%s3523] sm:$0xf]
    %v3525 = vld [vmem:[%s3523 + $0x4] sm:$0xf]
    %v3526 = vld [vmem:[%s3523 + $0x8] sm:$0xf]
    %v3527 = vld [vmem:[%s3523 + $0xc] sm:$0xf]
    %v3528 = vld [vmem:[%s3523 + $0x10] sm:$0xf]
    %v3529 = vld [vmem:[%s3523 + $0x14] sm:$0xf]
    %v3530 = vld [vmem:[%s3523 + $0x18] sm:$0xf]
    %v3531 = vld [vmem:[%s3523 + $0x1c] sm:$0xf]
    %v3532 = vld [vmem:[%s3523 + $0x20] sm:$0xf]
    %v3533 = vld [vmem:[%s3523 + $0x24] sm:$0xf]
    %v3534 = vld [vmem:[%s3523 + $0x28] sm:$0xf]
    %v3535 = vld [vmem:[%s3523 + $0x2c] sm:$0xf]
    %v3536 = vld [vmem:[%s3523 + $0x30] sm:$0xf]
    %v3537 = vld [vmem:[%s3523 + $0x34] sm:$0xf]
    %v3538 = vld [vmem:[%s3523 + $0x38] sm:$0xf]
    %v3539 = vld [vmem:[%s3523 + $0x3c] sm:$0xf]
    %v3540 = vld [vmem:[%s3523 + $0x40] sm:$0xf]
    %v3541 = vld [vmem:[%s3523 + $0x44] sm:$0xf]
    %v3542 = vld [vmem:[%s3523 + $0x48] sm:$0xf]
    %v3543 = vld [vmem:[%s3523 + $0x4c] sm:$0xf]
    %v3544 = vld [vmem:[%s3523 + $0x50] sm:$0xf]
    %v3545 = vld [vmem:[%s3523 + $0x54] sm:$0xf]
    %v3546 = vld [vmem:[%s3523 + $0x58] sm:$0xf]
    %v3547 = vld [vmem:[%s3523 + $0x5c] sm:$0xf]
    %v3548 = vld [vmem:[%s3523 + $0x60] sm:$0xf]
    %v3549 = vld [vmem:[%s3523 + $0x64] sm:$0xf]
    %v3550 = vld [vmem:[%s3523 + $0x68] sm:$0xf]
    %v3551 = vld [vmem:[%s3523 + $0x6c] sm:$0xf]
    %v3552 = vld [vmem:[%s3523 + $0x70] sm:$0xf]
    %v3553 = vld [vmem:[%s3523 + $0x74] sm:$0xf]
    %v3554 = vld [vmem:[%s3523 + $0x78] sm:$0xf]
    %v3555 = vld [vmem:[%s3523 + $0x7c] sm:$0xf]
    %v3556 = vlaneseq
    %v3557 = vshrl.u32 %v3556, 7
    %v3558 = vsub.s32 4, %v3557
    %v3559 = vrot.slane %v1952, %v3558
    %v3592 = vunpack.c.l.b16 %v3524
    %v3593 = vunpack.c.l.b16 %v3525
    %v3594 = vunpack.c.l.b16 %v3526
    %v3595 = vunpack.c.l.b16 %v3527
    %v3596 = vunpack.c.l.b16 %v3528
    %v3597 = vunpack.c.l.b16 %v3529
    %v3598 = vunpack.c.l.b16 %v3530
    %v3599 = vunpack.c.l.b16 %v3531
    %v3600 = vunpack.c.l.b16 %v3532
    %v3601 = vunpack.c.l.b16 %v3533
    %v3602 = vunpack.c.l.b16 %v3534
    %v3603 = vunpack.c.l.b16 %v3535
    %v3604 = vunpack.c.l.b16 %v3536
    %v3605 = vunpack.c.l.b16 %v3537
    %v3606 = vunpack.c.l.b16 %v3538
    %v3607 = vunpack.c.l.b16 %v3539
    %v3608 = vunpack.c.l.b16 %v3540
    %v3609 = vunpack.c.l.b16 %v3541
    %v3610 = vunpack.c.l.b16 %v3542
    %v3611 = vunpack.c.l.b16 %v3543
    %v3612 = vunpack.c.l.b16 %v3544
    %v3613 = vunpack.c.l.b16 %v3545
    %v3614 = vunpack.c.l.b16 %v3546
    %v3615 = vunpack.c.l.b16 %v3547
    %v3616 = vunpack.c.l.b16 %v3548
    %v3617 = vunpack.c.l.b16 %v3549
    %v3618 = vunpack.c.l.b16 %v3550
    %v3619 = vunpack.c.l.b16 %v3551
    %v3620 = vunpack.c.l.b16 %v3552
    %v3621 = vunpack.c.l.b16 %v3553
    %v3622 = vunpack.c.l.b16 %v3554
    %v3623 = vunpack.c.l.b16 %v3555
    %v3624 = vpack.c.b16 %v3593, %v3592
    %v3625 = vpack.c.b16 %v3595, %v3594
    %v3626 = vpack.c.b16 %v3597, %v3596
    %v3627 = vpack.c.b16 %v3599, %v3598
    %v3628 = vpack.c.b16 %v3601, %v3600
    %v3629 = vpack.c.b16 %v3603, %v3602
    %v3630 = vpack.c.b16 %v3605, %v3604
    %v3631 = vpack.c.b16 %v3607, %v3606
    %v3632 = vpack.c.b16 %v3609, %v3608
    %v3633 = vpack.c.b16 %v3611, %v3610
    %v3634 = vpack.c.b16 %v3613, %v3612
    %v3635 = vpack.c.b16 %v3615, %v3614
    %v3636 = vpack.c.b16 %v3617, %v3616
    %v3637 = vpack.c.b16 %v3619, %v3618
    %v3638 = vpack.c.b16 %v3621, %v3620
    %v3639 = vpack.c.b16 %v3623, %v3622
    %3656 = vmatprep.subr.bf16.mxu0 0
    %3657 = vmatpush1.bf16.msra.mxu0 %v3631
    %3658 = vmatprep.subr.bf16.mxu0 0
    %3659 = vmatpush1.bf16.msra.mxu0 %v3630
    %3660 = vmatprep.subr.bf16.mxu0 0
    %3661 = vmatpush1.bf16.msra.mxu0 %v3629
    %3662 = vmatprep.subr.bf16.mxu0 0
    %3663 = vmatpush1.bf16.msra.mxu0 %v3628
    %3664 = vmatprep.subr.bf16.mxu0 0
    %3665 = vmatpush1.bf16.msra.mxu0 %v3627
    %3666 = vmatprep.subr.bf16.mxu0 0
    %3667 = vmatpush1.bf16.msra.mxu0 %v3626
    %3668 = vmatprep.subr.bf16.mxu0 0
    %3669 = vmatpush1.bf16.msra.mxu0 %v3625
    %3670 = vmatprep.subr.bf16.mxu0 0
    %3671 = vmatpush1.bf16.msra.mxu0 %v3624
    %3672 = vmatprep.subr.bf16.mxu0 0
    %3673 = vmatpush2.bf16.msra.mxu0 %v3639
    %3674 = vmatprep.subr.bf16.mxu0 0
    %3675 = vmatpush2.bf16.msra.mxu0 %v3638
    %3676 = vmatprep.subr.bf16.mxu0 0
    %3677 = vmatpush2.bf16.msra.mxu0 %v3637
    %3678 = vmatprep.subr.bf16.mxu0 0
    %3679 = vmatpush2.bf16.msra.mxu0 %v3636
    %3680 = vmatprep.subr.bf16.mxu0 0
    %3681 = vmatpush2.bf16.msra.mxu0 %v3635
    %3682 = vmatprep.subr.bf16.mxu0 0
    %3683 = vmatpush2.bf16.msra.mxu0 %v3634
    %3684 = vmatprep.subr.bf16.mxu0 0
    %3685 = vmatpush2.bf16.msra.mxu0 %v3633
    %3686 = vmatprep.subr.bf16.mxu0 0
    %3687 = vmatpush2.bf16.msra.mxu0 %v3632
    %3688 = vmatprep.mubr.bf16.mxu0 %v3522
    %3689 = vmatmul.mubr.bf16.gmra.mxu0 %v3521
    %v3690 = vpop.f32.mrf.mxu0
    %v3691 = vadd.f32 %v3559, %v3690
    %v3692 = vpop.f32.mrf.mxu0
    %v3693 = vpop.f32.mrf.mxu0
    %v3694 = vadd.f32 %v3559, %v3693
    %v3695 = vpop.f32.mrf.mxu0
    %3696 = vdwg.mxu0
    %v3697 = vadd.f32 %v3334, %v3691
    %v3698 = vadd.f32 %v3335, %v3694
    %3699 = vadd.xlane.f32.xlu0 %v3697
    %v3700 = vpop.xlane.xlu0 %3699
    %3701 = vadd.xlane.f32.xlu0 %v3698
    %v3702 = vpop.xlane.xlu0 %3701
    %v3703 = vmul.f32 %v3700, %v129
    %v3704 = vmul.f32 %v3702, %v129
    %v3705 = vsub.f32 %v3697, %v3703
    %v3706 = vsub.f32 %v3698, %v3704
    %v3707 = vmul.f32 %v3705, %v3705
    %v3708 = vmul.f32 %v3706, %v3706
    %3709 = vadd.xlane.f32.xlu0 %v3707
    %v3710 = vpop.xlane.xlu0 %3709
    %3711 = vadd.xlane.f32.xlu0 %v3708
    %v3712 = vpop.xlane.xlu0 %3711
    %v3713 = vmul.f32 %v3710, %v129
    %v3714 = vmul.f32 %v3712, %v129
    %v3715 = vadd.f32 %v3713, 1e-05
    %v3716 = vadd.f32 %v3714, 1e-05
    %v3717 = vrsqrt.pop %v3715
    %v3718 = vrsqrt.pop %v3716
    %v3719 = vmul.f32 %v3705, %v3717
    %v3720 = vmul.f32 %v3706, %v3718
    %v3721 = vlaneseq
    %v3722 = vshrl.u32 %v3721, 7
    %v3723 = vsub.s32 5, %v3722
    %v3724 = vrot.slane %v1952, %v3723
    %v3725 = vmul.f32 %v3719, %v3724
    %v3726 = vmul.f32 %v3720, %v3724
    %v3727 = vlaneseq
    %v3728 = vshrl.u32 %v3727, 7
    %v3729 = vsub.s32 6, %v3728
    %v3730 = vrot.slane %v1952, %v3729
    %v3731 = vadd.f32 %v3725, %v3730
    %v3732 = vadd.f32 %v3726, %v3730
    %v3733 = vlaneseq
    %v3734 = vshrl.u32 %v3733, 7
    %v3735 = vmul.u32 %v3734, 8
    %vm3736 = vcmp.eq.s32.totalorder %v52, %v3735
    %v3737 = vsel %vm3736, 1, 0
    %v3738 = vcvt.s32.f32 %v3737
    %vm3739 = vcmask 130048
    %v3741 = vsel %vm3739, %v3738, 0
    %3743 = vmatprep.subr.mxu0 0.0
    %3744 = vmatpush1.msra.mxu0 0.0
    %3745 = vmatprep.subr.mxu0 0.0
    %3746 = vmatpush1.msra.mxu0 0.0
    %3747 = vmatprep.subr.mxu0 0.0
    %3748 = vmatpush1.msra.mxu0 0.0
    %3749 = vmatprep.subr.mxu0 0.0
    %3750 = vmatpush1.msra.mxu0 0.0
    %3751 = vmatprep.subr.mxu0 0.0
    %3752 = vmatpush1.msra.mxu0 0.0
    %3753 = vmatprep.subr.mxu0 0.0
    %3754 = vmatpush1.msra.mxu0 0.0
    %3755 = vmatprep.subr.mxu0 0.0
    %3756 = vmatpush1.msra.mxu0 0.0
    %3757 = vmatprep.subr.mxu0 0.0
    %3758 = vmatpush1.msra.mxu0 0.0
    %3759 = vmatprep.subr.mxu0 0.0
    %3760 = vmatpush1.msra.mxu0 0.0
    %3761 = vmatprep.subr.mxu0 0.0
    %3762 = vmatpush1.msra.mxu0 0.0
    %3763 = vmatprep.subr.mxu0 0.0
    %3764 = vmatpush1.msra.mxu0 0.0
    %3765 = vmatprep.subr.mxu0 0.0
    %3766 = vmatpush1.msra.mxu0 0.0
    %3767 = vmatprep.subr.mxu0 0.0
    %3768 = vmatpush1.msra.mxu0 0.0
    %3769 = vmatprep.subr.mxu0 0.0
    %3770 = vmatpush1.msra.mxu0 0.0
    %3771 = vmatprep.subr.mxu0 0.0
    %3772 = vmatpush1.msra.mxu0 %v3732
    %3773 = vmatprep.subr.mxu0 0.0
    %3774 = vmatpush1.msra.mxu0 %v3731
    %3775 = vmatprep.subr.mxu0 0.0
    %3776 = vmatpush2.msra.mxu0 0.0
    %3777 = vmatprep.subr.mxu0 0.0
    %3778 = vmatpush2.msra.mxu0 0.0
    %3779 = vmatprep.subr.mxu0 0.0
    %3780 = vmatpush2.msra.mxu0 0.0
    %3781 = vmatprep.subr.mxu0 0.0
    %3782 = vmatpush2.msra.mxu0 0.0
    %3783 = vmatprep.subr.mxu0 0.0
    %3784 = vmatpush2.msra.mxu0 0.0
    %3785 = vmatprep.subr.mxu0 0.0
    %3786 = vmatpush2.msra.mxu0 0.0
    %3787 = vmatprep.subr.mxu0 0.0
    %3788 = vmatpush2.msra.mxu0 0.0
    %3789 = vmatprep.subr.mxu0 0.0
    %3790 = vmatpush2.msra.mxu0 0.0
    %3791 = vmatprep.subr.mxu0 0.0
    %3792 = vmatpush2.msra.mxu0 0.0
    %3793 = vmatprep.subr.mxu0 0.0
    %3794 = vmatpush2.msra.mxu0 0.0
    %3795 = vmatprep.subr.mxu0 0.0
    %3796 = vmatpush2.msra.mxu0 0.0
    %3797 = vmatprep.subr.mxu0 0.0
    %3798 = vmatpush2.msra.mxu0 0.0
    %3799 = vmatprep.subr.mxu0 0.0
    %3800 = vmatpush2.msra.mxu0 0.0
    %3801 = vmatprep.subr.mxu0 0.0
    %3802 = vmatpush2.msra.mxu0 0.0
    %3803 = vmatprep.subr.mxu0 0.0
    %3804 = vmatpush2.msra.mxu0 0.0
    %3805 = vmatprep.subr.mxu0 0.0
    %3806 = vmatpush2.msra.mxu0 0.0
    %3807 = vmatprep.mubr.f32.mxu0 0.0
    %3808 = vmatmul.mubr.f32.gmra.mxu0 %v3741
    %v3809 = vpop.f32.mrf.mxu0
    %v3810 = vadd.f32 0.0, %v3809
    %v3811 = vpop.f32.mrf.mxu0
    %3812 = vdwg.mxu0
    %v3813 = vld [vmem:[%s8] sm:$0xff]
    %v3814 = vld [vmem:[%s8 + $0x8] sm:$0xff]
    %v3815 = vld [vmem:[%s8 + $0x10] sm:$0xff]
    %v3816 = vld [vmem:[%s8 + $0x18] sm:$0xff]
    %v3817 = vld [vmem:[%s8 + $0x20] sm:$0xff]
    %v3818 = vld [vmem:[%s8 + $0x28] sm:$0xff]
    %v3819 = vld [vmem:[%s8 + $0x30] sm:$0xff]
    %v3820 = vld [vmem:[%s8 + $0x38] sm:$0xff]
    %v3821 = vld [vmem:[%s8 + $0x40] sm:$0xff]
    %v3822 = vld [vmem:[%s8 + $0x48] sm:$0xff]
    %v3823 = vld [vmem:[%s8 + $0x50] sm:$0xff]
    %v3824 = vld [vmem:[%s8 + $0x58] sm:$0xff]
    %v3825 = vld [vmem:[%s8 + $0x60] sm:$0xff]
    %v3826 = vld [vmem:[%s8 + $0x68] sm:$0xff]
    %v3827 = vld [vmem:[%s8 + $0x70] sm:$0xff]
    %v3828 = vld [vmem:[%s8 + $0x78] sm:$0xff]
    %v3829 = vld [vmem:[%s8 + $0x80] sm:$0xff]
    %vm3830 = vcmp.eq.s32.totalorder %v3734, 0
    %s3831 = sld [smem:[#allocation2]]
    %v3832 = vstv %s3831
    %v3833 = vsel %vm3830, %v3832, 0
    %vm3834 = vcmp.eq.s32.totalorder %v52, 0
    %vm3835 = vmand %vm3830, %vm3834
    %s3836 = sld [smem:[#allocation2 + $0x1]]
    %s3837 = scvt.s32.f32 %s3836
    %v3838 = vstv %s3837
    %v3839 = vsel %vm3835, %v3838, 0.0
    %vm3840 = vcmp.eq.s32.totalorder %v52, 1
    %vm3841 = vmand %vm3830, %vm3840
    %s3842 = sld [smem:[#allocation2 + $0x2]]
    %s3843 = scvt.s32.f32 %s3842
    %v3844 = vstv %s3843
    %v3845 = vsel %vm3841, %v3844, %v3839
    %vm3846 = vcmp.eq.s32.totalorder %v3734, 1
    %s3847 = sld [smem:[#allocation2 + $0x80]]
    %v3848 = vstv %s3847
    %v3849 = vsel %vm3846, %v3848, %v3833
    %vm3850 = vmand %vm3846, %vm3834
    %s3851 = sld [smem:[#allocation2 + $0x81]]
    %s3852 = scvt.s32.f32 %s3851
    %v3853 = vstv %s3852
    %v3854 = vsel %vm3850, %v3853, %v3845
    %vm3855 = vmand %vm3846, %vm3840
    %s3856 = sld [smem:[#allocation2 + $0x82]]
    %s3857 = scvt.s32.f32 %s3856
    %v3858 = vstv %s3857
    %v3859 = vsel %vm3855, %v3858, %v3854
    %vm3860 = vcmask 15360
    %v3862 = vsel %vm3860, %v3859, 0
    %vm3864 = vcmask 1041408
    %v3866 = vsel %vm3864, %v3829, 0
    %3868 = vmatprep.subr.mxu0 0.0
    %3869 = vmatpush1.msra.mxu0 0.0
    %3870 = vmatprep.subr.mxu0 0.0
    %3871 = vmatpush1.msra.mxu0 0.0
    %3872 = vmatprep.subr.mxu0 0.0
    %3873 = vmatpush1.msra.mxu0 0.0
    %3874 = vmatprep.subr.mxu0 0.0
    %3875 = vmatpush1.msra.mxu0 0.0
    %3876 = vmatprep.subr.mxu0 0.0
    %3877 = vmatpush1.msra.mxu0 0.0
    %3878 = vmatprep.subr.mxu0 0.0
    %3879 = vmatpush1.msra.mxu0 0.0
    %3880 = vmatprep.subr.mxu0 0.0
    %3881 = vmatpush1.msra.mxu0 0.0
    %3882 = vmatprep.subr.mxu0 0.0
    %3883 = vmatpush1.msra.mxu0 0.0
    %3884 = vmatprep.subr.mxu0 0.0
    %3885 = vmatpush1.msra.mxu0 0.0
    %3886 = vmatprep.subr.mxu0 0.0
    %3887 = vmatpush1.msra.mxu0 0.0
    %3888 = vmatprep.subr.mxu0 0.0
    %3889 = vmatpush1.msra.mxu0 0.0
    %3890 = vmatprep.subr.mxu0 0.0
    %3891 = vmatpush1.msra.mxu0 0.0
    %3892 = vmatprep.subr.mxu0 0.0
    %3893 = vmatpush1.msra.mxu0 0.0
    %3894 = vmatprep.subr.mxu0 0.0
    %3895 = vmatpush1.msra.mxu0 0.0
    %3896 = vmatprep.subr.mxu0 0.0
    %3897 = vmatpush1.msra.mxu0 0.0
    %3898 = vmatprep.subr.mxu0 0.0
    %3899 = vmatpush1.msra.mxu0 %v3866
    %3900 = vmatprep.subr.mxu0 0.0
    %3901 = vmatpush2.msra.mxu0 0.0
    %3902 = vmatprep.subr.mxu0 0.0
    %3903 = vmatpush2.msra.mxu0 0.0
    %3904 = vmatprep.subr.mxu0 0.0
    %3905 = vmatpush2.msra.mxu0 0.0
    %3906 = vmatprep.subr.mxu0 0.0
    %3907 = vmatpush2.msra.mxu0 0.0
    %3908 = vmatprep.subr.mxu0 0.0
    %3909 = vmatpush2.msra.mxu0 0.0
    %3910 = vmatprep.subr.mxu0 0.0
    %3911 = vmatpush2.msra.mxu0 0.0
    %3912 = vmatprep.subr.mxu0 0.0
    %3913 = vmatpush2.msra.mxu0 0.0
    %3914 = vmatprep.subr.mxu0 0.0
    %3915 = vmatpush2.msra.mxu0 0.0
    %3916 = vmatprep.subr.mxu0 0.0
    %3917 = vmatpush2.msra.mxu0 0.0
    %3918 = vmatprep.subr.mxu0 0.0
    %3919 = vmatpush2.msra.mxu0 0.0
    %3920 = vmatprep.subr.mxu0 0.0
    %3921 = vmatpush2.msra.mxu0 0.0
    %3922 = vmatprep.subr.mxu0 0.0
    %3923 = vmatpush2.msra.mxu0 0.0
    %3924 = vmatprep.subr.mxu0 0.0
    %3925 = vmatpush2.msra.mxu0 0.0
    %3926 = vmatprep.subr.mxu0 0.0
    %3927 = vmatpush2.msra.mxu0 0.0
    %3928 = vmatprep.subr.mxu0 0.0
    %3929 = vmatpush2.msra.mxu0 0.0
    %3930 = vmatprep.subr.mxu0 0.0
    %3931 = vmatpush2.msra.mxu0 0.0
    %3932 = vmatprep.mubr.f32.mxu0 0.0
    %3933 = vmatmul.mubr.f32.gmra.mxu0 %v3862
    %v3934 = vpop.f32.mrf.mxu0
    %v3935 = vadd.f32 0.0, %v3934
    %v3936 = vpop.f32.mrf.mxu0
    %3937 = vdwg.mxu0
    %3938 = vmatprep.subr.mxu0 0.0
    %3939 = vmatpush1.msra.mxu0 %v3828
    %3940 = vmatprep.subr.mxu0 0.0
    %3941 = vmatpush1.msra.mxu0 %v3827
    %3942 = vmatprep.subr.mxu0 0.0
    %3943 = vmatpush1.msra.mxu0 %v3826
    %3944 = vmatprep.subr.mxu0 0.0
    %3945 = vmatpush1.msra.mxu0 %v3825
    %3946 = vmatprep.subr.mxu0 0.0
    %3947 = vmatpush1.msra.mxu0 %v3824
    %3948 = vmatprep.subr.mxu0 0.0
    %3949 = vmatpush1.msra.mxu0 %v3823
    %3950 = vmatprep.subr.mxu0 0.0
    %3951 = vmatpush1.msra.mxu0 %v3822
    %3952 = vmatprep.subr.mxu0 0.0
    %3953 = vmatpush1.msra.mxu0 %v3821
    %3954 = vmatprep.subr.mxu0 0.0
    %3955 = vmatpush1.msra.mxu0 %v3820
    %3956 = vmatprep.subr.mxu0 0.0
    %3957 = vmatpush1.msra.mxu0 %v3819
    %3958 = vmatprep.subr.mxu0 0.0
    %3959 = vmatpush1.msra.mxu0 %v3818
    %3960 = vmatprep.subr.mxu0 0.0
    %3961 = vmatpush1.msra.mxu0 %v3817
    %3962 = vmatprep.subr.mxu0 0.0
    %3963 = vmatpush1.msra.mxu0 %v3816
    %3964 = vmatprep.subr.mxu0 0.0
    %3965 = vmatpush1.msra.mxu0 %v3815
    %3966 = vmatprep.subr.mxu0 0.0
    %3967 = vmatpush1.msra.mxu0 %v3814
    %3968 = vmatprep.subr.mxu0 0.0
    %3969 = vmatpush1.msra.mxu0 %v3813
    %3970 = vmatprep.subr.mxu0 0.0
    %3971 = vmatpush2.msra.mxu0 0.0
    %3972 = vmatprep.subr.mxu0 0.0
    %3973 = vmatpush2.msra.mxu0 0.0
    %3974 = vmatprep.subr.mxu0 0.0
    %3975 = vmatpush2.msra.mxu0 0.0
    %3976 = vmatprep.subr.mxu0 0.0
    %3977 = vmatpush2.msra.mxu0 0.0
    %3978 = vmatprep.subr.mxu0 0.0
    %3979 = vmatpush2.msra.mxu0 0.0
    %3980 = vmatprep.subr.mxu0 0.0
    %3981 = vmatpush2.msra.mxu0 0.0
    %3982 = vmatprep.subr.mxu0 0.0
    %3983 = vmatpush2.msra.mxu0 0.0
    %3984 = vmatprep.subr.mxu0 0.0
    %3985 = vmatpush2.msra.mxu0 0.0
    %3986 = vmatprep.subr.mxu0 0.0
    %3987 = vmatpush2.msra.mxu0 0.0
    %3988 = vmatprep.subr.mxu0 0.0
    %3989 = vmatpush2.msra.mxu0 0.0
    %3990 = vmatprep.subr.mxu0 0.0
    %3991 = vmatpush2.msra.mxu0 0.0
    %3992 = vmatprep.subr.mxu0 0.0
    %3993 = vmatpush2.msra.mxu0 0.0
    %3994 = vmatprep.subr.mxu0 0.0
    %3995 = vmatpush2.msra.mxu0 0.0
    %3996 = vmatprep.subr.mxu0 0.0
    %3997 = vmatpush2.msra.mxu0 0.0
    %3998 = vmatprep.subr.mxu0 0.0
    %3999 = vmatpush2.msra.mxu0 0.0
    %4000 = vmatprep.subr.mxu0 0.0
    %4001 = vmatpush2.msra.mxu0 0.0
    %4002 = vmatprep.mubr.f32.mxu0 0.0
    %4003 = vmatmul.mubr.f32.gmra.mxu0 %v3810
    %v4004 = vpop.f32.mrf.mxu0
    %v4005 = vadd.f32 %v3935, %v4004
    %v4006 = vpop.f32.mrf.mxu0
    %4007 = vdwg.mxu0
    %v4008 = vlaneseq
    %v4009 = vshrl.u32 %v4008, 7
    %v4010 = vsub.s32 2, %v4009
    %v4011 = vrot.slane %v3829, %v4010
    %v4012 = vadd.f32 %v4005, %v4011
    %vm4013 = vcmp.eq.s32.totalorder %v52, %v3849
    %v4014 = vsel %vm4013, 1, 0
    %v4015 = vcvt.s32.f32 %v4014
    %vm4016 = vcmask 9216
    %v4017 = vsel %vm4016, %v4012, -inf
    %4018 = vmax.xlane.f32.xlu0 %v4017
    %v4019 = vpop.xlane.xlu0 %4018
    %v4020 = vsub.f32 %v4012, %v4019
    %v4021 = vmul.f32 %v4020, 1.442695
    %v4022 = vpow.pop %v4021
    %v4023 = vsel %vm4016, %v4022, 0.0
    %4024 = vadd.xlane.f32.xlu0 %v4023
    %v4025 = vpop.xlane.xlu0 %4024
    %v4026 = vlog2.pop %v4025
    %v4027 = vmul.f32 %v4026, 0.6931472
    %v4028 = vadd.f32 %v4019, %v4027
    %v4029 = vmul.f32 %v4015, %v4012
    %v4030 = vsel %vm4016, %v4029, 0.0
    %4031 = vadd.xlane.f32.xlu0 %v4030
    %v4032 = vpop.xlane.xlu0 %4031
    %v4033 = vsub.f32 %v4028, %v4032
    %v4034 = vlaneseq
    %v4035 = vshrl.u32 %v4034, 7
    %v4036 = vsub.s32 3, %v4035
    %v4037 = vrot.slane %v3829, %v4036
    %v4038 = vmul.f32 %v4015, %v4037
    %v4039 = vsel %vm4016, %v4038, 0.0
    %4040 = vadd.xlane.f32.xlu0 %v4039
    %v4041 = vpop.xlane.xlu0 %4040
    %v4042 = vmul.f32 %v4041, %v4033
    %v4043 = vsel %vm3864, %v4042, 0.0
    %v4044 = vrot.slane %v4043, 4
    %v4045 = vadd.f32 %v4043, %v4044
    %v4046 = vrot.slane %v4045, 2
    %v4047 = vadd.f32 %v4045, %v4046
    %v4048 = vrot.slane %v4047, 1
    %v4049 = vadd.f32 %v4047, %v4048
    %v4050 = vsel %vm3864, %v4041, 0.0
    %v4051 = vrot.slane %v4050, 4
    %v4052 = vadd.f32 %v4050, %v4051
    %v4053 = vrot.slane %v4052, 2
    %v4054 = vadd.f32 %v4052, %v4053
    %v4055 = vrot.slane %v4054, 1
    %v4056 = vadd.f32 %v4054, %v4055
    %v4057 = vrcp.pop %v4056
    %v4058 = vmul.f32 %v4049, %v4057
    %4059 = vst [vmem:[%s10] sm:$0xff] 0.0
    %4060 = vst.msk [vmem:[%s10] sm:$0x3] %vm4016, %v4012
    %vm4061 = vcmask 0
    %4062 = vst.msk [vmem:[%s10 + $0x2] sm:$0x1] %vm4061, %v4058
    // Predicated region
    $region46: #{_forward_jit.1} parent=1 // pred_check
      _
    $region47: #{_forward_jit.1} parent=1 // pred_check_branch
      %4064 = sbr.rel (0) target = $region49
    $region48: #{_forward_jit.1} parent=1 // pred_region
      _
    $region49: #{_forward_jit.1} parent=1 // pred_fallthru
      _
    // Predicated region
    $region50: #{_forward_jit.1} parent=1 // pred_check
      _
    $region51: #{_forward_jit.1} parent=1 // pred_check_branch
      %4066 = sbr.rel (0) target = $region53
    $region52: #{_forward_jit.1} parent=1 // pred_region
      _
    $region53: #{_forward_jit.1} parent=1 // pred_fallthru
      _
    %4067 = vsyncpa [#allocation3], 1

</llo_original>
